<compile_context>
chip_gen: v5e
topology: v5e:2x2
jax: 0.10.0
libtpu: 0.0.40
codegen_flags: <defaults>
</compile_context>

<pallas_src>
import functools
import math

import jax
import jax.numpy as jnp
from jax.experimental import pallas as pl
from jax.experimental.pallas import tpu as pltpu

MIN_NORM = 1e-15
BALL_EPS = 4e-3  # PoincareBall float32 projection epsilon (HGCN / GraphZoo)


# ----------------------------- shared math ------------------------------------------

def _artanh(x):
    x = jnp.clip(x, -1.0 + 1e-7, 1.0 - 1e-7)
    return 0.5 * (jnp.log(1.0 + x) - jnp.log(1.0 - x))


# ------------------- plain-JAX helpers (reference path only) ------------------------

def _proj(x, c):
    sqrt_c = c ** 0.5
    norm = jnp.maximum(jnp.sqrt(jnp.sum(x * x, axis=-1, keepdims=True)), MIN_NORM)
    maxnorm = (1.0 - BALL_EPS) / sqrt_c
    return jnp.where(norm > maxnorm, x / norm * maxnorm, x)


def _mobius_matvec_from_wt(xf, wt, c):
    """xf: (1, Din) f32, wt: (Din, Dout) pre-transposed weight."""
    sqrt_c = c ** 0.5
    x_norm = jnp.maximum(jnp.sqrt(jnp.sum(xf * xf, axis=-1, keepdims=True)), MIN_NORM)
    mx = jnp.dot(xf.astype(wt.dtype), wt, preferred_element_type=jnp.float32,
                 precision=jax.lax.Precision.HIGHEST)
    mx_norm = jnp.maximum(jnp.sqrt(jnp.sum(mx * mx, axis=-1, keepdims=True)), MIN_NORM)
    res = jnp.tanh(mx_norm / x_norm * _artanh(sqrt_c * x_norm)) * mx / (mx_norm * sqrt_c)
    zero_row = jnp.sum(jnp.abs(mx), axis=-1, keepdims=True) == 0.0
    return jnp.where(zero_row, 0.0, res)


def _hyp_linear(xf, wt, c):
    """HypLinear (use_bias=False, eval mode): mobius_matvec + proj."""
    return _proj(_mobius_matvec_from_wt(xf, wt, c), c)


def _mobius_half(mid, c):
    sqrt_c = c ** 0.5
    mid_norm = jnp.maximum(jnp.sqrt(jnp.sum(mid * mid, axis=-1, keepdims=True)), MIN_NORM)
    return jnp.tanh(0.5 * _artanh(sqrt_c * mid_norm)) * mid / (sqrt_c * mid_norm)


# ----------------------------- fused Pallas kernel -----------------------------------

def _fused_graph_kernel(c, M, N,
                        xf_ref, maskx_ref, wi_ref, wo_ref,
                        bsum_ref, foldn_ref, expn_ref, expm_ref,
                        time_ref, space_ref, a_scr):
    """One graph per grid step; everything stays lane-dense in VMEM."""
    MN = M * N
    sqrt_c = c ** 0.5
    maxnorm = (1.0 - BALL_EPS) / sqrt_c
    K = 1.0 / c
    sqrtK = K ** 0.5

    xf = xf_ref[...]                                               # (1, MN) f32

    # ---- 1) PoincareBall.proj per node, lane-dense ----------------------------
    # per-node ||x_j||^2, replicated over each node's chunk, via one block-diag matmul
    sq_flat = jnp.dot(xf * xf, bsum_ref[...],
                      preferred_element_type=jnp.float32)          # (1, MN)
    norm_flat = jnp.maximum(jnp.sqrt(sq_flat), MIN_NORM)
    proj_scale = jnp.where(norm_flat > maxnorm,
                           maxnorm * pl.reciprocal(norm_flat, approx=True), 1.0)
    vf = xf * proj_scale                                           # projected, (1, MN)

    # ---- 2) HypLinear #1 (input_linear), column-chunked, deferred scaling -----
    x_sq = jnp.sum(vf * vf, axis=-1, keepdims=True)                # (1, 1)
    x_norm = jnp.maximum(jnp.sqrt(x_sq), MIN_NORM)
    vb = vf.astype(wi_ref.dtype)                                   # bf16 operand
    mx_sq = jnp.zeros((1, 1), jnp.float32)
    mx_abs = jnp.zeros((1, 1), jnp.float32)
    for i in range(M):                                             # static unroll (M=8)
        chunk = jnp.dot(vb, wi_ref[:, i * MN:(i + 1) * MN],
                        preferred_element_type=jnp.float32)        # (1, MN)
        a_scr[i:i + 1, :] = chunk                                  # 256-lane aligned row
        mx_sq = mx_sq + jnp.sum(chunk * chunk, axis=-1, keepdims=True)
        mx_abs = mx_abs + jnp.sum(jnp.abs(chunk), axis=-1, keepdims=True)
    mx_norm_raw = jnp.sqrt(mx_sq)
    mx_norm = jnp.maximum(mx_norm_raw, MIN_NORM)
    s1 = jnp.tanh(mx_norm / x_norm * _artanh(sqrt_c * x_norm)) / (mx_norm * sqrt_c)
    s1 = jnp.where(mx_abs == 0.0, 0.0, s1)                         # mobius_matvec zero row
    res1_norm = jnp.maximum(s1 * mx_norm_raw, MIN_NORM)
    s1p = jnp.where(res1_norm > maxnorm,
                    maxnorm * pl.reciprocal(res1_norm, approx=True), 1.0)
    a_scale = s1 * s1p                                             # a = a_scale * mx (scalar)

    # ---- 3) masked weighted Mobius gyromidpoint, lane-dense --------------------
    sqv_flat = sq_flat * proj_scale * proj_scale                   # ||v_j||^2 per chunk
    lam_flat = 2.0 / jnp.maximum(1.0 - c * sqv_flat, MIN_NORM)     # conformal factor
    lamv_flat = lam_flat * vf
    w = a_scr[...] * maskx_ref[...]                                # (M, MN): raw a * mask
    raw_num = jnp.dot(w * lamv_flat, foldn_ref[...],
                      preferred_element_type=jnp.float32)          # (M, N) segment sum
    raw_den = jnp.dot(w * (lam_flat - 1.0), foldn_ref[...],
                      preferred_element_type=jnp.float32)          # (M, N)
    num = a_scale * raw_num
    den = jnp.maximum(a_scale * raw_den, MIN_NORM)                 # torch clamp_min
    mid = num / den                                                # exact divide (sensitive path)
    mid_norm = jnp.maximum(jnp.sqrt(jnp.sum(mid * mid, axis=-1, keepdims=True)),
                           MIN_NORM)                               # (M, 1)
    h = jnp.tanh(0.5 * _artanh(sqrt_c * mid_norm)) * mid / (sqrt_c * mid_norm)

    # ---- flatten h (M, N) -> (1, MN) via the MXU (tile + block-diag mask + reduce)
    tile_h = jnp.dot(h, expn_ref[...], preferred_element_type=jnp.float32)   # (M, MN)
    hf = jnp.sum(expm_ref[...] * tile_h, axis=0, keepdims=True)              # (1, MN)

    # ---- 4) HypLinear #2 (att_out_linear) + to_hyperboloid ---------------------
    h_sq = jnp.sum(hf * hf, axis=-1, keepdims=True)
    h_norm = jnp.maximum(jnp.sqrt(h_sq), MIN_NORM)
    mo = jnp.dot(hf, wo_ref[...], preferred_element_type=jnp.float32)        # (1, MN) f32
    mo_sq = jnp.sum(mo * mo, axis=-1, keepdims=True)
    mo_abs = jnp.sum(jnp.abs(mo), axis=-1, keepdims=True)
    mo_norm_raw = jnp.sqrt(mo_sq)
    mo_norm = jnp.maximum(mo_norm_raw, MIN_NORM)
    s2 = jnp.tanh(mo_norm / h_norm * _artanh(sqrt_c * h_norm)) / (mo_norm * sqrt_c)
    s2 = jnp.where(mo_abs == 0.0, 0.0, s2)
    res2_norm_raw = s2 * mo_norm_raw
    res2_norm = jnp.maximum(res2_norm_raw, MIN_NORM)
    clamped = res2_norm > maxnorm
    s2p = jnp.where(clamped, maxnorm * pl.reciprocal(res2_norm, approx=True), 1.0)
    k2 = s2 * s2p                                                  # res = k2 * mo
    # exact maxnorm^2 in the clamped branch keeps the hyperboloid denominator stable
    sqnorm = jnp.where(clamped, maxnorm * maxnorm, res2_norm_raw * res2_norm_raw)
    rden = pl.reciprocal(K - sqnorm, approx=True)
    time_ref[...] = sqrtK * (K + sqnorm) * rden                    # (1, 1) time-like coord
    space_ref[...] = (2.0 * K * k2 * rden) * mo                    # (1, MN) space coords


# ----------------------------- module wrapper ----------------------------------------

class HypGraphSelfAttentionLayerPallas:
    def __init__(self, graph_size, vector_dim, curvature, key):
        self.M = int(graph_size)
        self.N = int(vector_dim)
        self.c = float(curvature)
        M, N = self.M, self.N
        d_in = M * N
        d_att = M * M * N
        k1, k2 = jax.random.split(key)
        gain = math.sqrt(2.0)

        def xavier_t(k, out_f, in_f, dtype):
            # PyTorch xavier_uniform_(gain=sqrt(2)) on an (out_f, in_f) weight,
            # stored pre-transposed (in_f, out_f).
            bound = gain * math.sqrt(6.0 / (in_f + out_f))
            w = jax.random.uniform(k, (out_f, in_f), jnp.float32, -bound, bound)
            return jnp.transpose(w).astype(dtype)

        # w_in (the 1 MiB one) in bf16; w_out kept f32 per the accuracy note.
        self.w_in_t = xavier_t(k1, d_att, d_in, jnp.bfloat16)   # (M*N, M*M*N)
        self.w_out_t = xavier_t(k2, d_in, d_in, jnp.float32)    # (M*N, M*N)

        # Constant 0/1 fold / expand matrices for lane-dense per-node math.
        idx = jnp.arange(d_in)
        node_of = idx // N
        feat_of = idx % N
        self.bsum = (node_of[:, None] == node_of[None, :]).astype(jnp.float32)          # (MN, MN)
        self.foldn = (feat_of[:, None] == jnp.arange(N)[None, :]).astype(jnp.float32)   # (MN, N)
        self.expn = (jnp.arange(N)[:, None] == feat_of[None, :]).astype(jnp.float32)    # (N, MN)
        self.expm = (jnp.arange(M)[:, None] == node_of[None, :]).astype(jnp.float32)    # (M, MN)

        MN = d_in
        MMN = d_att
        c = self.c
        kernel = functools.partial(_fused_graph_kernel, c, M, N)
        w_in_bytes = MN * MMN * 2
        w_out_bytes = MN * MN * 4
        const_bytes = (MN * MN + MN * N + N * MN + M * MN) * 4

        def fwd(xf, maskx, w_in_t, w_out_t, bsum, foldn, expn, expm):
            B = xf.shape[0]
            cost = pl.CostEstimate(
                flops=int(B * (2 * MN * MMN + 6 * MN * MN + 4 * M * MN * N + 2 * M * N * MN)),
                transcendentals=int(B * (2 * MN + 4 * M + 16)),
                bytes_accessed=int(w_in_bytes + w_out_bytes + const_bytes
                                   + B * (4 * MN + 4 * M * MN + 4 * (MN + 1)) * 2),
            )
            time, space = pl.pallas_call(
                kernel,
                out_shape=(jax.ShapeDtypeStruct((B, 1, 1), jnp.float32),
                           jax.ShapeDtypeStruct((B, 1, MN), jnp.float32)),
                grid=(B,),
                in_specs=[
                    # per-graph blocks
                    pl.BlockSpec((None, 1, MN), lambda b: (b, 0, 0)),    # flat input row
                    pl.BlockSpec((None, M, MN), lambda b: (b, 0, 0)),    # expanded mask
                    # weights + constants: constant block index => fetched once,
                    # VMEM-resident across the whole batch grid.
                    pl.BlockSpec((MN, MMN), lambda b: (0, 0)),           # w_in_t (bf16)
                    pl.BlockSpec((MN, MN), lambda b: (0, 0)),            # w_out_t (f32)
                    pl.BlockSpec((MN, MN), lambda b: (0, 0)),            # block-diag sum
                    pl.BlockSpec((MN, N), lambda b: (0, 0)),             # segment-sum fold
                    pl.BlockSpec((N, MN), lambda b: (0, 0)),             # tile/expand
                    pl.BlockSpec((M, MN), lambda b: (0, 0)),             # block-diag mask
                ],
                out_specs=(pl.BlockSpec((None, 1, 1), lambda b: (b, 0, 0)),
                           pl.BlockSpec((None, 1, MN), lambda b: (b, 0, 0))),
                scratch_shapes=[pltpu.VMEM((M, MN), jnp.float32)],       # attention coeffs
                compiler_params=pltpu.CompilerParams(
                    dimension_semantics=("parallel",),
                    vmem_limit_bytes=32 * 1024 * 1024),
                cost_estimate=cost,
            )(xf, maskx, w_in_t, w_out_t, bsum, foldn, expn, expm)
            # lane-aligned outputs; the 1 + M*N concat is a cheap host-side XLA op
            return jnp.concatenate([time[:, 0, :], space[:, 0, :]], axis=-1)

        self._forward = jax.jit(fwd)

    def __call__(self, input_vectors, mask):
        x = jnp.asarray(input_vectors, jnp.float32)
        m = jnp.asarray(mask, jnp.float32)
        if x.ndim == 2:
            x = x[None]
            m = m[None]
        B = x.shape[0]
        xf = x.reshape(B, 1, self.M * self.N)                  # flat, lane-dense input
        maskx = jnp.repeat(m, self.N, axis=-1)                 # (B, M, M*N) expanded mask
        return self._forward(xf, maskx, self.w_in_t, self.w_out_t,
                             self.bsum, self.foldn, self.expn, self.expm)


# ----------------------------- plain-JAX reference (for self-check) ------------------

def reference_forward(x, mask, w_in_t, w_out_t, c):
    M, N = x.shape
    v = _proj(x.astype(jnp.float32), c)
    vf = v.reshape(1, M * N)
    a = _hyp_linear(vf, w_in_t, c).reshape(M, M, N)

    sq = jnp.sum(v * v, axis=-1, keepdims=True)
    lam = 2.0 / jnp.maximum(1.0 - c * sq, MIN_NORM)
    w = a * mask.astype(jnp.float32)[:, :, None]
    num = jnp.sum(w * (lam * v)[None, :, :], axis=1)
    den = jnp.maximum(jnp.sum(w * (lam - 1.0)[None, :, :], axis=1), MIN_NORM)
    h = _mobius_half(num / den, c)

    res = _hyp_linear(h.reshape(1, M * N), w_out_t, c)
    K = 1.0 / c
    sqrtK = K ** 0.5
    sqnorm = jnp.sum(res * res, axis=-1, keepdims=True)
    return sqrtK * jnp.concatenate([K + sqnorm, 2.0 * sqrtK * res], axis=-1) / (K - sqnorm)


# ----------------------------- main ----------------------------------------------------

if __name__ == "__main__":
    graph_size, vector_dim, curvature = 8, 32, 1.0   # M=8 nodes, N=32 features
    batch = 4
    key = jax.random.PRNGKey(0)
    kx, kw = jax.random.split(key)

    x = 0.05 * jax.random.normal(kx, (batch, graph_size, vector_dim), jnp.float32)

    # deterministic adjacencies (ring, 2-hop ring, ring, fully connected)
    idx = jnp.arange(graph_size)
    d = jnp.abs(idx[:, None] - idx[None, :])
    ring = ((d <= 1) | (d == graph_size - 1)).astype(jnp.float32)
    ring2 = ((d <= 2) | (d >= graph_size - 2)).astype(jnp.float32)
    full = jnp.ones((graph_size, graph_size), jnp.float32)
    mask = jnp.stack([ring, ring2, ring, full], axis=0)[:batch]

    layer = HypGraphSelfAttentionLayerPallas(graph_size, vector_dim, curvature, kw)

    out = jax.block_until_ready(layer(x, mask))
    assert out.shape == (batch, 1 + graph_size * vector_dim), out.shape
    assert bool(jnp.all(jnp.isfinite(out)))

    ref = jnp.concatenate(
        [reference_forward(x[b], mask[b], layer.w_in_t, layer.w_out_t, curvature)
         for b in range(batch)], axis=0)
    if not bool(jnp.allclose(out, ref, rtol=2e-2, atol=2e-2)):
        max_err = float(jnp.max(jnp.abs(out - ref)))
        raise AssertionError(
            f"Pallas output diverges from JAX reference (max abs err {max_err})")

    # single-graph API path (B=1)
    out1 = jax.block_until_ready(layer(x[0], mask[0]))
    assert out1.shape == (1, 1 + graph_size * vector_dim), out1.shape
    if not bool(jnp.allclose(out1, ref[0:1], rtol=2e-2, atol=2e-2)):
        raise AssertionError("Single-graph path diverges from JAX reference")

    print("KERNEL_OK")
</pallas_src>

<mosaic_0001>
module attributes {stable_mosaic.version = 11 : i64} {
  func.func @_fused_graph_kernel(%arg0: i32, %arg1: memref<1x1x256xf32, #tpu.memory_space<vmem>>, %arg2: memref<1x8x256xf32, #tpu.memory_space<vmem>>, %arg3: memref<256x2048xbf16, #tpu.memory_space<vmem>>, %arg4: memref<256x256xf32, #tpu.memory_space<vmem>>, %arg5: memref<256x256xf32, #tpu.memory_space<vmem>>, %arg6: memref<256x32xf32, #tpu.memory_space<vmem>>, %arg7: memref<32x256xf32, #tpu.memory_space<vmem>>, %arg8: memref<8x256xf32, #tpu.memory_space<vmem>>, %arg9: memref<1x1x1xf32, #tpu.memory_space<vmem>>, %arg10: memref<1x1x256xf32, #tpu.memory_space<vmem>>, %arg11: memref<8x256xf32, #tpu.memory_space<vmem>>) attributes {dimension_semantics = [#tpu.dimension_semantics<parallel>], iteration_bounds = array<i64: 4>, scalar_prefetch = 0 : i64, scratch_operands = 1 : i64, tpu.core_type = #tpu.core_type<tc>, window_params = [{transform_indices = @transform_0, window_bounds = array<i64: 1, 1, 256>}, {transform_indices = @transform_1, window_bounds = array<i64: 1, 8, 256>}, {pipeline_mode = #tpu.pipeline_mode<synchronous>, transform_indices = @transform_2, window_bounds = array<i64: 256, 2048>}, {pipeline_mode = #tpu.pipeline_mode<synchronous>, transform_indices = @transform_3, window_bounds = array<i64: 256, 256>}, {pipeline_mode = #tpu.pipeline_mode<synchronous>, transform_indices = @transform_4, window_bounds = array<i64: 256, 256>}, {pipeline_mode = #tpu.pipeline_mode<synchronous>, transform_indices = @transform_5, window_bounds = array<i64: 256, 32>}, {pipeline_mode = #tpu.pipeline_mode<synchronous>, transform_indices = @transform_6, window_bounds = array<i64: 32, 256>}, {pipeline_mode = #tpu.pipeline_mode<synchronous>, transform_indices = @transform_7, window_bounds = array<i64: 8, 256>}, {transform_indices = @transform_8, window_bounds = array<i64: 1, 1, 1>}, {transform_indices = @transform_9, window_bounds = array<i64: 1, 1, 256>}]} {
    %c0 = arith.constant 0 : index
    %c0_0 = arith.constant 0 : index
    %c0_1 = arith.constant 0 : index
    %0 = vector.load %arg1[%c0, %c0_0, %c0_1] : memref<1x1x256xf32, #tpu.memory_space<vmem>>, vector<1x1x256xf32>
    %1 = vector.shape_cast %0 : vector<1x1x256xf32> to vector<1x256xf32>
    %2 = arith.mulf %1, %1 : vector<1x256xf32>
    %c0_2 = arith.constant 0 : index
    %c0_3 = arith.constant 0 : index
    %3 = vector.load %arg5[%c0_2, %c0_3] : memref<256x256xf32, #tpu.memory_space<vmem>>, vector<256x256xf32>
    %cst = arith.constant dense<0.000000e+00> : vector<1x256xf32>
    %4 = tpu.matmul %2, %3, %cst {dimension_numbers = #tpu.dot_dimension_numbers<[1], [0], [0], [1], [0, 0, 1, 1], [], []>} : vector<1x256xf32>, vector<256x256xf32>, vector<1x256xf32> -> vector<1x256xf32>
    %5 = math.sqrt %4 : vector<1x256xf32>
    %cst_4 = arith.constant 1.000000e-15 : f32
    %6 = vector.broadcast %cst_4 : f32 to vector<1x256xf32>
    %7 = arith.maximumf %5, %6 : vector<1x256xf32>
    %cst_5 = arith.constant 0.995999991 : f32
    %8 = vector.broadcast %cst_5 : f32 to vector<1x256xf32>
    %9 = arith.cmpf ogt, %7, %8 : vector<1x256xf32>
    %10 = tpu.reciprocal %7 {approx = true} : vector<1x256xf32> -> vector<1x256xf32>
    %cst_6 = arith.constant 0.995999991 : f32
    %11 = vector.broadcast %cst_6 : f32 to vector<1x256xf32>
    %12 = arith.mulf %11, %10 : vector<1x256xf32>
    %cst_7 = arith.constant 1.000000e+00 : f32
    %13 = vector.broadcast %cst_7 : f32 to vector<1x256xf32>
    %14 = arith.select %9, %12, %13 : vector<1x256xi1>, vector<1x256xf32>
    %15 = arith.mulf %1, %14 : vector<1x256xf32>
    %16 = arith.mulf %15, %15 : vector<1x256xf32>
    %cst_8 = arith.constant dense<0.000000e+00> : vector<1xf32>
    %17 = vector.multi_reduction <add>, %16, %cst_8 [1] : vector<1x256xf32> to vector<1xf32>
    %18 = vector.shape_cast %17 : vector<1xf32> to vector<1x1xf32>
    %19 = math.sqrt %18 : vector<1x1xf32>
    %cst_9 = arith.constant 1.000000e-15 : f32
    %20 = vector.broadcast %cst_9 : f32 to vector<1x1xf32>
    %21 = arith.maximumf %19, %20 : vector<1x1xf32>
    %22 = arith.truncf %15 : vector<1x256xf32> to vector<1x256xbf16>
    %cst_10 = arith.constant 0.000000e+00 : f32
    %23 = vector.broadcast %cst_10 : f32 to vector<1x1xf32>
    %cst_11 = arith.constant 0.000000e+00 : f32
    %24 = vector.broadcast %cst_11 : f32 to vector<1x1xf32>
    %c0_12 = arith.constant 0 : index
    %c0_13 = arith.constant 0 : index
    %25 = vector.load %arg3[%c0_12, %c0_13] : memref<256x2048xbf16, #tpu.memory_space<vmem>>, vector<256x256xbf16>
    %cst_14 = arith.constant dense<0.000000e+00> : vector<1x256xf32>
    %26 = tpu.matmul %22, %25, %cst_14 {dimension_numbers = #tpu.dot_dimension_numbers<[1], [0], [0], [1], [0, 0, 1, 1], [], []>} : vector<1x256xbf16>, vector<256x256xbf16>, vector<1x256xf32> -> vector<1x256xf32>
    %c0_15 = arith.constant 0 : index
    %c0_16 = arith.constant 0 : index
    %27 = vector.load %arg11[%c0_15, %c0_16] : memref<8x256xf32, #tpu.memory_space<vmem>>, vector<1x256xf32>
    tpu.vector_store %arg11[%c0_15, %c0_16], %26 {strides = array<i32>} : memref<8x256xf32, #tpu.memory_space<vmem>>, vector<1x256xf32>,
    %28 = arith.mulf %26, %26 : vector<1x256xf32>
    %cst_17 = arith.constant dense<0.000000e+00> : vector<1xf32>
    %29 = vector.multi_reduction <add>, %28, %cst_17 [1] : vector<1x256xf32> to vector<1xf32>
    %30 = vector.shape_cast %29 : vector<1xf32> to vector<1x1xf32>
    %31 = arith.addf %23, %30 : vector<1x1xf32>
    %32 = math.absf %26 : vector<1x256xf32>
    %cst_18 = arith.constant dense<0.000000e+00> : vector<1xf32>
    %33 = vector.multi_reduction <add>, %32, %cst_18 [1] : vector<1x256xf32> to vector<1xf32>
    %34 = vector.shape_cast %33 : vector<1xf32> to vector<1x1xf32>
    %35 = arith.addf %24, %34 : vector<1x1xf32>
    %c0_19 = arith.constant 0 : index
    %c256 = arith.constant 256 : index
    %36 = vector.load %arg3[%c0_19, %c256] : memref<256x2048xbf16, #tpu.memory_space<vmem>>, vector<256x256xbf16>
    %cst_20 = arith.constant dense<0.000000e+00> : vector<1x256xf32>
    %37 = tpu.matmul %22, %36, %cst_20 {dimension_numbers = #tpu.dot_dimension_numbers<[1], [0], [0], [1], [0, 0, 1, 1], [], []>} : vector<1x256xbf16>, vector<256x256xbf16>, vector<1x256xf32> -> vector<1x256xf32>
    %c1 = arith.constant 1 : index
    %c0_21 = arith.constant 0 : index
    %38 = vector.load %arg11[%c1, %c0_21] : memref<8x256xf32, #tpu.memory_space<vmem>>, vector<1x256xf32>
    tpu.vector_store %arg11[%c1, %c0_21], %37 {strides = array<i32>} : memref<8x256xf32, #tpu.memory_space<vmem>>, vector<1x256xf32>,
    %39 = arith.mulf %37, %37 : vector<1x256xf32>
    %cst_22 = arith.constant dense<0.000000e+00> : vector<1xf32>
    %40 = vector.multi_reduction <add>, %39, %cst_22 [1] : vector<1x256xf32> to vector<1xf32>
    %41 = vector.shape_cast %40 : vector<1xf32> to vector<1x1xf32>
    %42 = arith.addf %31, %41 : vector<1x1xf32>
    %43 = math.absf %37 : vector<1x256xf32>
    %cst_23 = arith.constant dense<0.000000e+00> : vector<1xf32>
    %44 = vector.multi_reduction <add>, %43, %cst_23 [1] : vector<1x256xf32> to vector<1xf32>
    %45 = vector.shape_cast %44 : vector<1xf32> to vector<1x1xf32>
    %46 = arith.addf %35, %45 : vector<1x1xf32>
    %c0_24 = arith.constant 0 : index
    %c512 = arith.constant 512 : index
    %47 = vector.load %arg3[%c0_24, %c512] : memref<256x2048xbf16, #tpu.memory_space<vmem>>, vector<256x256xbf16>
    %cst_25 = arith.constant dense<0.000000e+00> : vector<1x256xf32>
    %48 = tpu.matmul %22, %47, %cst_25 {dimension_numbers = #tpu.dot_dimension_numbers<[1], [0], [0], [1], [0, 0, 1, 1], [], []>} : vector<1x256xbf16>, vector<256x256xbf16>, vector<1x256xf32> -> vector<1x256xf32>
    %c2 = arith.constant 2 : index
    %c0_26 = arith.constant 0 : index
    %49 = vector.load %arg11[%c2, %c0_26] : memref<8x256xf32, #tpu.memory_space<vmem>>, vector<1x256xf32>
    tpu.vector_store %arg11[%c2, %c0_26], %48 {strides = array<i32>} : memref<8x256xf32, #tpu.memory_space<vmem>>, vector<1x256xf32>,
    %50 = arith.mulf %48, %48 : vector<1x256xf32>
    %cst_27 = arith.constant dense<0.000000e+00> : vector<1xf32>
    %51 = vector.multi_reduction <add>, %50, %cst_27 [1] : vector<1x256xf32> to vector<1xf32>
    %52 = vector.shape_cast %51 : vector<1xf32> to vector<1x1xf32>
    %53 = arith.addf %42, %52 : vector<1x1xf32>
    %54 = math.absf %48 : vector<1x256xf32>
    %cst_28 = arith.constant dense<0.000000e+00> : vector<1xf32>
    %55 = vector.multi_reduction <add>, %54, %cst_28 [1] : vector<1x256xf32> to vector<1xf32>
    %56 = vector.shape_cast %55 : vector<1xf32> to vector<1x1xf32>
    %57 = arith.addf %46, %56 : vector<1x1xf32>
    %c0_29 = arith.constant 0 : index
    %c768 = arith.constant 768 : index
    %58 = vector.load %arg3[%c0_29, %c768] : memref<256x2048xbf16, #tpu.memory_space<vmem>>, vector<256x256xbf16>
    %cst_30 = arith.constant dense<0.000000e+00> : vector<1x256xf32>
    %59 = tpu.matmul %22, %58, %cst_30 {dimension_numbers = #tpu.dot_dimension_numbers<[1], [0], [0], [1], [0, 0, 1, 1], [], []>} : vector<1x256xbf16>, vector<256x256xbf16>, vector<1x256xf32> -> vector<1x256xf32>
    %c3 = arith.constant 3 : index
    %c0_31 = arith.constant 0 : index
    %60 = vector.load %arg11[%c3, %c0_31] : memref<8x256xf32, #tpu.memory_space<vmem>>, vector<1x256xf32>
    tpu.vector_store %arg11[%c3, %c0_31], %59 {strides = array<i32>} : memref<8x256xf32, #tpu.memory_space<vmem>>, vector<1x256xf32>,
    %61 = arith.mulf %59, %59 : vector<1x256xf32>
    %cst_32 = arith.constant dense<0.000000e+00> : vector<1xf32>
    %62 = vector.multi_reduction <add>, %61, %cst_32 [1] : vector<1x256xf32> to vector<1xf32>
    %63 = vector.shape_cast %62 : vector<1xf32> to vector<1x1xf32>
    %64 = arith.addf %53, %63 : vector<1x1xf32>
    %65 = math.absf %59 : vector<1x256xf32>
    %cst_33 = arith.constant dense<0.000000e+00> : vector<1xf32>
    %66 = vector.multi_reduction <add>, %65, %cst_33 [1] : vector<1x256xf32> to vector<1xf32>
    %67 = vector.shape_cast %66 : vector<1xf32> to vector<1x1xf32>
    %68 = arith.addf %57, %67 : vector<1x1xf32>
    %c0_34 = arith.constant 0 : index
    %c1024 = arith.constant 1024 : index
    %69 = vector.load %arg3[%c0_34, %c1024] : memref<256x2048xbf16, #tpu.memory_space<vmem>>, vector<256x256xbf16>
    %cst_35 = arith.constant dense<0.000000e+00> : vector<1x256xf32>
    %70 = tpu.matmul %22, %69, %cst_35 {dimension_numbers = #tpu.dot_dimension_numbers<[1], [0], [0], [1], [0, 0, 1, 1], [], []>} : vector<1x256xbf16>, vector<256x256xbf16>, vector<1x256xf32> -> vector<1x256xf32>
    %c4 = arith.constant 4 : index
    %c0_36 = arith.constant 0 : index
    %71 = vector.load %arg11[%c4, %c0_36] : memref<8x256xf32, #tpu.memory_space<vmem>>, vector<1x256xf32>
    tpu.vector_store %arg11[%c4, %c0_36], %70 {strides = array<i32>} : memref<8x256xf32, #tpu.memory_space<vmem>>, vector<1x256xf32>,
    %72 = arith.mulf %70, %70 : vector<1x256xf32>
    %cst_37 = arith.constant dense<0.000000e+00> : vector<1xf32>
    %73 = vector.multi_reduction <add>, %72, %cst_37 [1] : vector<1x256xf32> to vector<1xf32>
    %74 = vector.shape_cast %73 : vector<1xf32> to vector<1x1xf32>
    %75 = arith.addf %64, %74 : vector<1x1xf32>
    %76 = math.absf %70 : vector<1x256xf32>
    %cst_38 = arith.constant dense<0.000000e+00> : vector<1xf32>
    %77 = vector.multi_reduction <add>, %76, %cst_38 [1] : vector<1x256xf32> to vector<1xf32>
    %78 = vector.shape_cast %77 : vector<1xf32> to vector<1x1xf32>
    %79 = arith.addf %68, %78 : vector<1x1xf32>
    %c0_39 = arith.constant 0 : index
    %c1280 = arith.constant 1280 : index
    %80 = vector.load %arg3[%c0_39, %c1280] : memref<256x2048xbf16, #tpu.memory_space<vmem>>, vector<256x256xbf16>
    %cst_40 = arith.constant dense<0.000000e+00> : vector<1x256xf32>
    %81 = tpu.matmul %22, %80, %cst_40 {dimension_numbers = #tpu.dot_dimension_numbers<[1], [0], [0], [1], [0, 0, 1, 1], [], []>} : vector<1x256xbf16>, vector<256x256xbf16>, vector<1x256xf32> -> vector<1x256xf32>
    %c5 = arith.constant 5 : index
    %c0_41 = arith.constant 0 : index
    %82 = vector.load %arg11[%c5, %c0_41] : memref<8x256xf32, #tpu.memory_space<vmem>>, vector<1x256xf32>
    tpu.vector_store %arg11[%c5, %c0_41], %81 {strides = array<i32>} : memref<8x256xf32, #tpu.memory_space<vmem>>, vector<1x256xf32>,
    %83 = arith.mulf %81, %81 : vector<1x256xf32>
    %cst_42 = arith.constant dense<0.000000e+00> : vector<1xf32>
    %84 = vector.multi_reduction <add>, %83, %cst_42 [1] : vector<1x256xf32> to vector<1xf32>
    %85 = vector.shape_cast %84 : vector<1xf32> to vector<1x1xf32>
    %86 = arith.addf %75, %85 : vector<1x1xf32>
    %87 = math.absf %81 : vector<1x256xf32>
    %cst_43 = arith.constant dense<0.000000e+00> : vector<1xf32>
    %88 = vector.multi_reduction <add>, %87, %cst_43 [1] : vector<1x256xf32> to vector<1xf32>
    %89 = vector.shape_cast %88 : vector<1xf32> to vector<1x1xf32>
    %90 = arith.addf %79, %89 : vector<1x1xf32>
    %c0_44 = arith.constant 0 : index
    %c1536 = arith.constant 1536 : index
    %91 = vector.load %arg3[%c0_44, %c1536] : memref<256x2048xbf16, #tpu.memory_space<vmem>>, vector<256x256xbf16>
    %cst_45 = arith.constant dense<0.000000e+00> : vector<1x256xf32>
    %92 = tpu.matmul %22, %91, %cst_45 {dimension_numbers = #tpu.dot_dimension_numbers<[1], [0], [0], [1], [0, 0, 1, 1], [], []>} : vector<1x256xbf16>, vector<256x256xbf16>, vector<1x256xf32> -> vector<1x256xf32>
    %c6 = arith.constant 6 : index
    %c0_46 = arith.constant 0 : index
    %93 = vector.load %arg11[%c6, %c0_46] : memref<8x256xf32, #tpu.memory_space<vmem>>, vector<1x256xf32>
    tpu.vector_store %arg11[%c6, %c0_46], %92 {strides = array<i32>} : memref<8x256xf32, #tpu.memory_space<vmem>>, vector<1x256xf32>,
    %94 = arith.mulf %92, %92 : vector<1x256xf32>
    %cst_47 = arith.constant dense<0.000000e+00> : vector<1xf32>
    %95 = vector.multi_reduction <add>, %94, %cst_47 [1] : vector<1x256xf32> to vector<1xf32>
    %96 = vector.shape_cast %95 : vector<1xf32> to vector<1x1xf32>
    %97 = arith.addf %86, %96 : vector<1x1xf32>
    %98 = math.absf %92 : vector<1x256xf32>
    %cst_48 = arith.constant dense<0.000000e+00> : vector<1xf32>
    %99 = vector.multi_reduction <add>, %98, %cst_48 [1] : vector<1x256xf32> to vector<1xf32>
    %100 = vector.shape_cast %99 : vector<1xf32> to vector<1x1xf32>
    %101 = arith.addf %90, %100 : vector<1x1xf32>
    %c0_49 = arith.constant 0 : index
    %c1792 = arith.constant 1792 : index
    %102 = vector.load %arg3[%c0_49, %c1792] : memref<256x2048xbf16, #tpu.memory_space<vmem>>, vector<256x256xbf16>
    %cst_50 = arith.constant dense<0.000000e+00> : vector<1x256xf32>
    %103 = tpu.matmul %22, %102, %cst_50 {dimension_numbers = #tpu.dot_dimension_numbers<[1], [0], [0], [1], [0, 0, 1, 1], [], []>} : vector<1x256xbf16>, vector<256x256xbf16>, vector<1x256xf32> -> vector<1x256xf32>
    %c7 = arith.constant 7 : index
    %c0_51 = arith.constant 0 : index
    %104 = vector.load %arg11[%c7, %c0_51] : memref<8x256xf32, #tpu.memory_space<vmem>>, vector<1x256xf32>
    tpu.vector_store %arg11[%c7, %c0_51], %103 {strides = array<i32>} : memref<8x256xf32, #tpu.memory_space<vmem>>, vector<1x256xf32>,
    %105 = arith.mulf %103, %103 : vector<1x256xf32>
    %cst_52 = arith.constant dense<0.000000e+00> : vector<1xf32>
    %106 = vector.multi_reduction <add>, %105, %cst_52 [1] : vector<1x256xf32> to vector<1xf32>
    %107 = vector.shape_cast %106 : vector<1xf32> to vector<1x1xf32>
    %108 = arith.addf %97, %107 : vector<1x1xf32>
    %109 = math.absf %103 : vector<1x256xf32>
    %cst_53 = arith.constant dense<0.000000e+00> : vector<1xf32>
    %110 = vector.multi_reduction <add>, %109, %cst_53 [1] : vector<1x256xf32> to vector<1xf32>
    %111 = vector.shape_cast %110 : vector<1xf32> to vector<1x1xf32>
    %112 = arith.addf %101, %111 : vector<1x1xf32>
    %113 = math.sqrt %108 : vector<1x1xf32>
    %cst_54 = arith.constant 1.000000e-15 : f32
    %114 = vector.broadcast %cst_54 : f32 to vector<1x1xf32>
    %115 = arith.maximumf %113, %114 : vector<1x1xf32>
    %116 = arith.divf %115, %21 : vector<1x1xf32>
    %cst_55 = arith.constant 1.000000e+00 : f32
    %117 = vector.broadcast %cst_55 : f32 to vector<1x1xf32>
    %118 = arith.mulf %117, %21 : vector<1x1xf32>
    %cst_56 = arith.constant -0.99999988 : f32
    %cst_57 = arith.constant 0.99999988 : f32
    %119 = vector.broadcast %cst_56 : f32 to vector<1x1xf32>
    %120 = arith.maximumf %119, %118 : vector<1x1xf32>
    %121 = vector.broadcast %cst_57 : f32 to vector<1x1xf32>
    %122 = arith.minimumf %121, %120 : vector<1x1xf32>
    %cst_58 = arith.constant 1.000000e+00 : f32
    %123 = vector.broadcast %cst_58 : f32 to vector<1x1xf32>
    %124 = arith.addf %123, %122 : vector<1x1xf32>
    %125 = math.log %124 : vector<1x1xf32>
    %cst_59 = arith.constant 1.000000e+00 : f32
    %126 = vector.broadcast %cst_59 : f32 to vector<1x1xf32>
    %127 = arith.subf %126, %122 : vector<1x1xf32>
    %128 = math.log %127 : vector<1x1xf32>
    %129 = arith.subf %125, %128 : vector<1x1xf32>
    %cst_60 = arith.constant 5.000000e-01 : f32
    %130 = vector.broadcast %cst_60 : f32 to vector<1x1xf32>
    %131 = arith.mulf %130, %129 : vector<1x1xf32>
    %132 = arith.mulf %116, %131 : vector<1x1xf32>
    %133 = math.tanh %132 : vector<1x1xf32>
    %cst_61 = arith.constant 1.000000e+00 : f32
    %134 = vector.broadcast %cst_61 : f32 to vector<1x1xf32>
    %135 = arith.mulf %115, %134 : vector<1x1xf32>
    %136 = arith.divf %133, %135 : vector<1x1xf32>
    %cst_62 = arith.constant 0.000000e+00 : f32
    %137 = vector.broadcast %cst_62 : f32 to vector<1x1xf32>
    %138 = arith.cmpf oeq, %112, %137 : vector<1x1xf32>
    %cst_63 = arith.constant 0.000000e+00 : f32
    %139 = vector.broadcast %cst_63 : f32 to vector<1x1xf32>
    %140 = arith.select %138, %139, %136 : vector<1x1xi1>, vector<1x1xf32>
    %141 = arith.mulf %140, %113 : vector<1x1xf32>
    %cst_64 = arith.constant 1.000000e-15 : f32
    %142 = vector.broadcast %cst_64 : f32 to vector<1x1xf32>
    %143 = arith.maximumf %141, %142 : vector<1x1xf32>
    %cst_65 = arith.constant 0.995999991 : f32
    %144 = vector.broadcast %cst_65 : f32 to vector<1x1xf32>
    %145 = arith.cmpf ogt, %143, %144 : vector<1x1xf32>
    %146 = tpu.reciprocal %143 {approx = true} : vector<1x1xf32> -> vector<1x1xf32>
    %cst_66 = arith.constant 0.995999991 : f32
    %147 = vector.broadcast %cst_66 : f32 to vector<1x1xf32>
    %148 = arith.mulf %147, %146 : vector<1x1xf32>
    %cst_67 = arith.constant 1.000000e+00 : f32
    %149 = vector.broadcast %cst_67 : f32 to vector<1x1xf32>
    %150 = arith.select %145, %148, %149 : vector<1x1xi1>, vector<1x1xf32>
    %151 = arith.mulf %140, %150 : vector<1x1xf32>
    %152 = arith.mulf %4, %14 : vector<1x256xf32>
    %153 = arith.mulf %152, %14 : vector<1x256xf32>
    %cst_68 = arith.constant 1.000000e+00 : f32
    %154 = vector.broadcast %cst_68 : f32 to vector<1x256xf32>
    %155 = arith.mulf %154, %153 : vector<1x256xf32>
    %cst_69 = arith.constant 1.000000e+00 : f32
    %156 = vector.broadcast %cst_69 : f32 to vector<1x256xf32>
    %157 = arith.subf %156, %155 : vector<1x256xf32>
    %cst_70 = arith.constant 1.000000e-15 : f32
    %158 = vector.broadcast %cst_70 : f32 to vector<1x256xf32>
    %159 = arith.maximumf %157, %158 : vector<1x256xf32>
    %cst_71 = arith.constant 2.000000e+00 : f32
    %160 = vector.broadcast %cst_71 : f32 to vector<1x256xf32>
    %161 = arith.divf %160, %159 : vector<1x256xf32>
    %162 = arith.mulf %161, %15 : vector<1x256xf32>
    %c0_72 = arith.constant 0 : index
    %c0_73 = arith.constant 0 : index
    %163 = vector.load %arg11[%c0_72, %c0_73] : memref<8x256xf32, #tpu.memory_space<vmem>>, vector<8x256xf32>
    %c0_74 = arith.constant 0 : index
    %c0_75 = arith.constant 0 : index
    %c0_76 = arith.constant 0 : index
    %164 = vector.load %arg2[%c0_74, %c0_75, %c0_76] : memref<1x8x256xf32, #tpu.memory_space<vmem>>, vector<1x8x256xf32>
    %165 = vector.shape_cast %164 : vector<1x8x256xf32> to vector<8x256xf32>
    %166 = arith.mulf %163, %165 : vector<8x256xf32>
    %167 = vector.broadcast %162 : vector<1x256xf32> to vector<8x256xf32>
    %168 = arith.mulf %166, %167 : vector<8x256xf32>
    %c0_77 = arith.constant 0 : index
    %c0_78 = arith.constant 0 : index
    %169 = vector.load %arg6[%c0_77, %c0_78] : memref<256x32xf32, #tpu.memory_space<vmem>>, vector<256x32xf32>
    %cst_79 = arith.constant dense<0.000000e+00> : vector<8x32xf32>
    %170 = tpu.matmul %168, %169, %cst_79 {dimension_numbers = #tpu.dot_dimension_numbers<[1], [0], [0], [1], [0, 0, 1, 1], [], []>} : vector<8x256xf32>, vector<256x32xf32>, vector<8x32xf32> -> vector<8x32xf32>
    %cst_80 = arith.constant 1.000000e+00 : f32
    %171 = vector.broadcast %cst_80 : f32 to vector<1x256xf32>
    %172 = arith.subf %161, %171 : vector<1x256xf32>
    %173 = vector.broadcast %172 : vector<1x256xf32> to vector<8x256xf32>
    %174 = arith.mulf %166, %173 : vector<8x256xf32>
    %c0_81 = arith.constant 0 : index
    %c0_82 = arith.constant 0 : index
    %175 = vector.load %arg6[%c0_81, %c0_82] : memref<256x32xf32, #tpu.memory_space<vmem>>, vector<256x32xf32>
    %cst_83 = arith.constant dense<0.000000e+00> : vector<8x32xf32>
    %176 = tpu.matmul %174, %175, %cst_83 {dimension_numbers = #tpu.dot_dimension_numbers<[1], [0], [0], [1], [0, 0, 1, 1], [], []>} : vector<8x256xf32>, vector<256x32xf32>, vector<8x32xf32> -> vector<8x32xf32>
    %177 = vector.broadcast %151 : vector<1x1xf32> to vector<8x32xf32>
    %178 = arith.mulf %177, %170 : vector<8x32xf32>
    %179 = vector.broadcast %151 : vector<1x1xf32> to vector<8x32xf32>
    %180 = arith.mulf %179, %176 : vector<8x32xf32>
    %cst_84 = arith.constant 1.000000e-15 : f32
    %181 = vector.broadcast %cst_84 : f32 to vector<8x32xf32>
    %182 = arith.maximumf %180, %181 : vector<8x32xf32>
    %183 = arith.divf %178, %182 : vector<8x32xf32>
    %184 = arith.mulf %183, %183 : vector<8x32xf32>
    %cst_85 = arith.constant dense<0.000000e+00> : vector<8xf32>
    %185 = vector.multi_reduction <add>, %184, %cst_85 [1] : vector<8x32xf32> to vector<8xf32>
    %186 = vector.shape_cast %185 : vector<8xf32> to vector<8x1xf32>
    %187 = math.sqrt %186 : vector<8x1xf32>
    %cst_86 = arith.constant 1.000000e-15 : f32
    %188 = vector.broadcast %cst_86 : f32 to vector<8x1xf32>
    %189 = arith.maximumf %187, %188 : vector<8x1xf32>
    %cst_87 = arith.constant 1.000000e+00 : f32
    %190 = vector.broadcast %cst_87 : f32 to vector<8x1xf32>
    %191 = arith.mulf %190, %189 : vector<8x1xf32>
    %cst_88 = arith.constant -0.99999988 : f32
    %cst_89 = arith.constant 0.99999988 : f32
    %192 = vector.broadcast %cst_88 : f32 to vector<8x1xf32>
    %193 = arith.maximumf %192, %191 : vector<8x1xf32>
    %194 = vector.broadcast %cst_89 : f32 to vector<8x1xf32>
    %195 = arith.minimumf %194, %193 : vector<8x1xf32>
    %cst_90 = arith.constant 1.000000e+00 : f32
    %196 = vector.broadcast %cst_90 : f32 to vector<8x1xf32>
    %197 = arith.addf %196, %195 : vector<8x1xf32>
    %198 = math.log %197 : vector<8x1xf32>
    %cst_91 = arith.constant 1.000000e+00 : f32
    %199 = vector.broadcast %cst_91 : f32 to vector<8x1xf32>
    %200 = arith.subf %199, %195 : vector<8x1xf32>
    %201 = math.log %200 : vector<8x1xf32>
    %202 = arith.subf %198, %201 : vector<8x1xf32>
    %cst_92 = arith.constant 5.000000e-01 : f32
    %203 = vector.broadcast %cst_92 : f32 to vector<8x1xf32>
    %204 = arith.mulf %203, %202 : vector<8x1xf32>
    %cst_93 = arith.constant 5.000000e-01 : f32
    %205 = vector.broadcast %cst_93 : f32 to vector<8x1xf32>
    %206 = arith.mulf %205, %204 : vector<8x1xf32>
    %207 = math.tanh %206 : vector<8x1xf32>
    %208 = vector.broadcast %207 : vector<8x1xf32> to vector<8x32xf32>
    %209 = arith.mulf %208, %183 : vector<8x32xf32>
    %cst_94 = arith.constant 1.000000e+00 : f32
    %210 = vector.broadcast %cst_94 : f32 to vector<8x1xf32>
    %211 = arith.mulf %210, %189 : vector<8x1xf32>
    %212 = vector.broadcast %211 : vector<8x1xf32> to vector<8x32xf32>
    %213 = arith.divf %209, %212 : vector<8x32xf32>
    %c0_95 = arith.constant 0 : index
    %c0_96 = arith.constant 0 : index
    %214 = vector.load %arg7[%c0_95, %c0_96] : memref<32x256xf32, #tpu.memory_space<vmem>>, vector<32x256xf32>
    %cst_97 = arith.constant dense<0.000000e+00> : vector<8x256xf32>
    %215 = tpu.matmul %213, %214, %cst_97 {dimension_numbers = #tpu.dot_dimension_numbers<[1], [0], [0], [1], [0, 0, 1, 1], [], []>} : vector<8x32xf32>, vector<32x256xf32>, vector<8x256xf32> -> vector<8x256xf32>
    %c0_98 = arith.constant 0 : index
    %c0_99 = arith.constant 0 : index
    %216 = vector.load %arg8[%c0_98, %c0_99] : memref<8x256xf32, #tpu.memory_space<vmem>>, vector<8x256xf32>
    %217 = arith.mulf %216, %215 : vector<8x256xf32>
    %cst_100 = arith.constant dense<0.000000e+00> : vector<256xf32>
    %218 = vector.multi_reduction <add>, %217, %cst_100 [0] : vector<8x256xf32> to vector<256xf32>
    %219 = vector.shape_cast %218 : vector<256xf32> to vector<1x256xf32>
    %220 = arith.mulf %219, %219 : vector<1x256xf32>
    %cst_101 = arith.constant dense<0.000000e+00> : vector<1xf32>
    %221 = vector.multi_reduction <add>, %220, %cst_101 [1] : vector<1x256xf32> to vector<1xf32>
    %222 = vector.shape_cast %221 : vector<1xf32> to vector<1x1xf32>
    %223 = math.sqrt %222 : vector<1x1xf32>
    %cst_102 = arith.constant 1.000000e-15 : f32
    %224 = vector.broadcast %cst_102 : f32 to vector<1x1xf32>
    %225 = arith.maximumf %223, %224 : vector<1x1xf32>
    %c0_103 = arith.constant 0 : index
    %c0_104 = arith.constant 0 : index
    %226 = vector.load %arg4[%c0_103, %c0_104] : memref<256x256xf32, #tpu.memory_space<vmem>>, vector<256x256xf32>
    %cst_105 = arith.constant dense<0.000000e+00> : vector<1x256xf32>
    %227 = tpu.matmul %219, %226, %cst_105 {dimension_numbers = #tpu.dot_dimension_numbers<[1], [0], [0], [1], [0, 0, 1, 1], [], []>} : vector<1x256xf32>, vector<256x256xf32>, vector<1x256xf32> -> vector<1x256xf32>
    %228 = arith.mulf %227, %227 : vector<1x256xf32>
    %cst_106 = arith.constant dense<0.000000e+00> : vector<1xf32>
    %229 = vector.multi_reduction <add>, %228, %cst_106 [1] : vector<1x256xf32> to vector<1xf32>
    %230 = vector.shape_cast %229 : vector<1xf32> to vector<1x1xf32>
    %231 = math.absf %227 : vector<1x256xf32>
    %cst_107 = arith.constant dense<0.000000e+00> : vector<1xf32>
    %232 = vector.multi_reduction <add>, %231, %cst_107 [1] : vector<1x256xf32> to vector<1xf32>
    %233 = vector.shape_cast %232 : vector<1xf32> to vector<1x1xf32>
    %234 = math.sqrt %230 : vector<1x1xf32>
    %cst_108 = arith.constant 1.000000e-15 : f32
    %235 = vector.broadcast %cst_108 : f32 to vector<1x1xf32>
    %236 = arith.maximumf %234, %235 : vector<1x1xf32>
    %237 = arith.divf %236, %225 : vector<1x1xf32>
    %cst_109 = arith.constant 1.000000e+00 : f32
    %238 = vector.broadcast %cst_109 : f32 to vector<1x1xf32>
    %239 = arith.mulf %238, %225 : vector<1x1xf32>
    %cst_110 = arith.constant -0.99999988 : f32
    %cst_111 = arith.constant 0.99999988 : f32
    %240 = vector.broadcast %cst_110 : f32 to vector<1x1xf32>
    %241 = arith.maximumf %240, %239 : vector<1x1xf32>
    %242 = vector.broadcast %cst_111 : f32 to vector<1x1xf32>
    %243 = arith.minimumf %242, %241 : vector<1x1xf32>
    %cst_112 = arith.constant 1.000000e+00 : f32
    %244 = vector.broadcast %cst_112 : f32 to vector<1x1xf32>
    %245 = arith.addf %244, %243 : vector<1x1xf32>
    %246 = math.log %245 : vector<1x1xf32>
    %cst_113 = arith.constant 1.000000e+00 : f32
    %247 = vector.broadcast %cst_113 : f32 to vector<1x1xf32>
    %248 = arith.subf %247, %243 : vector<1x1xf32>
    %249 = math.log %248 : vector<1x1xf32>
    %250 = arith.subf %246, %249 : vector<1x1xf32>
    %cst_114 = arith.constant 5.000000e-01 : f32
    %251 = vector.broadcast %cst_114 : f32 to vector<1x1xf32>
    %252 = arith.mulf %251, %250 : vector<1x1xf32>
    %253 = arith.mulf %237, %252 : vector<1x1xf32>
    %254 = math.tanh %253 : vector<1x1xf32>
    %cst_115 = arith.constant 1.000000e+00 : f32
    %255 = vector.broadcast %cst_115 : f32 to vector<1x1xf32>
    %256 = arith.mulf %236, %255 : vector<1x1xf32>
    %257 = arith.divf %254, %256 : vector<1x1xf32>
    %cst_116 = arith.constant 0.000000e+00 : f32
    %258 = vector.broadcast %cst_116 : f32 to vector<1x1xf32>
    %259 = arith.cmpf oeq, %233, %258 : vector<1x1xf32>
    %cst_117 = arith.constant 0.000000e+00 : f32
    %260 = vector.broadcast %cst_117 : f32 to vector<1x1xf32>
    %261 = arith.select %259, %260, %257 : vector<1x1xi1>, vector<1x1xf32>
    %262 = arith.mulf %261, %234 : vector<1x1xf32>
    %cst_118 = arith.constant 1.000000e-15 : f32
    %263 = vector.broadcast %cst_118 : f32 to vector<1x1xf32>
    %264 = arith.maximumf %262, %263 : vector<1x1xf32>
    %cst_119 = arith.constant 0.995999991 : f32
    %265 = vector.broadcast %cst_119 : f32 to vector<1x1xf32>
    %266 = arith.cmpf ogt, %264, %265 : vector<1x1xf32>
    %267 = tpu.reciprocal %264 {approx = true} : vector<1x1xf32> -> vector<1x1xf32>
    %cst_120 = arith.constant 0.995999991 : f32
    %268 = vector.broadcast %cst_120 : f32 to vector<1x1xf32>
    %269 = arith.mulf %268, %267 : vector<1x1xf32>
    %cst_121 = arith.constant 1.000000e+00 : f32
    %270 = vector.broadcast %cst_121 : f32 to vector<1x1xf32>
    %271 = arith.select %266, %269, %270 : vector<1x1xi1>, vector<1x1xf32>
    %272 = arith.mulf %261, %271 : vector<1x1xf32>
    %273 = arith.mulf %262, %262 : vector<1x1xf32>
    %cst_122 = arith.constant 9.920160e-01 : f32
    %274 = vector.broadcast %cst_122 : f32 to vector<1x1xf32>
    %275 = arith.select %266, %274, %273 : vector<1x1xi1>, vector<1x1xf32>
    %cst_123 = arith.constant 1.000000e+00 : f32
    %276 = vector.broadcast %cst_123 : f32 to vector<1x1xf32>
    %277 = arith.subf %276, %275 : vector<1x1xf32>
    %278 = tpu.reciprocal %277 {approx = true} : vector<1x1xf32> -> vector<1x1xf32>
    %cst_124 = arith.constant 1.000000e+00 : f32
    %279 = vector.broadcast %cst_124 : f32 to vector<1x1xf32>
    %280 = arith.addf %279, %275 : vector<1x1xf32>
    %cst_125 = arith.constant 1.000000e+00 : f32
    %281 = vector.broadcast %cst_125 : f32 to vector<1x1xf32>
    %282 = arith.mulf %281, %280 : vector<1x1xf32>
    %283 = arith.mulf %282, %278 : vector<1x1xf32>
    %c0_126 = arith.constant 0 : index
    %c0_127 = arith.constant 0 : index
    %c0_128 = arith.constant 0 : index
    %284 = vector.load %arg9[%c0_126, %c0_127, %c0_128] : memref<1x1x1xf32, #tpu.memory_space<vmem>>, vector<1x1x1xf32>
    %285 = vector.shape_cast %284 : vector<1x1x1xf32> to vector<1x1xf32>
    %286 = vector.shape_cast %283 : vector<1x1xf32> to vector<1x1x1xf32>
    tpu.vector_store %arg9[%c0_126, %c0_127, %c0_128], %286 {strides = array<i32>} : memref<1x1x1xf32, #tpu.memory_space<vmem>>, vector<1x1x1xf32>,
    %cst_129 = arith.constant 2.000000e+00 : f32
    %287 = vector.broadcast %cst_129 : f32 to vector<1x1xf32>
    %288 = arith.mulf %287, %272 : vector<1x1xf32>
    %289 = arith.mulf %288, %278 : vector<1x1xf32>
    %290 = vector.broadcast %289 : vector<1x1xf32> to vector<1x256xf32>
    %291 = arith.mulf %290, %227 : vector<1x256xf32>
    %c0_130 = arith.constant 0 : index
    %c0_131 = arith.constant 0 : index
    %c0_132 = arith.constant 0 : index
    %292 = vector.load %arg10[%c0_130, %c0_131, %c0_132] : memref<1x1x256xf32, #tpu.memory_space<vmem>>, vector<1x1x256xf32>
    %293 = vector.shape_cast %292 : vector<1x1x256xf32> to vector<1x256xf32>
    %294 = vector.shape_cast %291 : vector<1x256xf32> to vector<1x1x256xf32>
    tpu.vector_store %arg10[%c0_130, %c0_131, %c0_132], %294 {strides = array<i32>} : memref<1x1x256xf32, #tpu.memory_space<vmem>>, vector<1x1x256xf32>,
    return
  }
  func.func @transform_0(%arg0: i32) -> (i32, i32, i32) {
    %c0_i32 = arith.constant 0 : i32
    %c0_i32_0 = arith.constant 0 : i32
    %c0_i32_1 = arith.constant 0 : i32
    return %arg0, %c0_i32, %c0_i32_0 : i32, i32, i32
  }
  func.func @transform_1(%arg0: i32) -> (i32, i32, i32) {
    %c0_i32 = arith.constant 0 : i32
    %c0_i32_0 = arith.constant 0 : i32
    %c0_i32_1 = arith.constant 0 : i32
    return %arg0, %c0_i32, %c0_i32_0 : i32, i32, i32
  }
  func.func @transform_2(%arg0: i32) -> (i32, i32) {
    %c0_i32 = arith.constant 0 : i32
    %c0_i32_0 = arith.constant 0 : i32
    %c0_i32_1 = arith.constant 0 : i32
    return %c0_i32, %c0_i32_0 : i32, i32
  }
  func.func @transform_3(%arg0: i32) -> (i32, i32) {
    %c0_i32 = arith.constant 0 : i32
    %c0_i32_0 = arith.constant 0 : i32
    %c0_i32_1 = arith.constant 0 : i32
    return %c0_i32, %c0_i32_0 : i32, i32
  }
  func.func @transform_4(%arg0: i32) -> (i32, i32) {
    %c0_i32 = arith.constant 0 : i32
    %c0_i32_0 = arith.constant 0 : i32
    %c0_i32_1 = arith.constant 0 : i32
    return %c0_i32, %c0_i32_0 : i32, i32
  }
  func.func @transform_5(%arg0: i32) -> (i32, i32) {
    %c0_i32 = arith.constant 0 : i32
    %c0_i32_0 = arith.constant 0 : i32
    %c0_i32_1 = arith.constant 0 : i32
    return %c0_i32, %c0_i32_0 : i32, i32
  }
  func.func @transform_6(%arg0: i32) -> (i32, i32) {
    %c0_i32 = arith.constant 0 : i32
    %c0_i32_0 = arith.constant 0 : i32
    %c0_i32_1 = arith.constant 0 : i32
    return %c0_i32, %c0_i32_0 : i32, i32
  }
  func.func @transform_7(%arg0: i32) -> (i32, i32) {
    %c0_i32 = arith.constant 0 : i32
    %c0_i32_0 = arith.constant 0 : i32
    %c0_i32_1 = arith.constant 0 : i32
    return %c0_i32, %c0_i32_0 : i32, i32
  }
  func.func @transform_8(%arg0: i32) -> (i32, i32, i32) {
    %c0_i32 = arith.constant 0 : i32
    %c0_i32_0 = arith.constant 0 : i32
    %c0_i32_1 = arith.constant 0 : i32
    return %arg0, %c0_i32, %c0_i32_0 : i32, i32, i32
  }
  func.func @transform_9(%arg0: i32) -> (i32, i32, i32) {
    %c0_i32 = arith.constant 0 : i32
    %c0_i32_0 = arith.constant 0 : i32
    %c0_i32_1 = arith.constant 0 : i32
    return %arg0, %c0_i32, %c0_i32_0 : i32, i32, i32
  }
}

</mosaic_0001>

<llo_original>
// kernel: fwd.1
$region0: #{fwd.1}
  #allocation0 [shape = 'u32[]', space=smem, size = 0x4, offset = 0x4, fixed_abs, tag = 'smem constant byte address 0x4 - core index']
  #allocation1 [shape = 'u32[72,128]{1,0:T(1,128)}', space=vmem, size = 0x9000, scoped, tag = 'internal scratch']
  #allocation2 [shape = 'f32[8,256]{1,0:T(8,128)}', space=vmem, size = 0x2000, scoped, tag = 'scratch operand']
  %s0 = inlined_call_operand.vmem [shape: f32[4,1,256], index: 0, kind: input, shape index: {}]
  %s1 = inlined_call_operand.vmem [shape: f32[4,8,256], index: 1, kind: input, shape index: {}]
  %s2 = inlined_call_operand.hbm [shape: bf16[256,2048], index: 2, kind: input, shape index: {}]
  %s3 = inlined_call_operand.hbm [shape: f32[256,256], index: 3, kind: input, shape index: {}]
  %s4 = inlined_call_operand.hbm [shape: f32[256,256], index: 4, kind: input, shape index: {}]
  %s5 = inlined_call_operand.vmem [shape: f32[256,32], index: 5, kind: input, shape index: {}]
  %s6 = inlined_call_operand.vmem [shape: f32[32,256], index: 6, kind: input, shape index: {}]
  %s7 = inlined_call_operand.vmem [shape: f32[8,256], index: 7, kind: input, shape index: {}]
  %s8 = inlined_call_operand.vmem [shape: f32[4,1,1], index: 8, kind: output, shape index: {0}]
  %s9 = inlined_call_operand.vmem [shape: f32[4,1,256], index: 9, kind: output, shape index: {1}]
  %10 = xla_tuple %s8, %s9
  %s11 = sld [smem:[#allocation0]]
  $region85: #{fwd.1} parent=0
    _
  %s13 = ssub.s32 1, %s11
  %s14 = scalar_select 0, %s13, %s11
  $region1: #{fwd.1} parent=0
    #allocation3 [shape = 'u8[1048576]{0}', space=vmem, size = 0x100000, scoped, tag = 'input window, operand 2, single buffered']
    #allocation4 [shape = 's32[2]{0}', space=sflag, size = 0x8, scoped, tag = 'scoped memory for fwd.1']
    #allocation5 [shape = 'u8[262144]{0}', space=vmem, size = 0x40000, scoped, tag = 'input window, operand 3, single buffered']
    #allocation6 [shape = 's32[1]{0}', space=sflag, size = 0x4, scoped, tag = 'scoped memory for fwd.1']
    #allocation7 [shape = 'u8[262144]{0}', space=vmem, size = 0x40000, scoped, tag = 'input window, operand 4, single buffered']
    %15 = vsyncpa [#allocation4], 0
    %16 = vsyncpa [#allocation6], 0
    loop: start=0, step=1, limit=6
    $region2: #{fwd.1} parent=1 // loop_pre_header
      _
    $region3: #{fwd.1} parent=1 // loop_header
      %s18 = sphi 0, %s22
      %p19 = scmp.ge.s32.totalorder %s18, 6
      %s28 = sphi 0, %s30
      %s31 = sphi 0, %s28
      %s32 = sphi 0, %s31
      %s48 = sphi 0, %s32
      %s54 = sphi 0, %s56
      %s57 = sphi 0, %s54
      %s58 = sphi 0, %s57
      %s74 = sphi 0, %s58
      %s78 = sphi 0, %s78
      %s80 = sphi 0, %s78
      %s81 = sphi 0, %s80
      %s95 = sphi 0, %s81
      %s99 = sphi 0, %s99
      %s101 = sphi 0, %s99
      %s102 = sphi 0, %s101
      %s116 = sphi 0, %s102
      %s120 = sphi 0, %s120
      %s122 = sphi 0, %s120
      %s123 = sphi 0, %s122
      %s137 = sphi 0, %s123
      %s141 = sphi 0, %s141
      %s143 = sphi 0, %s141
      %s144 = sphi 0, %s143
      %s158 = sphi 0, %s144
      %s162 = sphi 0, %s162
      %s164 = sphi 0, %s162
      %s165 = sphi 0, %s164
      %s179 = sphi 0, %s165
      %s183 = sphi 0, %s183
      %s185 = sphi 0, %s183
      %s186 = sphi 0, %s185
      %s200 = sphi 0, %s186
      %s206 = sphi 0, %s208
      %s209 = sphi 0, %s206
      %s210 = sphi 0, %s209
      %s226 = sphi 0, %s210
      %s232 = sphi 0, %s234
      %s235 = sphi 0, %s232
      %s236 = sphi 0, %s235
      %s252 = sphi 0, %s236
    $region4: #{fwd.1} parent=1 // loop_header_branch
      %21 = sbr.rel (%p19) target = $region8
    $region5: #{fwd.1} parent=1 // loop_body
      %s23 = ssub.s32 %s18, 1
      %s24 = ssub.s32 %s18, 2
      %s25 = sadd.s32 %s18, 1
      %s26 = ssub.s32 %s18, %s25
      %p27 = scmp.eq.s32.totalorder %s26, 0
      %s29 = sadd.s32 %s28, 1
      %s30 = scalar_select %p27, %s28, %s29
      %p33 = pneg %p27
      %p34 = scmp.eq.s32.totalorder %s18, 3
      %p35 = por %p33, %p34
      %p36 = scmp.ne.s32.totalorder %s28, %s31
      %p37 = scmp.eq.s32.totalorder %s18, 0
      %p38 = por %p36, %p37
      %p39 = scmp.ne.s32.totalorder %s28, %s31
      %p40 = scmp.eq.s32.totalorder %s23, 3
      %p41 = por %p39, %p40
      %p42 = scmp.ne.s32.totalorder %s31, %s32
      %p43 = scmp.eq.s32.totalorder %s23, 0
      %p44 = por %p42, %p43
      %p45 = scmp.ne.s32.totalorder %s31, %s32
      %p46 = scmp.eq.s32.totalorder %s24, 3
      %p47 = por %p45, %p46
      %p49 = scmp.ne.s32.totalorder %s32, %s48
      %p50 = scmp.eq.s32.totalorder %s24, 0
      %p51 = por %p49, %p50
      %s52 = ssub.s32 %s18, %s25
      %p53 = scmp.eq.s32.totalorder %s52, 0
      %s55 = sadd.s32 %s54, 1
      %s56 = scalar_select %p53, %s54, %s55
      %p59 = pneg %p53
      %p60 = scmp.eq.s32.totalorder %s18, 3
      %p61 = por %p59, %p60
      %p62 = scmp.ne.s32.totalorder %s54, %s57
      %p63 = scmp.eq.s32.totalorder %s18, 0
      %p64 = por %p62, %p63
      %p65 = scmp.ne.s32.totalorder %s54, %s57
      %p66 = scmp.eq.s32.totalorder %s23, 3
      %p67 = por %p65, %p66
      %p68 = scmp.ne.s32.totalorder %s57, %s58
      %p69 = scmp.eq.s32.totalorder %s23, 0
      %p70 = por %p68, %p69
      %p71 = scmp.ne.s32.totalorder %s57, %s58
      %p72 = scmp.eq.s32.totalorder %s24, 3
      %p73 = por %p71, %p72
      %p75 = scmp.ne.s32.totalorder %s58, %s74
      %p76 = scmp.eq.s32.totalorder %s24, 0
      %p77 = por %p75, %p76
      %s79 = sadd.s32 %s78, 1
      %p82 = scmp.eq.s32.totalorder %s18, 3
      %p83 = scmp.ne.s32.totalorder %s78, %s80
      %p84 = scmp.eq.s32.totalorder %s18, 0
      %p85 = por %p83, %p84
      %p86 = scmp.ne.s32.totalorder %s78, %s80
      %p87 = scmp.eq.s32.totalorder %s23, 3
      %p88 = por %p86, %p87
      %p89 = scmp.ne.s32.totalorder %s80, %s81
      %p90 = scmp.eq.s32.totalorder %s23, 0
      %p91 = por %p89, %p90
      %p92 = scmp.ne.s32.totalorder %s80, %s81
      %p93 = scmp.eq.s32.totalorder %s24, 3
      %p94 = por %p92, %p93
      %p96 = scmp.ne.s32.totalorder %s81, %s95
      %p97 = scmp.eq.s32.totalorder %s24, 0
      %p98 = por %p96, %p97
      %s100 = sadd.s32 %s99, 1
      %p103 = scmp.eq.s32.totalorder %s18, 3
      %p104 = scmp.ne.s32.totalorder %s99, %s101
      %p105 = scmp.eq.s32.totalorder %s18, 0
      %p106 = por %p104, %p105
      %p107 = scmp.ne.s32.totalorder %s99, %s101
      %p108 = scmp.eq.s32.totalorder %s23, 3
      %p109 = por %p107, %p108
      %p110 = scmp.ne.s32.totalorder %s101, %s102
      %p111 = scmp.eq.s32.totalorder %s23, 0
      %p112 = por %p110, %p111
      %p113 = scmp.ne.s32.totalorder %s101, %s102
      %p114 = scmp.eq.s32.totalorder %s24, 3
      %p115 = por %p113, %p114
      %p117 = scmp.ne.s32.totalorder %s102, %s116
      %p118 = scmp.eq.s32.totalorder %s24, 0
      %p119 = por %p117, %p118
      %s121 = sadd.s32 %s120, 1
      %p124 = scmp.eq.s32.totalorder %s18, 3
      %p125 = scmp.ne.s32.totalorder %s120, %s122
      %p126 = scmp.eq.s32.totalorder %s18, 0
      %p127 = por %p125, %p126
      %p128 = scmp.ne.s32.totalorder %s120, %s122
      %p129 = scmp.eq.s32.totalorder %s23, 3
      %p130 = por %p128, %p129
      %p131 = scmp.ne.s32.totalorder %s122, %s123
      %p132 = scmp.eq.s32.totalorder %s23, 0
      %p133 = por %p131, %p132
      %p134 = scmp.ne.s32.totalorder %s122, %s123
      %p135 = scmp.eq.s32.totalorder %s24, 3
      %p136 = por %p134, %p135
      %p138 = scmp.ne.s32.totalorder %s123, %s137
      %p139 = scmp.eq.s32.totalorder %s24, 0
      %p140 = por %p138, %p139
      %s142 = sadd.s32 %s141, 1
      %p145 = scmp.eq.s32.totalorder %s18, 3
      %p146 = scmp.ne.s32.totalorder %s141, %s143
      %p147 = scmp.eq.s32.totalorder %s18, 0
      %p148 = por %p146, %p147
      %p149 = scmp.ne.s32.totalorder %s141, %s143
      %p150 = scmp.eq.s32.totalorder %s23, 3
      %p151 = por %p149, %p150
      %p152 = scmp.ne.s32.totalorder %s143, %s144
      %p153 = scmp.eq.s32.totalorder %s23, 0
      %p154 = por %p152, %p153
      %p155 = scmp.ne.s32.totalorder %s143, %s144
      %p156 = scmp.eq.s32.totalorder %s24, 3
      %p157 = por %p155, %p156
      %p159 = scmp.ne.s32.totalorder %s144, %s158
      %p160 = scmp.eq.s32.totalorder %s24, 0
      %p161 = por %p159, %p160
      %s163 = sadd.s32 %s162, 1
      %p166 = scmp.eq.s32.totalorder %s18, 3
      %p167 = scmp.ne.s32.totalorder %s162, %s164
      %p168 = scmp.eq.s32.totalorder %s18, 0
      %p169 = por %p167, %p168
      %p170 = scmp.ne.s32.totalorder %s162, %s164
      %p171 = scmp.eq.s32.totalorder %s23, 3
      %p172 = por %p170, %p171
      %p173 = scmp.ne.s32.totalorder %s164, %s165
      %p174 = scmp.eq.s32.totalorder %s23, 0
      %p175 = por %p173, %p174
      %p176 = scmp.ne.s32.totalorder %s164, %s165
      %p177 = scmp.eq.s32.totalorder %s24, 3
      %p178 = por %p176, %p177
      %p180 = scmp.ne.s32.totalorder %s165, %s179
      %p181 = scmp.eq.s32.totalorder %s24, 0
      %p182 = por %p180, %p181
      %s184 = sadd.s32 %s183, 1
      %p187 = scmp.eq.s32.totalorder %s18, 3
      %p188 = scmp.ne.s32.totalorder %s183, %s185
      %p189 = scmp.eq.s32.totalorder %s18, 0
      %p190 = por %p188, %p189
      %p191 = scmp.ne.s32.totalorder %s183, %s185
      %p192 = scmp.eq.s32.totalorder %s23, 3
      %p193 = por %p191, %p192
      %p194 = scmp.ne.s32.totalorder %s185, %s186
      %p195 = scmp.eq.s32.totalorder %s23, 0
      %p196 = por %p194, %p195
      %p197 = scmp.ne.s32.totalorder %s185, %s186
      %p198 = scmp.eq.s32.totalorder %s24, 3
      %p199 = por %p197, %p198
      %p201 = scmp.ne.s32.totalorder %s186, %s200
      %p202 = scmp.eq.s32.totalorder %s24, 0
      %p203 = por %p201, %p202
      %s204 = ssub.s32 %s18, %s25
      %p205 = scmp.eq.s32.totalorder %s204, 0
      %s207 = sadd.s32 %s206, 1
      %s208 = scalar_select %p205, %s206, %s207
      %p211 = pneg %p205
      %p212 = scmp.eq.s32.totalorder %s18, 3
      %p213 = por %p211, %p212
      %p214 = scmp.ne.s32.totalorder %s206, %s209
      %p215 = scmp.eq.s32.totalorder %s18, 0
      %p216 = por %p214, %p215
      %p217 = scmp.ne.s32.totalorder %s206, %s209
      %p218 = scmp.eq.s32.totalorder %s23, 3
      %p219 = por %p217, %p218
      %p220 = scmp.ne.s32.totalorder %s209, %s210
      %p221 = scmp.eq.s32.totalorder %s23, 0
      %p222 = por %p220, %p221
      %p223 = scmp.ne.s32.totalorder %s209, %s210
      %p224 = scmp.eq.s32.totalorder %s24, 3
      %p225 = por %p223, %p224
      %p227 = scmp.ne.s32.totalorder %s210, %s226
      %p228 = scmp.eq.s32.totalorder %s24, 0
      %p229 = por %p227, %p228
      %s230 = ssub.s32 %s18, %s25
      %p231 = scmp.eq.s32.totalorder %s230, 0
      %s233 = sadd.s32 %s232, 1
      %s234 = scalar_select %p231, %s232, %s233
      %p237 = pneg %p231
      %p238 = scmp.eq.s32.totalorder %s18, 3
      %p239 = por %p237, %p238
      %p240 = scmp.ne.s32.totalorder %s232, %s235
      %p241 = scmp.eq.s32.totalorder %s18, 0
      %p242 = por %p240, %p241
      %p243 = scmp.ne.s32.totalorder %s232, %s235
      %p244 = scmp.eq.s32.totalorder %s23, 3
      %p245 = por %p243, %p244
      %p246 = scmp.ne.s32.totalorder %s235, %s236
      %p247 = scmp.eq.s32.totalorder %s23, 0
      %p248 = por %p246, %p247
      %p249 = scmp.ne.s32.totalorder %s235, %s236
      %p250 = scmp.eq.s32.totalorder %s24, 3
      %p251 = por %p249, %p250
      %p253 = scmp.ne.s32.totalorder %s236, %s252
      %p254 = scmp.eq.s32.totalorder %s24, 0
      %p255 = por %p253, %p254
      %p256 = scmp.le.s32.totalorder 1, %s18
      %p257 = scmp.lt.s32.totalorder %s18, 5
      %p258 = pnand %p256, %p257
      %p259 = pneg %p258
      // Predicated region
      $region9: #{fwd.1} parent=5 // pred_check
        _
      $region10: #{fwd.1} parent=5 // pred_check_branch
        %261 = sbr.rel (%p258) target = $region12
      $region11: #{fwd.1} parent=5 // pred_region
        %s262 = ssub.s32 %s18, 1
        // Predicated region
        $region13: #{fwd.1} parent=11 // pred_check
          %p263 = pneg %p91
        $region14: #{fwd.1} parent=11 // pred_check_branch
          %265 = sbr.rel (%p263) target = $region16
        $region15: #{fwd.1} parent=11 // pred_region
          %267 = vsyncadd [#allocation4], 0
          %s268 = sshll.u32 %s2, 4
          %s269 = int_to_ptr.hbm [resolvable:$true] %s268
          %s270 = sshll.u32 [#allocation3], 4
          %s271 = int_to_ptr.vmem [resolvable:$true] %s270
          %276 = dma.hbm_to_vmem [thread:$0]  %s269, 32768, %s271, [#allocation4], 1024, 1024, 64
        $region16: #{fwd.1} parent=11 // pred_fallthru
          _
        // Predicated region
        $region17: #{fwd.1} parent=11 // pred_check
          %p277 = pneg %p112
        $region18: #{fwd.1} parent=11 // pred_check_branch
          %279 = sbr.rel (%p277) target = $region20
        $region19: #{fwd.1} parent=11 // pred_region
          %281 = vsyncadd [#allocation6], 0
          %s282 = sshll.u32 %s3, 4
          %s283 = int_to_ptr.hbm [resolvable:$true] %s282
          %s284 = sshll.u32 [#allocation5], 4
          %s285 = int_to_ptr.vmem [resolvable:$true] %s284
          %290 = dma.hbm_to_vmem [thread:$0]  %s283, 8192, %s285, [#allocation6], 256, 256, 16
        $region20: #{fwd.1} parent=11 // pred_fallthru
          _
        // Predicated region
        $region21: #{fwd.1} parent=11 // pred_check
          %p291 = pneg %p133
        $region22: #{fwd.1} parent=11 // pred_check_branch
          %293 = sbr.rel (%p291) target = $region24
        $region23: #{fwd.1} parent=11 // pred_region
          %295 = vsyncadd [#allocation6], 0
          %s296 = sshll.u32 %s4, 4
          %s297 = int_to_ptr.hbm [resolvable:$true] %s296
          %s298 = sshll.u32 [#allocation7], 4
          %s299 = int_to_ptr.vmem [resolvable:$true] %s298
          %304 = dma.hbm_to_vmem [thread:$0]  %s297, 8192, %s299, [#allocation6], 256, 256, 16
        $region24: #{fwd.1} parent=11 // pred_fallthru
          _
        // Predicated region
        $region25: #{fwd.1} parent=11 // pred_check
          %p305 = pneg %p154
        $region26: #{fwd.1} parent=11 // pred_check_branch
          %307 = sbr.rel (%p305) target = $region28
        $region27: #{fwd.1} parent=11 // pred_region
          _
        $region28: #{fwd.1} parent=11 // pred_fallthru
          _
        // Predicated region
        $region29: #{fwd.1} parent=11 // pred_check
          %p308 = pneg %p175
        $region30: #{fwd.1} parent=11 // pred_check_branch
          %310 = sbr.rel (%p308) target = $region32
        $region31: #{fwd.1} parent=11 // pred_region
          _
        $region32: #{fwd.1} parent=11 // pred_fallthru
          _
        // Predicated region
        $region33: #{fwd.1} parent=11 // pred_check
          %p311 = pneg %p196
        $region34: #{fwd.1} parent=11 // pred_check_branch
          %313 = sbr.rel (%p311) target = $region36
        $region35: #{fwd.1} parent=11 // pred_region
          _
        $region36: #{fwd.1} parent=11 // pred_fallthru
          _
      $region12: #{fwd.1} parent=5 // pred_fallthru
        _
      %p314 = scmp.lt.s32.totalorder %s18, 4
      // Predicated region
      $region37: #{fwd.1} parent=5 // pred_check
        %p315 = pneg %p314
      $region38: #{fwd.1} parent=5 // pred_check_branch
        %317 = sbr.rel (%p315) target = $region40
      $region39: #{fwd.1} parent=5 // pred_region
        // Predicated region
        $region41: #{fwd.1} parent=39 // pred_check
          %p318 = pneg %p38
        $region42: #{fwd.1} parent=39 // pred_check_branch
          %320 = sbr.rel (%p318) target = $region44
        $region43: #{fwd.1} parent=39 // pred_region
          %p321 = scmp.lt.s32.totalorder %s18, 3
          %s322 = scalar_select %p321, %s18, 3
          %s323 = smul.addr %s322, 2
          %s324 = scalar_lea.vmem %s0, %s323
        $region44: #{fwd.1} parent=39 // pred_fallthru
          _
        // Predicated region
        $region45: #{fwd.1} parent=39 // pred_check
          %p325 = pneg %p64
        $region46: #{fwd.1} parent=39 // pred_check_branch
          %327 = sbr.rel (%p325) target = $region48
        $region47: #{fwd.1} parent=39 // pred_region
          %p328 = scmp.lt.s32.totalorder %s18, 3
          %s329 = scalar_select %p328, %s18, 3
          %s330 = smul.addr %s329, 2
          %s331 = smul.addr %s330, 8
          %s332 = scalar_lea.vmem %s1, %s331
        $region48: #{fwd.1} parent=39 // pred_fallthru
          _
      $region40: #{fwd.1} parent=5 // pred_fallthru
        _
      %p333 = scmp.le.s32.totalorder 1, %s18
      %p334 = scmp.lt.s32.totalorder %s18, 5
      %p335 = pnand %p333, %p334
      %p336 = pneg %p335
      // Predicated region
      $region49: #{fwd.1} parent=5 // pred_check
        _
      $region50: #{fwd.1} parent=5 // pred_check_branch
        %338 = sbr.rel (%p335) target = $region52
      $region51: #{fwd.1} parent=5 // pred_region
        %s339 = ssub.s32 %s18, 1
        // Predicated region
        $region53: #{fwd.1} parent=51 // pred_check
          %p340 = pneg %p91
        $region54: #{fwd.1} parent=51 // pred_check_branch
          %342 = sbr.rel (%p340) target = $region56
        $region55: #{fwd.1} parent=51 // pred_region
          %344 = dma.done [#allocation4], 32768
        $region56: #{fwd.1} parent=51 // pred_fallthru
          _
        // Predicated region
        $region57: #{fwd.1} parent=51 // pred_check
          %p345 = pneg %p112
        $region58: #{fwd.1} parent=51 // pred_check_branch
          %347 = sbr.rel (%p345) target = $region60
        $region59: #{fwd.1} parent=51 // pred_region
          %349 = dma.done [#allocation6], 8192
        $region60: #{fwd.1} parent=51 // pred_fallthru
          _
        // Predicated region
        $region61: #{fwd.1} parent=51 // pred_check
          %p350 = pneg %p133
        $region62: #{fwd.1} parent=51 // pred_check_branch
          %352 = sbr.rel (%p350) target = $region64
        $region63: #{fwd.1} parent=51 // pred_region
          %354 = dma.done [#allocation6], 8192
        $region64: #{fwd.1} parent=51 // pred_fallthru
          _
        %p355 = scmp.lt.s32.totalorder %s23, 3
        %s356 = scalar_select %p355, %s23, 3
        %s357 = smul.addr %s356, 2
        %s358 = scalar_lea.vmem %s0, %s357
        %p359 = pneg %p44
        %p360 = pneg %p41
        %p361 = scmp.lt.s32.totalorder %s23, 3
        %s362 = scalar_select %p361, %s23, 3
        %s363 = smul.addr %s362, 2
        %s364 = smul.addr %s363, 8
        %s365 = scalar_lea.vmem %s1, %s364
        %p366 = pneg %p70
        %p367 = pneg %p67
        %p368 = pneg %p91
        %p369 = pneg %p88
        %p370 = pneg %p112
        %p371 = pneg %p109
        %p372 = pneg %p133
        %p373 = pneg %p130
        %p374 = pneg %p154
        %p375 = pneg %p151
        %p376 = pneg %p175
        %p377 = pneg %p172
        %p378 = pneg %p196
        %p379 = pneg %p193
        %p380 = pneg %p222
        %p381 = pneg %p219
        %p382 = scmp.lt.s32.totalorder %s23, 3
        %s383 = scalar_select %p382, %s23, 3
        %s384 = scalar_lea.vmem %s8, %s383
        %p385 = pneg %p248
        %p386 = pneg %p245
        %p387 = scmp.lt.s32.totalorder %s23, 3
        %s388 = scalar_select %p387, %s23, 3
        %s389 = smul.addr %s388, 2
        %s390 = scalar_lea.vmem %s9, %s389
        %p391 = scmp.lt.s32.totalorder %s23, 3
        %s392 = scalar_select %p391, %s23, 3
        %s393 = smul.addr %s392, 2
        %s394 = scalar_lea.vmem %s0, %s393
        %p395 = scmp.lt.s32.totalorder %s23, 3
        %s396 = scalar_select %p395, %s23, 3
        %s397 = smul.addr %s396, 2
        %s398 = smul.addr %s397, 8
        %s399 = scalar_lea.vmem %s1, %s398
        %p400 = scmp.lt.s32.totalorder %s23, 3
        %s401 = scalar_select %p400, %s23, 3
        %s402 = scalar_lea.vmem %s8, %s401
        %p403 = scmp.lt.s32.totalorder %s23, 3
        %s404 = scalar_select %p403, %s23, 3
        %s405 = smul.addr %s404, 2
        %s406 = scalar_lea.vmem %s9, %s405
        %v407 = vld [vmem:[%s394] sm:$0x3]
        %v408 = vmul.f32 %v407, %v407
        %v409 = vld [vmem:[#allocation7] sm:$0xff]
        %v410 = vld [vmem:[#allocation7 + $0x8] sm:$0xff]
        %v411 = vld [vmem:[#allocation7 + $0x10] sm:$0xff]
        %v412 = vld [vmem:[#allocation7 + $0x18] sm:$0xff]
        %v413 = vld [vmem:[#allocation7 + $0x20] sm:$0xff]
        %v414 = vld [vmem:[#allocation7 + $0x28] sm:$0xff]
        %v415 = vld [vmem:[#allocation7 + $0x30] sm:$0xff]
        %v416 = vld [vmem:[#allocation7 + $0x38] sm:$0xff]
        %v417 = vld [vmem:[#allocation7 + $0x40] sm:$0xff]
        %v418 = vld [vmem:[#allocation7 + $0x48] sm:$0xff]
        %v419 = vld [vmem:[#allocation7 + $0x50] sm:$0xff]
        %v420 = vld [vmem:[#allocation7 + $0x58] sm:$0xff]
        %v421 = vld [vmem:[#allocation7 + $0x60] sm:$0xff]
        %v422 = vld [vmem:[#allocation7 + $0x68] sm:$0xff]
        %v423 = vld [vmem:[#allocation7 + $0x70] sm:$0xff]
        %v424 = vld [vmem:[#allocation7 + $0x78] sm:$0xff]
        %v425 = vld [vmem:[#allocation7 + $0x80] sm:$0xff]
        %v426 = vld [vmem:[#allocation7 + $0x88] sm:$0xff]
        %v427 = vld [vmem:[#allocation7 + $0x90] sm:$0xff]
        %v428 = vld [vmem:[#allocation7 + $0x98] sm:$0xff]
        %v429 = vld [vmem:[#allocation7 + $0xa0] sm:$0xff]
        %v430 = vld [vmem:[#allocation7 + $0xa8] sm:$0xff]
        %v431 = vld [vmem:[#allocation7 + $0xb0] sm:$0xff]
        %v432 = vld [vmem:[#allocation7 + $0xb8] sm:$0xff]
        %v433 = vld [vmem:[#allocation7 + $0xc0] sm:$0xff]
        %v434 = vld [vmem:[#allocation7 + $0xc8] sm:$0xff]
        %v435 = vld [vmem:[#allocation7 + $0xd0] sm:$0xff]
        %v436 = vld [vmem:[#allocation7 + $0xd8] sm:$0xff]
        %v437 = vld [vmem:[#allocation7 + $0xe0] sm:$0xff]
        %v438 = vld [vmem:[#allocation7 + $0xe8] sm:$0xff]
        %v439 = vld [vmem:[#allocation7 + $0xf0] sm:$0xff]
        %v440 = vld [vmem:[#allocation7 + $0xf8] sm:$0xff]
        %v441 = vld [vmem:[#allocation7 + $0x100] sm:$0xff]
        %v442 = vld [vmem:[#allocation7 + $0x108] sm:$0xff]
        %v443 = vld [vmem:[#allocation7 + $0x110] sm:$0xff]
        %v444 = vld [vmem:[#allocation7 + $0x118] sm:$0xff]
        %v445 = vld [vmem:[#allocation7 + $0x120] sm:$0xff]
        %v446 = vld [vmem:[#allocation7 + $0x128] sm:$0xff]
        %v447 = vld [vmem:[#allocation7 + $0x130] sm:$0xff]
        %v448 = vld [vmem:[#allocation7 + $0x138] sm:$0xff]
        %v449 = vld [vmem:[#allocation7 + $0x140] sm:$0xff]
        %v450 = vld [vmem:[#allocation7 + $0x148] sm:$0xff]
        %v451 = vld [vmem:[#allocation7 + $0x150] sm:$0xff]
        %v452 = vld [vmem:[#allocation7 + $0x158] sm:$0xff]
        %v453 = vld [vmem:[#allocation7 + $0x160] sm:$0xff]
        %v454 = vld [vmem:[#allocation7 + $0x168] sm:$0xff]
        %v455 = vld [vmem:[#allocation7 + $0x170] sm:$0xff]
        %v456 = vld [vmem:[#allocation7 + $0x178] sm:$0xff]
        %v457 = vld [vmem:[#allocation7 + $0x180] sm:$0xff]
        %v458 = vld [vmem:[#allocation7 + $0x188] sm:$0xff]
        %v459 = vld [vmem:[#allocation7 + $0x190] sm:$0xff]
        %v460 = vld [vmem:[#allocation7 + $0x198] sm:$0xff]
        %v461 = vld [vmem:[#allocation7 + $0x1a0] sm:$0xff]
        %v462 = vld [vmem:[#allocation7 + $0x1a8] sm:$0xff]
        %v463 = vld [vmem:[#allocation7 + $0x1b0] sm:$0xff]
        %v464 = vld [vmem:[#allocation7 + $0x1b8] sm:$0xff]
        %v465 = vld [vmem:[#allocation7 + $0x1c0] sm:$0xff]
        %v466 = vld [vmem:[#allocation7 + $0x1c8] sm:$0xff]
        %v467 = vld [vmem:[#allocation7 + $0x1d0] sm:$0xff]
        %v468 = vld [vmem:[#allocation7 + $0x1d8] sm:$0xff]
        %v469 = vld [vmem:[#allocation7 + $0x1e0] sm:$0xff]
        %v470 = vld [vmem:[#allocation7 + $0x1e8] sm:$0xff]
        %v471 = vld [vmem:[#allocation7 + $0x1f0] sm:$0xff]
        %v472 = vld [vmem:[#allocation7 + $0x1f8] sm:$0xff]
        %v474 = vperm.slane %v408, 0
        %v475 = vperm.slane %v408, 1
        %478 = vmatpush.msra.mxu0 %v439
        %479 = vmatpush.msra.mxu0 %v437
        %480 = vmatpush.msra.mxu0 %v435
        %481 = vmatpush.msra.mxu0 %v433
        %482 = vmatpush.msra.mxu0 %v431
        %483 = vmatpush.msra.mxu0 %v429
        %484 = vmatpush.msra.mxu0 %v427
        %485 = vmatpush.msra.mxu0 %v425
        %486 = vmatpush.msra.mxu0 %v423
        %487 = vmatpush.msra.mxu0 %v421
        %488 = vmatpush.msra.mxu0 %v419
        %489 = vmatpush.msra.mxu0 %v417
        %490 = vmatpush.msra.mxu0 %v415
        %491 = vmatpush.msra.mxu0 %v413
        %492 = vmatpush.msra.mxu0 %v411
        %493 = vmatpush.msra.mxu0 %v409
        %494 = vmatmul.f32.gmra.mxu0 %v474
        %v495 = vpop.f32.mrf.mxu0
        %v496 = vadd.f32 0.0, %v495
        %497 = vdwg.mxu0
        %498 = vmatpush.msra.mxu0 %v471
        %499 = vmatpush.msra.mxu0 %v469
        %500 = vmatpush.msra.mxu0 %v467
        %501 = vmatpush.msra.mxu0 %v465
        %502 = vmatpush.msra.mxu0 %v463
        %503 = vmatpush.msra.mxu0 %v461
        %504 = vmatpush.msra.mxu0 %v459
        %505 = vmatpush.msra.mxu0 %v457
        %506 = vmatpush.msra.mxu0 %v455
        %507 = vmatpush.msra.mxu0 %v453
        %508 = vmatpush.msra.mxu0 %v451
        %509 = vmatpush.msra.mxu0 %v449
        %510 = vmatpush.msra.mxu0 %v447
        %511 = vmatpush.msra.mxu0 %v445
        %512 = vmatpush.msra.mxu0 %v443
        %513 = vmatpush.msra.mxu0 %v441
        %514 = vmatmul.f32.gmra.mxu0 %v475
        %v515 = vpop.f32.mrf.mxu0
        %v516 = vadd.f32 %v496, %v515
        %517 = vdwg.mxu0
        %518 = vmatpush.msra.mxu0 %v440
        %519 = vmatpush.msra.mxu0 %v438
        %520 = vmatpush.msra.mxu0 %v436
        %521 = vmatpush.msra.mxu0 %v434
        %522 = vmatpush.msra.mxu0 %v432
        %523 = vmatpush.msra.mxu0 %v430
        %524 = vmatpush.msra.mxu0 %v428
        %525 = vmatpush.msra.mxu0 %v426
        %526 = vmatpush.msra.mxu0 %v424
        %527 = vmatpush.msra.mxu0 %v422
        %528 = vmatpush.msra.mxu0 %v420
        %529 = vmatpush.msra.mxu0 %v418
        %530 = vmatpush.msra.mxu0 %v416
        %531 = vmatpush.msra.mxu0 %v414
        %532 = vmatpush.msra.mxu0 %v412
        %533 = vmatpush.msra.mxu0 %v410
        %534 = vmatmul.f32.gmra.mxu0 %v474
        %v535 = vpop.f32.mrf.mxu0
        %v536 = vadd.f32 0.0, %v535
        %537 = vdwg.mxu0
        %538 = vmatpush.msra.mxu0 %v472
        %539 = vmatpush.msra.mxu0 %v470
        %540 = vmatpush.msra.mxu0 %v468
        %541 = vmatpush.msra.mxu0 %v466
        %542 = vmatpush.msra.mxu0 %v464
        %543 = vmatpush.msra.mxu0 %v462
        %544 = vmatpush.msra.mxu0 %v460
        %545 = vmatpush.msra.mxu0 %v458
        %546 = vmatpush.msra.mxu0 %v456
        %547 = vmatpush.msra.mxu0 %v454
        %548 = vmatpush.msra.mxu0 %v452
        %549 = vmatpush.msra.mxu0 %v450
        %550 = vmatpush.msra.mxu0 %v448
        %551 = vmatpush.msra.mxu0 %v446
        %552 = vmatpush.msra.mxu0 %v444
        %553 = vmatpush.msra.mxu0 %v442
        %554 = vmatmul.f32.gmra.mxu0 %v475
        %v555 = vpop.f32.mrf.mxu0
        %v556 = vadd.f32 %v536, %v555
        %557 = vdwg.mxu0
        %v558 = vrsqrt.pop %v516
        %v559 = vmul.f32 %v558, %v516
        %v560 = vmul.f32 %v559, %v558
        %v561 = vmul.f32 0.5, %v560
        %v562 = vsub.f32 1.5, %v561
        %v563 = vmul.f32 %v558, %v562
        %v564 = vmul.f32 %v516, %v563
        %vm565 = vcmp.eq.f32.partialorder %v516, inf
        %v566 = vsel %vm565, %v516, %v564
        %vm567 = vcmp.eq.f32.partialorder %v516, 0.0
        %v568 = vand.u32 %v516, 2147483648
        %v569 = vsel %vm567, %v568, %v566
        %v570 = vrsqrt.pop %v556
        %v571 = vmul.f32 %v570, %v556
        %v572 = vmul.f32 %v571, %v570
        %v573 = vmul.f32 0.5, %v572
        %v574 = vsub.f32 1.5, %v573
        %v575 = vmul.f32 %v570, %v574
        %v576 = vmul.f32 %v556, %v575
        %vm577 = vcmp.eq.f32.partialorder %v556, inf
        %v578 = vsel %vm577, %v556, %v576
        %vm579 = vcmp.eq.f32.partialorder %v556, 0.0
        %v580 = vand.u32 %v556, 2147483648
        %v581 = vsel %vm579, %v580, %v578
        %v582 = vmax.f32 %v569, 1e-15
        %v583 = vmax.f32 %v581, 1e-15
        %vm584 = vcmp.gt.f32.partialorder %v582, 0.996
        %vm585 = vcmp.gt.f32.partialorder %v583, 0.996
        %v586 = vrcp.pop %v582
        %v587 = vrcp.pop %v583
        %v588 = vmul.f32 %v586, 0.996
        %v589 = vmul.f32 %v587, 0.996
        %v590 = vsel %vm584, %v588, 1.0
        %v591 = vsel %vm585, %v589, 1.0
        %v594 = vrot.slane %v591, 7
        %vm595 = vcmask 1040384
        %v596 = vsel %vm595, %v590, %v594
        %v598 = vmul.f32 %v407, %v596
        %v599 = vmul.f32 %v598, %v598
        %v601 = vperm.slane %v599, 0
        %v602 = vperm.slane %v599, 1
        %v605 = vsel %vm595, %v601, 0.0
        %v606 = vsel %vm595, %v602, 0.0
        %v607 = vadd.f32 %v605, %v606
        %608 = vadd.xlane.f32.xlu0 %v607
        %v609 = vpop.xlane.xlu0 %608
        %v610 = vrsqrt.pop %v609
        %v611 = vmul.f32 %v610, %v609
        %v612 = vmul.f32 %v611, %v610
        %v613 = vmul.f32 0.5, %v612
        %v614 = vsub.f32 1.5, %v613
        %v615 = vmul.f32 %v610, %v614
        %v616 = vmul.f32 %v609, %v615
        %vm617 = vcmp.eq.f32.partialorder %v609, inf
        %v618 = vsel %vm617, %v609, %v616
        %vm619 = vcmp.eq.f32.partialorder %v609, 0.0
        %v620 = vand.u32 %v609, 2147483648
        %v621 = vsel %vm619, %v620, %v618
        %v622 = vmax.f32 %v621, 1e-15
        %v624 = vperm.slane %v598, 0
        %v625 = vperm.slane %v598, 1
        %v628 = vpack.c.bf16 %v624, %v624
        %v629 = vpack.c.bf16 %v625, %v625
        %v630 = vld [vmem:[#allocation3] sm:$0xff]
        %v631 = vld [vmem:[#allocation3 + $0x40] sm:$0xff]
        %v632 = vld [vmem:[#allocation3 + $0x80] sm:$0xff]
        %v633 = vld [vmem:[#allocation3 + $0xc0] sm:$0xff]
        %v634 = vld [vmem:[#allocation3 + $0x100] sm:$0xff]
        %v635 = vld [vmem:[#allocation3 + $0x140] sm:$0xff]
        %v636 = vld [vmem:[#allocation3 + $0x180] sm:$0xff]
        %v637 = vld [vmem:[#allocation3 + $0x1c0] sm:$0xff]
        %v638 = vld [vmem:[#allocation3 + $0x200] sm:$0xff]
        %v639 = vld [vmem:[#allocation3 + $0x240] sm:$0xff]
        %v640 = vld [vmem:[#allocation3 + $0x280] sm:$0xff]
        %v641 = vld [vmem:[#allocation3 + $0x2c0] sm:$0xff]
        %v642 = vld [vmem:[#allocation3 + $0x300] sm:$0xff]
        %v643 = vld [vmem:[#allocation3 + $0x340] sm:$0xff]
        %v644 = vld [vmem:[#allocation3 + $0x380] sm:$0xff]
        %v645 = vld [vmem:[#allocation3 + $0x3c0] sm:$0xff]
        %v646 = vld [vmem:[#allocation3 + $0x400] sm:$0xff]
        %v647 = vld [vmem:[#allocation3 + $0x440] sm:$0xff]
        %v648 = vld [vmem:[#allocation3 + $0x480] sm:$0xff]
        %v649 = vld [vmem:[#allocation3 + $0x4c0] sm:$0xff]
        %v650 = vld [vmem:[#allocation3 + $0x500] sm:$0xff]
        %v651 = vld [vmem:[#allocation3 + $0x540] sm:$0xff]
        %v652 = vld [vmem:[#allocation3 + $0x580] sm:$0xff]
        %v653 = vld [vmem:[#allocation3 + $0x5c0] sm:$0xff]
        %v654 = vld [vmem:[#allocation3 + $0x600] sm:$0xff]
        %v655 = vld [vmem:[#allocation3 + $0x640] sm:$0xff]
        %v656 = vld [vmem:[#allocation3 + $0x680] sm:$0xff]
        %v657 = vld [vmem:[#allocation3 + $0x6c0] sm:$0xff]
        %v658 = vld [vmem:[#allocation3 + $0x700] sm:$0xff]
        %v659 = vld [vmem:[#allocation3 + $0x740] sm:$0xff]
        %v660 = vld [vmem:[#allocation3 + $0x780] sm:$0xff]
        %v661 = vld [vmem:[#allocation3 + $0x7c0] sm:$0xff]
        %v694 = vunpack.c.l.b16 %v630
        %v695 = vunpack.c.h.b16 %v630
        %v696 = vunpack.c.l.b16 %v631
        %v697 = vunpack.c.h.b16 %v631
        %v698 = vunpack.c.l.b16 %v632
        %v699 = vunpack.c.h.b16 %v632
        %v700 = vunpack.c.l.b16 %v633
        %v701 = vunpack.c.h.b16 %v633
        %v702 = vunpack.c.l.b16 %v634
        %v703 = vunpack.c.h.b16 %v634
        %v704 = vunpack.c.l.b16 %v635
        %v705 = vunpack.c.h.b16 %v635
        %v706 = vunpack.c.l.b16 %v636
        %v707 = vunpack.c.h.b16 %v636
        %v708 = vunpack.c.l.b16 %v637
        %v709 = vunpack.c.h.b16 %v637
        %v710 = vunpack.c.l.b16 %v638
        %v711 = vunpack.c.h.b16 %v638
        %v712 = vunpack.c.l.b16 %v639
        %v713 = vunpack.c.h.b16 %v639
        %v714 = vunpack.c.l.b16 %v640
        %v715 = vunpack.c.h.b16 %v640
        %v716 = vunpack.c.l.b16 %v641
        %v717 = vunpack.c.h.b16 %v641
        %v718 = vunpack.c.l.b16 %v642
        %v719 = vunpack.c.h.b16 %v642
        %v720 = vunpack.c.l.b16 %v643
        %v721 = vunpack.c.h.b16 %v643
        %v722 = vunpack.c.l.b16 %v644
        %v723 = vunpack.c.h.b16 %v644
        %v724 = vunpack.c.l.b16 %v645
        %v725 = vunpack.c.h.b16 %v645
        %v726 = vunpack.c.l.b16 %v646
        %v727 = vunpack.c.h.b16 %v646
        %v728 = vunpack.c.l.b16 %v647
        %v729 = vunpack.c.h.b16 %v647
        %v730 = vunpack.c.l.b16 %v648
        %v731 = vunpack.c.h.b16 %v648
        %v732 = vunpack.c.l.b16 %v649
        %v733 = vunpack.c.h.b16 %v649
        %v734 = vunpack.c.l.b16 %v650
        %v735 = vunpack.c.h.b16 %v650
        %v736 = vunpack.c.l.b16 %v651
        %v737 = vunpack.c.h.b16 %v651
        %v738 = vunpack.c.l.b16 %v652
        %v739 = vunpack.c.h.b16 %v652
        %v740 = vunpack.c.l.b16 %v653
        %v741 = vunpack.c.h.b16 %v653
        %v742 = vunpack.c.l.b16 %v654
        %v743 = vunpack.c.h.b16 %v654
        %v744 = vunpack.c.l.b16 %v655
        %v745 = vunpack.c.h.b16 %v655
        %v746 = vunpack.c.l.b16 %v656
        %v747 = vunpack.c.h.b16 %v656
        %v748 = vunpack.c.l.b16 %v657
        %v749 = vunpack.c.h.b16 %v657
        %v750 = vunpack.c.l.b16 %v658
        %v751 = vunpack.c.h.b16 %v658
        %v752 = vunpack.c.l.b16 %v659
        %v753 = vunpack.c.h.b16 %v659
        %v754 = vunpack.c.l.b16 %v660
        %v755 = vunpack.c.h.b16 %v660
        %v756 = vunpack.c.l.b16 %v661
        %v757 = vunpack.c.h.b16 %v661
        %v758 = vpack.c.b16 %v696, %v694
        %v759 = vpack.c.b16 %v697, %v695
        %v760 = vpack.c.b16 %v700, %v698
        %v761 = vpack.c.b16 %v701, %v699
        %v762 = vpack.c.b16 %v704, %v702
        %v763 = vpack.c.b16 %v705, %v703
        %v764 = vpack.c.b16 %v708, %v706
        %v765 = vpack.c.b16 %v709, %v707
        %v766 = vpack.c.b16 %v712, %v710
        %v767 = vpack.c.b16 %v713, %v711
        %v768 = vpack.c.b16 %v716, %v714
        %v769 = vpack.c.b16 %v717, %v715
        %v770 = vpack.c.b16 %v720, %v718
        %v771 = vpack.c.b16 %v721, %v719
        %v772 = vpack.c.b16 %v724, %v722
        %v773 = vpack.c.b16 %v725, %v723
        %v774 = vpack.c.b16 %v728, %v726
        %v775 = vpack.c.b16 %v729, %v727
        %v776 = vpack.c.b16 %v732, %v730
        %v777 = vpack.c.b16 %v733, %v731
        %v778 = vpack.c.b16 %v736, %v734
        %v779 = vpack.c.b16 %v737, %v735
        %v780 = vpack.c.b16 %v740, %v738
        %v781 = vpack.c.b16 %v741, %v739
        %v782 = vpack.c.b16 %v744, %v742
        %v783 = vpack.c.b16 %v745, %v743
        %v784 = vpack.c.b16 %v748, %v746
        %v785 = vpack.c.b16 %v749, %v747
        %v786 = vpack.c.b16 %v752, %v750
        %v787 = vpack.c.b16 %v753, %v751
        %v788 = vpack.c.b16 %v756, %v754
        %v789 = vpack.c.b16 %v757, %v755
        %822 = vmatpush.bf16.msra.mxu0 %v772
        %823 = vmatpush.bf16.msra.mxu0 %v770
        %824 = vmatpush.bf16.msra.mxu0 %v768
        %825 = vmatpush.bf16.msra.mxu0 %v766
        %826 = vmatpush.bf16.msra.mxu0 %v764
        %827 = vmatpush.bf16.msra.mxu0 %v762
        %828 = vmatpush.bf16.msra.mxu0 %v760
        %829 = vmatpush.bf16.msra.mxu0 %v758
        %830 = vmatmul.bf16.gmra.mxu0 %v628
        %v831 = vpop.f32.mrf.mxu0
        %v832 = vadd.f32 0.0, %v831
        %v833 = vpop.f32.mrf.mxu0
        %834 = vdwg.mxu0
        %835 = vmatpush.bf16.msra.mxu0 %v788
        %836 = vmatpush.bf16.msra.mxu0 %v786
        %837 = vmatpush.bf16.msra.mxu0 %v784
        %838 = vmatpush.bf16.msra.mxu0 %v782
        %839 = vmatpush.bf16.msra.mxu0 %v780
        %840 = vmatpush.bf16.msra.mxu0 %v778
        %841 = vmatpush.bf16.msra.mxu0 %v776
        %842 = vmatpush.bf16.msra.mxu0 %v774
        %843 = vmatmul.bf16.gmra.mxu0 %v629
        %v844 = vpop.f32.mrf.mxu0
        %v845 = vadd.f32 %v832, %v844
        %v846 = vpop.f32.mrf.mxu0
        %847 = vdwg.mxu0
        %848 = vmatpush.bf16.msra.mxu0 %v773
        %849 = vmatpush.bf16.msra.mxu0 %v771
        %850 = vmatpush.bf16.msra.mxu0 %v769
        %851 = vmatpush.bf16.msra.mxu0 %v767
        %852 = vmatpush.bf16.msra.mxu0 %v765
        %853 = vmatpush.bf16.msra.mxu0 %v763
        %854 = vmatpush.bf16.msra.mxu0 %v761
        %855 = vmatpush.bf16.msra.mxu0 %v759
        %856 = vmatmul.bf16.gmra.mxu0 %v628
        %v857 = vpop.f32.mrf.mxu0
        %v858 = vadd.f32 0.0, %v857
        %v859 = vpop.f32.mrf.mxu0
        %860 = vdwg.mxu0
        %861 = vmatpush.bf16.msra.mxu0 %v789
        %862 = vmatpush.bf16.msra.mxu0 %v787
        %863 = vmatpush.bf16.msra.mxu0 %v785
        %864 = vmatpush.bf16.msra.mxu0 %v783
        %865 = vmatpush.bf16.msra.mxu0 %v781
        %866 = vmatpush.bf16.msra.mxu0 %v779
        %867 = vmatpush.bf16.msra.mxu0 %v777
        %868 = vmatpush.bf16.msra.mxu0 %v775
        %869 = vmatmul.bf16.gmra.mxu0 %v629
        %v870 = vpop.f32.mrf.mxu0
        %v871 = vadd.f32 %v858, %v870
        %v872 = vpop.f32.mrf.mxu0
        %873 = vdwg.mxu0
        %v876 = vrot.slane %v871, 7
        %v877 = vsel %vm595, %v845, %v876
        %v879 = vlaneseq
        %vm880 = vcmp.ge.s32.totalorder %v879, 0
        %vm881 = vcmp.lt.s32.totalorder %v879, 256
        %vm882 = vmand %vm880, %vm881
        %883 = vst.msk [vmem:[#allocation2] ss:$8 sm:$0x3] %vm882, %v877
        %884 = vst.msk [vmem:[#allocation2] ss:$8 sm:$0x0] %vm882, %v877
        %v885 = vmul.f32 %v845, %v845
        %v886 = vmul.f32 %v871, %v871
        %v887 = vsel %vm595, %v885, 0.0
        %v888 = vsel %vm595, %v886, 0.0
        %v889 = vadd.f32 %v887, %v888
        %890 = vadd.xlane.f32.xlu0 %v889
        %v891 = vpop.xlane.xlu0 %890
        %v892 = vadd.f32 %v891, 0.0
        %v893 = vand.u32 2147483647, %v845
        %v894 = vand.u32 2147483647, %v871
        %v895 = vsel %vm595, %v893, 0.0
        %v896 = vsel %vm595, %v894, 0.0
        %v897 = vadd.f32 %v895, %v896
        %898 = vadd.xlane.f32.xlu0 %v897
        %v899 = vpop.xlane.xlu0 %898
        %v900 = vadd.f32 %v899, 0.0
        %v901 = vld [vmem:[#allocation3 + $0x8] sm:$0xff]
        %v902 = vld [vmem:[#allocation3 + $0x48] sm:$0xff]
        %v903 = vld [vmem:[#allocation3 + $0x88] sm:$0xff]
        %v904 = vld [vmem:[#allocation3 + $0xc8] sm:$0xff]
        %v905 = vld [vmem:[#allocation3 + $0x108] sm:$0xff]
        %v906 = vld [vmem:[#allocation3 + $0x148] sm:$0xff]
        %v907 = vld [vmem:[#allocation3 + $0x188] sm:$0xff]
        %v908 = vld [vmem:[#allocation3 + $0x1c8] sm:$0xff]
        %v909 = vld [vmem:[#allocation3 + $0x208] sm:$0xff]
        %v910 = vld [vmem:[#allocation3 + $0x248] sm:$0xff]
        %v911 = vld [vmem:[#allocation3 + $0x288] sm:$0xff]
        %v912 = vld [vmem:[#allocation3 + $0x2c8] sm:$0xff]
        %v913 = vld [vmem:[#allocation3 + $0x308] sm:$0xff]
        %v914 = vld [vmem:[#allocation3 + $0x348] sm:$0xff]
        %v915 = vld [vmem:[#allocation3 + $0x388] sm:$0xff]
        %v916 = vld [vmem:[#allocation3 + $0x3c8] sm:$0xff]
        %v917 = vld [vmem:[#allocation3 + $0x408] sm:$0xff]
        %v918 = vld [vmem:[#allocation3 + $0x448] sm:$0xff]
        %v919 = vld [vmem:[#allocation3 + $0x488] sm:$0xff]
        %v920 = vld [vmem:[#allocation3 + $0x4c8] sm:$0xff]
        %v921 = vld [vmem:[#allocation3 + $0x508] sm:$0xff]
        %v922 = vld [vmem:[#allocation3 + $0x548] sm:$0xff]
        %v923 = vld [vmem:[#allocation3 + $0x588] sm:$0xff]
        %v924 = vld [vmem:[#allocation3 + $0x5c8] sm:$0xff]
        %v925 = vld [vmem:[#allocation3 + $0x608] sm:$0xff]
        %v926 = vld [vmem:[#allocation3 + $0x648] sm:$0xff]
        %v927 = vld [vmem:[#allocation3 + $0x688] sm:$0xff]
        %v928 = vld [vmem:[#allocation3 + $0x6c8] sm:$0xff]
        %v929 = vld [vmem:[#allocation3 + $0x708] sm:$0xff]
        %v930 = vld [vmem:[#allocation3 + $0x748] sm:$0xff]
        %v931 = vld [vmem:[#allocation3 + $0x788] sm:$0xff]
        %v932 = vld [vmem:[#allocation3 + $0x7c8] sm:$0xff]
        %v965 = vunpack.c.l.b16 %v901
        %v966 = vunpack.c.h.b16 %v901
        %v967 = vunpack.c.l.b16 %v902
        %v968 = vunpack.c.h.b16 %v902
        %v969 = vunpack.c.l.b16 %v903
        %v970 = vunpack.c.h.b16 %v903
        %v971 = vunpack.c.l.b16 %v904
        %v972 = vunpack.c.h.b16 %v904
        %v973 = vunpack.c.l.b16 %v905
        %v974 = vunpack.c.h.b16 %v905
        %v975 = vunpack.c.l.b16 %v906
        %v976 = vunpack.c.h.b16 %v906
        %v977 = vunpack.c.l.b16 %v907
        %v978 = vunpack.c.h.b16 %v907
        %v979 = vunpack.c.l.b16 %v908
        %v980 = vunpack.c.h.b16 %v908
        %v981 = vunpack.c.l.b16 %v909
        %v982 = vunpack.c.h.b16 %v909
        %v983 = vunpack.c.l.b16 %v910
        %v984 = vunpack.c.h.b16 %v910
        %v985 = vunpack.c.l.b16 %v911
        %v986 = vunpack.c.h.b16 %v911
        %v987 = vunpack.c.l.b16 %v912
        %v988 = vunpack.c.h.b16 %v912
        %v989 = vunpack.c.l.b16 %v913
        %v990 = vunpack.c.h.b16 %v913
        %v991 = vunpack.c.l.b16 %v914
        %v992 = vunpack.c.h.b16 %v914
        %v993 = vunpack.c.l.b16 %v915
        %v994 = vunpack.c.h.b16 %v915
        %v995 = vunpack.c.l.b16 %v916
        %v996 = vunpack.c.h.b16 %v916
        %v997 = vunpack.c.l.b16 %v917
        %v998 = vunpack.c.h.b16 %v917
        %v999 = vunpack.c.l.b16 %v918
        %v1000 = vunpack.c.h.b16 %v918
        %v1001 = vunpack.c.l.b16 %v919
        %v1002 = vunpack.c.h.b16 %v919
        %v1003 = vunpack.c.l.b16 %v920
        %v1004 = vunpack.c.h.b16 %v920
        %v1005 = vunpack.c.l.b16 %v921
        %v1006 = vunpack.c.h.b16 %v921
        %v1007 = vunpack.c.l.b16 %v922
        %v1008 = vunpack.c.h.b16 %v922
        %v1009 = vunpack.c.l.b16 %v923
        %v1010 = vunpack.c.h.b16 %v923
        %v1011 = vunpack.c.l.b16 %v924
        %v1012 = vunpack.c.h.b16 %v924
        %v1013 = vunpack.c.l.b16 %v925
        %v1014 = vunpack.c.h.b16 %v925
        %v1015 = vunpack.c.l.b16 %v926
        %v1016 = vunpack.c.h.b16 %v926
        %v1017 = vunpack.c.l.b16 %v927
        %v1018 = vunpack.c.h.b16 %v927
        %v1019 = vunpack.c.l.b16 %v928
        %v1020 = vunpack.c.h.b16 %v928
        %v1021 = vunpack.c.l.b16 %v929
        %v1022 = vunpack.c.h.b16 %v929
        %v1023 = vunpack.c.l.b16 %v930
        %v1024 = vunpack.c.h.b16 %v930
        %v1025 = vunpack.c.l.b16 %v931
        %v1026 = vunpack.c.h.b16 %v931
        %v1027 = vunpack.c.l.b16 %v932
        %v1028 = vunpack.c.h.b16 %v932
        %v1029 = vpack.c.b16 %v967, %v965
        %v1030 = vpack.c.b16 %v968, %v966
        %v1031 = vpack.c.b16 %v971, %v969
        %v1032 = vpack.c.b16 %v972, %v970
        %v1033 = vpack.c.b16 %v975, %v973
        %v1034 = vpack.c.b16 %v976, %v974
        %v1035 = vpack.c.b16 %v979, %v977
        %v1036 = vpack.c.b16 %v980, %v978
        %v1037 = vpack.c.b16 %v983, %v981
        %v1038 = vpack.c.b16 %v984, %v982
        %v1039 = vpack.c.b16 %v987, %v985
        %v1040 = vpack.c.b16 %v988, %v986
        %v1041 = vpack.c.b16 %v991, %v989
        %v1042 = vpack.c.b16 %v992, %v990
        %v1043 = vpack.c.b16 %v995, %v993
        %v1044 = vpack.c.b16 %v996, %v994
        %v1045 = vpack.c.b16 %v999, %v997
        %v1046 = vpack.c.b16 %v1000, %v998
        %v1047 = vpack.c.b16 %v1003, %v1001
        %v1048 = vpack.c.b16 %v1004, %v1002
        %v1049 = vpack.c.b16 %v1007, %v1005
        %v1050 = vpack.c.b16 %v1008, %v1006
        %v1051 = vpack.c.b16 %v1011, %v1009
        %v1052 = vpack.c.b16 %v1012, %v1010
        %v1053 = vpack.c.b16 %v1015, %v1013
        %v1054 = vpack.c.b16 %v1016, %v1014
        %v1055 = vpack.c.b16 %v1019, %v1017
        %v1056 = vpack.c.b16 %v1020, %v1018
        %v1057 = vpack.c.b16 %v1023, %v1021
        %v1058 = vpack.c.b16 %v1024, %v1022
        %v1059 = vpack.c.b16 %v1027, %v1025
        %v1060 = vpack.c.b16 %v1028, %v1026
        %1093 = vmatpush.bf16.msra.mxu0 %v1043
        %1094 = vmatpush.bf16.msra.mxu0 %v1041
        %1095 = vmatpush.bf16.msra.mxu0 %v1039
        %1096 = vmatpush.bf16.msra.mxu0 %v1037
        %1097 = vmatpush.bf16.msra.mxu0 %v1035
        %1098 = vmatpush.bf16.msra.mxu0 %v1033
        %1099 = vmatpush.bf16.msra.mxu0 %v1031
        %1100 = vmatpush.bf16.msra.mxu0 %v1029
        %1101 = vmatmul.bf16.gmra.mxu0 %v628
        %v1102 = vpop.f32.mrf.mxu0
        %v1103 = vadd.f32 0.0, %v1102
        %v1104 = vpop.f32.mrf.mxu0
        %1105 = vdwg.mxu0
        %1106 = vmatpush.bf16.msra.mxu0 %v1059
        %1107 = vmatpush.bf16.msra.mxu0 %v1057
        %1108 = vmatpush.bf16.msra.mxu0 %v1055
        %1109 = vmatpush.bf16.msra.mxu0 %v1053
        %1110 = vmatpush.bf16.msra.mxu0 %v1051
        %1111 = vmatpush.bf16.msra.mxu0 %v1049
        %1112 = vmatpush.bf16.msra.mxu0 %v1047
        %1113 = vmatpush.bf16.msra.mxu0 %v1045
        %1114 = vmatmul.bf16.gmra.mxu0 %v629
        %v1115 = vpop.f32.mrf.mxu0
        %v1116 = vadd.f32 %v1103, %v1115
        %v1117 = vpop.f32.mrf.mxu0
        %1118 = vdwg.mxu0
        %1119 = vmatpush.bf16.msra.mxu0 %v1044
        %1120 = vmatpush.bf16.msra.mxu0 %v1042
        %1121 = vmatpush.bf16.msra.mxu0 %v1040
        %1122 = vmatpush.bf16.msra.mxu0 %v1038
        %1123 = vmatpush.bf16.msra.mxu0 %v1036
        %1124 = vmatpush.bf16.msra.mxu0 %v1034
        %1125 = vmatpush.bf16.msra.mxu0 %v1032
        %1126 = vmatpush.bf16.msra.mxu0 %v1030
        %1127 = vmatmul.bf16.gmra.mxu0 %v628
        %v1128 = vpop.f32.mrf.mxu0
        %v1129 = vadd.f32 0.0, %v1128
        %v1130 = vpop.f32.mrf.mxu0
        %1131 = vdwg.mxu0
        %1132 = vmatpush.bf16.msra.mxu0 %v1060
        %1133 = vmatpush.bf16.msra.mxu0 %v1058
        %1134 = vmatpush.bf16.msra.mxu0 %v1056
        %1135 = vmatpush.bf16.msra.mxu0 %v1054
        %1136 = vmatpush.bf16.msra.mxu0 %v1052
        %1137 = vmatpush.bf16.msra.mxu0 %v1050
        %1138 = vmatpush.bf16.msra.mxu0 %v1048
        %1139 = vmatpush.bf16.msra.mxu0 %v1046
        %1140 = vmatmul.bf16.gmra.mxu0 %v629
        %v1141 = vpop.f32.mrf.mxu0
        %v1142 = vadd.f32 %v1129, %v1141
        %v1143 = vpop.f32.mrf.mxu0
        %1144 = vdwg.mxu0
        %v1147 = vrot.slane %v1142, 7
        %v1148 = vsel %vm595, %v1116, %v1147
        %s1150 = scalar_lea.vmem [#allocation2], 1
        %1151 = vst.msk [vmem:[%s1150] ss:$8 sm:$0x3] %vm882, %v1148
        %1152 = vst.msk [vmem:[%s1150] ss:$8 sm:$0x0] %vm882, %v1148
        %v1153 = vmul.f32 %v1116, %v1116
        %v1154 = vmul.f32 %v1142, %v1142
        %v1155 = vsel %vm595, %v1153, 0.0
        %v1156 = vsel %vm595, %v1154, 0.0
        %v1157 = vadd.f32 %v1155, %v1156
        %1158 = vadd.xlane.f32.xlu0 %v1157
        %v1159 = vpop.xlane.xlu0 %1158
        %v1160 = vadd.f32 %v892, %v1159
        %v1161 = vand.u32 2147483647, %v1116
        %v1162 = vand.u32 2147483647, %v1142
        %v1163 = vsel %vm595, %v1161, 0.0
        %v1164 = vsel %vm595, %v1162, 0.0
        %v1165 = vadd.f32 %v1163, %v1164
        %1166 = vadd.xlane.f32.xlu0 %v1165
        %v1167 = vpop.xlane.xlu0 %1166
        %v1168 = vadd.f32 %v900, %v1167
        %v1169 = vld [vmem:[#allocation3 + $0x10] sm:$0xff]
        %v1170 = vld [vmem:[#allocation3 + $0x50] sm:$0xff]
        %v1171 = vld [vmem:[#allocation3 + $0x90] sm:$0xff]
        %v1172 = vld [vmem:[#allocation3 + $0xd0] sm:$0xff]
        %v1173 = vld [vmem:[#allocation3 + $0x110] sm:$0xff]
        %v1174 = vld [vmem:[#allocation3 + $0x150] sm:$0xff]
        %v1175 = vld [vmem:[#allocation3 + $0x190] sm:$0xff]
        %v1176 = vld [vmem:[#allocation3 + $0x1d0] sm:$0xff]
        %v1177 = vld [vmem:[#allocation3 + $0x210] sm:$0xff]
        %v1178 = vld [vmem:[#allocation3 + $0x250] sm:$0xff]
        %v1179 = vld [vmem:[#allocation3 + $0x290] sm:$0xff]
        %v1180 = vld [vmem:[#allocation3 + $0x2d0] sm:$0xff]
        %v1181 = vld [vmem:[#allocation3 + $0x310] sm:$0xff]
        %v1182 = vld [vmem:[#allocation3 + $0x350] sm:$0xff]
        %v1183 = vld [vmem:[#allocation3 + $0x390] sm:$0xff]
        %v1184 = vld [vmem:[#allocation3 + $0x3d0] sm:$0xff]
        %v1185 = vld [vmem:[#allocation3 + $0x410] sm:$0xff]
        %v1186 = vld [vmem:[#allocation3 + $0x450] sm:$0xff]
        %v1187 = vld [vmem:[#allocation3 + $0x490] sm:$0xff]
        %v1188 = vld [vmem:[#allocation3 + $0x4d0] sm:$0xff]
        %v1189 = vld [vmem:[#allocation3 + $0x510] sm:$0xff]
        %v1190 = vld [vmem:[#allocation3 + $0x550] sm:$0xff]
        %v1191 = vld [vmem:[#allocation3 + $0x590] sm:$0xff]
        %v1192 = vld [vmem:[#allocation3 + $0x5d0] sm:$0xff]
        %v1193 = vld [vmem:[#allocation3 + $0x610] sm:$0xff]
        %v1194 = vld [vmem:[#allocation3 + $0x650] sm:$0xff]
        %v1195 = vld [vmem:[#allocation3 + $0x690] sm:$0xff]
        %v1196 = vld [vmem:[#allocation3 + $0x6d0] sm:$0xff]
        %v1197 = vld [vmem:[#allocation3 + $0x710] sm:$0xff]
        %v1198 = vld [vmem:[#allocation3 + $0x750] sm:$0xff]
        %v1199 = vld [vmem:[#allocation3 + $0x790] sm:$0xff]
        %v1200 = vld [vmem:[#allocation3 + $0x7d0] sm:$0xff]
        %v1233 = vunpack.c.l.b16 %v1169
        %v1234 = vunpack.c.h.b16 %v1169
        %v1235 = vunpack.c.l.b16 %v1170
        %v1236 = vunpack.c.h.b16 %v1170
        %v1237 = vunpack.c.l.b16 %v1171
        %v1238 = vunpack.c.h.b16 %v1171
        %v1239 = vunpack.c.l.b16 %v1172
        %v1240 = vunpack.c.h.b16 %v1172
        %v1241 = vunpack.c.l.b16 %v1173
        %v1242 = vunpack.c.h.b16 %v1173
        %v1243 = vunpack.c.l.b16 %v1174
        %v1244 = vunpack.c.h.b16 %v1174
        %v1245 = vunpack.c.l.b16 %v1175
        %v1246 = vunpack.c.h.b16 %v1175
        %v1247 = vunpack.c.l.b16 %v1176
        %v1248 = vunpack.c.h.b16 %v1176
        %v1249 = vunpack.c.l.b16 %v1177
        %v1250 = vunpack.c.h.b16 %v1177
        %v1251 = vunpack.c.l.b16 %v1178
        %v1252 = vunpack.c.h.b16 %v1178
        %v1253 = vunpack.c.l.b16 %v1179
        %v1254 = vunpack.c.h.b16 %v1179
        %v1255 = vunpack.c.l.b16 %v1180
        %v1256 = vunpack.c.h.b16 %v1180
        %v1257 = vunpack.c.l.b16 %v1181
        %v1258 = vunpack.c.h.b16 %v1181
        %v1259 = vunpack.c.l.b16 %v1182
        %v1260 = vunpack.c.h.b16 %v1182
        %v1261 = vunpack.c.l.b16 %v1183
        %v1262 = vunpack.c.h.b16 %v1183
        %v1263 = vunpack.c.l.b16 %v1184
        %v1264 = vunpack.c.h.b16 %v1184
        %v1265 = vunpack.c.l.b16 %v1185
        %v1266 = vunpack.c.h.b16 %v1185
        %v1267 = vunpack.c.l.b16 %v1186
        %v1268 = vunpack.c.h.b16 %v1186
        %v1269 = vunpack.c.l.b16 %v1187
        %v1270 = vunpack.c.h.b16 %v1187
        %v1271 = vunpack.c.l.b16 %v1188
        %v1272 = vunpack.c.h.b16 %v1188
        %v1273 = vunpack.c.l.b16 %v1189
        %v1274 = vunpack.c.h.b16 %v1189
        %v1275 = vunpack.c.l.b16 %v1190
        %v1276 = vunpack.c.h.b16 %v1190
        %v1277 = vunpack.c.l.b16 %v1191
        %v1278 = vunpack.c.h.b16 %v1191
        %v1279 = vunpack.c.l.b16 %v1192
        %v1280 = vunpack.c.h.b16 %v1192
        %v1281 = vunpack.c.l.b16 %v1193
        %v1282 = vunpack.c.h.b16 %v1193
        %v1283 = vunpack.c.l.b16 %v1194
        %v1284 = vunpack.c.h.b16 %v1194
        %v1285 = vunpack.c.l.b16 %v1195
        %v1286 = vunpack.c.h.b16 %v1195
        %v1287 = vunpack.c.l.b16 %v1196
        %v1288 = vunpack.c.h.b16 %v1196
        %v1289 = vunpack.c.l.b16 %v1197
        %v1290 = vunpack.c.h.b16 %v1197
        %v1291 = vunpack.c.l.b16 %v1198
        %v1292 = vunpack.c.h.b16 %v1198
        %v1293 = vunpack.c.l.b16 %v1199
        %v1294 = vunpack.c.h.b16 %v1199
        %v1295 = vunpack.c.l.b16 %v1200
        %v1296 = vunpack.c.h.b16 %v1200
        %v1297 = vpack.c.b16 %v1235, %v1233
        %v1298 = vpack.c.b16 %v1236, %v1234
        %v1299 = vpack.c.b16 %v1239, %v1237
        %v1300 = vpack.c.b16 %v1240, %v1238
        %v1301 = vpack.c.b16 %v1243, %v1241
        %v1302 = vpack.c.b16 %v1244, %v1242
        %v1303 = vpack.c.b16 %v1247, %v1245
        %v1304 = vpack.c.b16 %v1248, %v1246
        %v1305 = vpack.c.b16 %v1251, %v1249
        %v1306 = vpack.c.b16 %v1252, %v1250
        %v1307 = vpack.c.b16 %v1255, %v1253
        %v1308 = vpack.c.b16 %v1256, %v1254
        %v1309 = vpack.c.b16 %v1259, %v1257
        %v1310 = vpack.c.b16 %v1260, %v1258
        %v1311 = vpack.c.b16 %v1263, %v1261
        %v1312 = vpack.c.b16 %v1264, %v1262
        %v1313 = vpack.c.b16 %v1267, %v1265
        %v1314 = vpack.c.b16 %v1268, %v1266
        %v1315 = vpack.c.b16 %v1271, %v1269
        %v1316 = vpack.c.b16 %v1272, %v1270
        %v1317 = vpack.c.b16 %v1275, %v1273
        %v1318 = vpack.c.b16 %v1276, %v1274
        %v1319 = vpack.c.b16 %v1279, %v1277
        %v1320 = vpack.c.b16 %v1280, %v1278
        %v1321 = vpack.c.b16 %v1283, %v1281
        %v1322 = vpack.c.b16 %v1284, %v1282
        %v1323 = vpack.c.b16 %v1287, %v1285
        %v1324 = vpack.c.b16 %v1288, %v1286
        %v1325 = vpack.c.b16 %v1291, %v1289
        %v1326 = vpack.c.b16 %v1292, %v1290
        %v1327 = vpack.c.b16 %v1295, %v1293
        %v1328 = vpack.c.b16 %v1296, %v1294
        %1361 = vmatpush.bf16.msra.mxu0 %v1311
        %1362 = vmatpush.bf16.msra.mxu0 %v1309
        %1363 = vmatpush.bf16.msra.mxu0 %v1307
        %1364 = vmatpush.bf16.msra.mxu0 %v1305
        %1365 = vmatpush.bf16.msra.mxu0 %v1303
        %1366 = vmatpush.bf16.msra.mxu0 %v1301
        %1367 = vmatpush.bf16.msra.mxu0 %v1299
        %1368 = vmatpush.bf16.msra.mxu0 %v1297
        %1369 = vmatmul.bf16.gmra.mxu0 %v628
        %v1370 = vpop.f32.mrf.mxu0
        %v1371 = vadd.f32 0.0, %v1370
        %v1372 = vpop.f32.mrf.mxu0
        %1373 = vdwg.mxu0
        %1374 = vmatpush.bf16.msra.mxu0 %v1327
        %1375 = vmatpush.bf16.msra.mxu0 %v1325
        %1376 = vmatpush.bf16.msra.mxu0 %v1323
        %1377 = vmatpush.bf16.msra.mxu0 %v1321
        %1378 = vmatpush.bf16.msra.mxu0 %v1319
        %1379 = vmatpush.bf16.msra.mxu0 %v1317
        %1380 = vmatpush.bf16.msra.mxu0 %v1315
        %1381 = vmatpush.bf16.msra.mxu0 %v1313
        %1382 = vmatmul.bf16.gmra.mxu0 %v629
        %v1383 = vpop.f32.mrf.mxu0
        %v1384 = vadd.f32 %v1371, %v1383
        %v1385 = vpop.f32.mrf.mxu0
        %1386 = vdwg.mxu0
        %1387 = vmatpush.bf16.msra.mxu0 %v1312
        %1388 = vmatpush.bf16.msra.mxu0 %v1310
        %1389 = vmatpush.bf16.msra.mxu0 %v1308
        %1390 = vmatpush.bf16.msra.mxu0 %v1306
        %1391 = vmatpush.bf16.msra.mxu0 %v1304
        %1392 = vmatpush.bf16.msra.mxu0 %v1302
        %1393 = vmatpush.bf16.msra.mxu0 %v1300
        %1394 = vmatpush.bf16.msra.mxu0 %v1298
        %1395 = vmatmul.bf16.gmra.mxu0 %v628
        %v1396 = vpop.f32.mrf.mxu0
        %v1397 = vadd.f32 0.0, %v1396
        %v1398 = vpop.f32.mrf.mxu0
        %1399 = vdwg.mxu0
        %1400 = vmatpush.bf16.msra.mxu0 %v1328
        %1401 = vmatpush.bf16.msra.mxu0 %v1326
        %1402 = vmatpush.bf16.msra.mxu0 %v1324
        %1403 = vmatpush.bf16.msra.mxu0 %v1322
        %1404 = vmatpush.bf16.msra.mxu0 %v1320
        %1405 = vmatpush.bf16.msra.mxu0 %v1318
        %1406 = vmatpush.bf16.msra.mxu0 %v1316
        %1407 = vmatpush.bf16.msra.mxu0 %v1314
        %1408 = vmatmul.bf16.gmra.mxu0 %v629
        %v1409 = vpop.f32.mrf.mxu0
        %v1410 = vadd.f32 %v1397, %v1409
        %v1411 = vpop.f32.mrf.mxu0
        %1412 = vdwg.mxu0
        %v1415 = vrot.slane %v1410, 7
        %v1416 = vsel %vm595, %v1384, %v1415
        %s1418 = scalar_lea.vmem [#allocation2], 2
        %1419 = vst.msk [vmem:[%s1418] ss:$8 sm:$0x3] %vm882, %v1416
        %1420 = vst.msk [vmem:[%s1418] ss:$8 sm:$0x0] %vm882, %v1416
        %v1421 = vmul.f32 %v1384, %v1384
        %v1422 = vmul.f32 %v1410, %v1410
        %v1423 = vsel %vm595, %v1421, 0.0
        %v1424 = vsel %vm595, %v1422, 0.0
        %v1425 = vadd.f32 %v1423, %v1424
        %1426 = vadd.xlane.f32.xlu0 %v1425
        %v1427 = vpop.xlane.xlu0 %1426
        %v1428 = vadd.f32 %v1160, %v1427
        %v1429 = vand.u32 2147483647, %v1384
        %v1430 = vand.u32 2147483647, %v1410
        %v1431 = vsel %vm595, %v1429, 0.0
        %v1432 = vsel %vm595, %v1430, 0.0
        %v1433 = vadd.f32 %v1431, %v1432
        %1434 = vadd.xlane.f32.xlu0 %v1433
        %v1435 = vpop.xlane.xlu0 %1434
        %v1436 = vadd.f32 %v1168, %v1435
        %v1437 = vld [vmem:[#allocation3 + $0x18] sm:$0xff]
        %v1438 = vld [vmem:[#allocation3 + $0x58] sm:$0xff]
        %v1439 = vld [vmem:[#allocation3 + $0x98] sm:$0xff]
        %v1440 = vld [vmem:[#allocation3 + $0xd8] sm:$0xff]
        %v1441 = vld [vmem:[#allocation3 + $0x118] sm:$0xff]
        %v1442 = vld [vmem:[#allocation3 + $0x158] sm:$0xff]
        %v1443 = vld [vmem:[#allocation3 + $0x198] sm:$0xff]
        %v1444 = vld [vmem:[#allocation3 + $0x1d8] sm:$0xff]
        %v1445 = vld [vmem:[#allocation3 + $0x218] sm:$0xff]
        %v1446 = vld [vmem:[#allocation3 + $0x258] sm:$0xff]
        %v1447 = vld [vmem:[#allocation3 + $0x298] sm:$0xff]
        %v1448 = vld [vmem:[#allocation3 + $0x2d8] sm:$0xff]
        %v1449 = vld [vmem:[#allocation3 + $0x318] sm:$0xff]
        %v1450 = vld [vmem:[#allocation3 + $0x358] sm:$0xff]
        %v1451 = vld [vmem:[#allocation3 + $0x398] sm:$0xff]
        %v1452 = vld [vmem:[#allocation3 + $0x3d8] sm:$0xff]
        %v1453 = vld [vmem:[#allocation3 + $0x418] sm:$0xff]
        %v1454 = vld [vmem:[#allocation3 + $0x458] sm:$0xff]
        %v1455 = vld [vmem:[#allocation3 + $0x498] sm:$0xff]
        %v1456 = vld [vmem:[#allocation3 + $0x4d8] sm:$0xff]
        %v1457 = vld [vmem:[#allocation3 + $0x518] sm:$0xff]
        %v1458 = vld [vmem:[#allocation3 + $0x558] sm:$0xff]
        %v1459 = vld [vmem:[#allocation3 + $0x598] sm:$0xff]
        %v1460 = vld [vmem:[#allocation3 + $0x5d8] sm:$0xff]
        %v1461 = vld [vmem:[#allocation3 + $0x618] sm:$0xff]
        %v1462 = vld [vmem:[#allocation3 + $0x658] sm:$0xff]
        %v1463 = vld [vmem:[#allocation3 + $0x698] sm:$0xff]
        %v1464 = vld [vmem:[#allocation3 + $0x6d8] sm:$0xff]
        %v1465 = vld [vmem:[#allocation3 + $0x718] sm:$0xff]
        %v1466 = vld [vmem:[#allocation3 + $0x758] sm:$0xff]
        %v1467 = vld [vmem:[#allocation3 + $0x798] sm:$0xff]
        %v1468 = vld [vmem:[#allocation3 + $0x7d8] sm:$0xff]
        %v1501 = vunpack.c.l.b16 %v1437
        %v1502 = vunpack.c.h.b16 %v1437
        %v1503 = vunpack.c.l.b16 %v1438
        %v1504 = vunpack.c.h.b16 %v1438
        %v1505 = vunpack.c.l.b16 %v1439
        %v1506 = vunpack.c.h.b16 %v1439
        %v1507 = vunpack.c.l.b16 %v1440
        %v1508 = vunpack.c.h.b16 %v1440
        %v1509 = vunpack.c.l.b16 %v1441
        %v1510 = vunpack.c.h.b16 %v1441
        %v1511 = vunpack.c.l.b16 %v1442
        %v1512 = vunpack.c.h.b16 %v1442
        %v1513 = vunpack.c.l.b16 %v1443
        %v1514 = vunpack.c.h.b16 %v1443
        %v1515 = vunpack.c.l.b16 %v1444
        %v1516 = vunpack.c.h.b16 %v1444
        %v1517 = vunpack.c.l.b16 %v1445
        %v1518 = vunpack.c.h.b16 %v1445
        %v1519 = vunpack.c.l.b16 %v1446
        %v1520 = vunpack.c.h.b16 %v1446
        %v1521 = vunpack.c.l.b16 %v1447
        %v1522 = vunpack.c.h.b16 %v1447
        %v1523 = vunpack.c.l.b16 %v1448
        %v1524 = vunpack.c.h.b16 %v1448
        %v1525 = vunpack.c.l.b16 %v1449
        %v1526 = vunpack.c.h.b16 %v1449
        %v1527 = vunpack.c.l.b16 %v1450
        %v1528 = vunpack.c.h.b16 %v1450
        %v1529 = vunpack.c.l.b16 %v1451
        %v1530 = vunpack.c.h.b16 %v1451
        %v1531 = vunpack.c.l.b16 %v1452
        %v1532 = vunpack.c.h.b16 %v1452
        %v1533 = vunpack.c.l.b16 %v1453
        %v1534 = vunpack.c.h.b16 %v1453
        %v1535 = vunpack.c.l.b16 %v1454
        %v1536 = vunpack.c.h.b16 %v1454
        %v1537 = vunpack.c.l.b16 %v1455
        %v1538 = vunpack.c.h.b16 %v1455
        %v1539 = vunpack.c.l.b16 %v1456
        %v1540 = vunpack.c.h.b16 %v1456
        %v1541 = vunpack.c.l.b16 %v1457
        %v1542 = vunpack.c.h.b16 %v1457
        %v1543 = vunpack.c.l.b16 %v1458
        %v1544 = vunpack.c.h.b16 %v1458
        %v1545 = vunpack.c.l.b16 %v1459
        %v1546 = vunpack.c.h.b16 %v1459
        %v1547 = vunpack.c.l.b16 %v1460
        %v1548 = vunpack.c.h.b16 %v1460
        %v1549 = vunpack.c.l.b16 %v1461
        %v1550 = vunpack.c.h.b16 %v1461
        %v1551 = vunpack.c.l.b16 %v1462
        %v1552 = vunpack.c.h.b16 %v1462
        %v1553 = vunpack.c.l.b16 %v1463
        %v1554 = vunpack.c.h.b16 %v1463
        %v1555 = vunpack.c.l.b16 %v1464
        %v1556 = vunpack.c.h.b16 %v1464
        %v1557 = vunpack.c.l.b16 %v1465
        %v1558 = vunpack.c.h.b16 %v1465
        %v1559 = vunpack.c.l.b16 %v1466
        %v1560 = vunpack.c.h.b16 %v1466
        %v1561 = vunpack.c.l.b16 %v1467
        %v1562 = vunpack.c.h.b16 %v1467
        %v1563 = vunpack.c.l.b16 %v1468
        %v1564 = vunpack.c.h.b16 %v1468
        %v1565 = vpack.c.b16 %v1503, %v1501
        %v1566 = vpack.c.b16 %v1504, %v1502
        %v1567 = vpack.c.b16 %v1507, %v1505
        %v1568 = vpack.c.b16 %v1508, %v1506
        %v1569 = vpack.c.b16 %v1511, %v1509
        %v1570 = vpack.c.b16 %v1512, %v1510
        %v1571 = vpack.c.b16 %v1515, %v1513
        %v1572 = vpack.c.b16 %v1516, %v1514
        %v1573 = vpack.c.b16 %v1519, %v1517
        %v1574 = vpack.c.b16 %v1520, %v1518
        %v1575 = vpack.c.b16 %v1523, %v1521
        %v1576 = vpack.c.b16 %v1524, %v1522
        %v1577 = vpack.c.b16 %v1527, %v1525
        %v1578 = vpack.c.b16 %v1528, %v1526
        %v1579 = vpack.c.b16 %v1531, %v1529
        %v1580 = vpack.c.b16 %v1532, %v1530
        %v1581 = vpack.c.b16 %v1535, %v1533
        %v1582 = vpack.c.b16 %v1536, %v1534
        %v1583 = vpack.c.b16 %v1539, %v1537
        %v1584 = vpack.c.b16 %v1540, %v1538
        %v1585 = vpack.c.b16 %v1543, %v1541
        %v1586 = vpack.c.b16 %v1544, %v1542
        %v1587 = vpack.c.b16 %v1547, %v1545
        %v1588 = vpack.c.b16 %v1548, %v1546
        %v1589 = vpack.c.b16 %v1551, %v1549
        %v1590 = vpack.c.b16 %v1552, %v1550
        %v1591 = vpack.c.b16 %v1555, %v1553
        %v1592 = vpack.c.b16 %v1556, %v1554
        %v1593 = vpack.c.b16 %v1559, %v1557
        %v1594 = vpack.c.b16 %v1560, %v1558
        %v1595 = vpack.c.b16 %v1563, %v1561
        %v1596 = vpack.c.b16 %v1564, %v1562
        %1629 = vmatpush.bf16.msra.mxu0 %v1579
        %1630 = vmatpush.bf16.msra.mxu0 %v1577
        %1631 = vmatpush.bf16.msra.mxu0 %v1575
        %1632 = vmatpush.bf16.msra.mxu0 %v1573
        %1633 = vmatpush.bf16.msra.mxu0 %v1571
        %1634 = vmatpush.bf16.msra.mxu0 %v1569
        %1635 = vmatpush.bf16.msra.mxu0 %v1567
        %1636 = vmatpush.bf16.msra.mxu0 %v1565
        %1637 = vmatmul.bf16.gmra.mxu0 %v628
        %v1638 = vpop.f32.mrf.mxu0
        %v1639 = vadd.f32 0.0, %v1638
        %v1640 = vpop.f32.mrf.mxu0
        %1641 = vdwg.mxu0
        %1642 = vmatpush.bf16.msra.mxu0 %v1595
        %1643 = vmatpush.bf16.msra.mxu0 %v1593
        %1644 = vmatpush.bf16.msra.mxu0 %v1591
        %1645 = vmatpush.bf16.msra.mxu0 %v1589
        %1646 = vmatpush.bf16.msra.mxu0 %v1587
        %1647 = vmatpush.bf16.msra.mxu0 %v1585
        %1648 = vmatpush.bf16.msra.mxu0 %v1583
        %1649 = vmatpush.bf16.msra.mxu0 %v1581
        %1650 = vmatmul.bf16.gmra.mxu0 %v629
        %v1651 = vpop.f32.mrf.mxu0
        %v1652 = vadd.f32 %v1639, %v1651
        %v1653 = vpop.f32.mrf.mxu0
        %1654 = vdwg.mxu0
        %1655 = vmatpush.bf16.msra.mxu0 %v1580
        %1656 = vmatpush.bf16.msra.mxu0 %v1578
        %1657 = vmatpush.bf16.msra.mxu0 %v1576
        %1658 = vmatpush.bf16.msra.mxu0 %v1574
        %1659 = vmatpush.bf16.msra.mxu0 %v1572
        %1660 = vmatpush.bf16.msra.mxu0 %v1570
        %1661 = vmatpush.bf16.msra.mxu0 %v1568
        %1662 = vmatpush.bf16.msra.mxu0 %v1566
        %1663 = vmatmul.bf16.gmra.mxu0 %v628
        %v1664 = vpop.f32.mrf.mxu0
        %v1665 = vadd.f32 0.0, %v1664
        %v1666 = vpop.f32.mrf.mxu0
        %1667 = vdwg.mxu0
        %1668 = vmatpush.bf16.msra.mxu0 %v1596
        %1669 = vmatpush.bf16.msra.mxu0 %v1594
        %1670 = vmatpush.bf16.msra.mxu0 %v1592
        %1671 = vmatpush.bf16.msra.mxu0 %v1590
        %1672 = vmatpush.bf16.msra.mxu0 %v1588
        %1673 = vmatpush.bf16.msra.mxu0 %v1586
        %1674 = vmatpush.bf16.msra.mxu0 %v1584
        %1675 = vmatpush.bf16.msra.mxu0 %v1582
        %1676 = vmatmul.bf16.gmra.mxu0 %v629
        %v1677 = vpop.f32.mrf.mxu0
        %v1678 = vadd.f32 %v1665, %v1677
        %v1679 = vpop.f32.mrf.mxu0
        %1680 = vdwg.mxu0
        %v1683 = vrot.slane %v1678, 7
        %v1684 = vsel %vm595, %v1652, %v1683
        %s1686 = scalar_lea.vmem [#allocation2], 3
        %1687 = vst.msk [vmem:[%s1686] ss:$8 sm:$0x3] %vm882, %v1684
        %1688 = vst.msk [vmem:[%s1686] ss:$8 sm:$0x0] %vm882, %v1684
        %v1689 = vmul.f32 %v1652, %v1652
        %v1690 = vmul.f32 %v1678, %v1678
        %v1691 = vsel %vm595, %v1689, 0.0
        %v1692 = vsel %vm595, %v1690, 0.0
        %v1693 = vadd.f32 %v1691, %v1692
        %1694 = vadd.xlane.f32.xlu0 %v1693
        %v1695 = vpop.xlane.xlu0 %1694
        %v1696 = vadd.f32 %v1428, %v1695
        %v1697 = vand.u32 2147483647, %v1652
        %v1698 = vand.u32 2147483647, %v1678
        %v1699 = vsel %vm595, %v1697, 0.0
        %v1700 = vsel %vm595, %v1698, 0.0
        %v1701 = vadd.f32 %v1699, %v1700
        %1702 = vadd.xlane.f32.xlu0 %v1701
        %v1703 = vpop.xlane.xlu0 %1702
        %v1704 = vadd.f32 %v1436, %v1703
        %v1705 = vld [vmem:[#allocation3 + $0x20] sm:$0xff]
        %v1706 = vld [vmem:[#allocation3 + $0x60] sm:$0xff]
        %v1707 = vld [vmem:[#allocation3 + $0xa0] sm:$0xff]
        %v1708 = vld [vmem:[#allocation3 + $0xe0] sm:$0xff]
        %v1709 = vld [vmem:[#allocation3 + $0x120] sm:$0xff]
        %v1710 = vld [vmem:[#allocation3 + $0x160] sm:$0xff]
        %v1711 = vld [vmem:[#allocation3 + $0x1a0] sm:$0xff]
        %v1712 = vld [vmem:[#allocation3 + $0x1e0] sm:$0xff]
        %v1713 = vld [vmem:[#allocation3 + $0x220] sm:$0xff]
        %v1714 = vld [vmem:[#allocation3 + $0x260] sm:$0xff]
        %v1715 = vld [vmem:[#allocation3 + $0x2a0] sm:$0xff]
        %v1716 = vld [vmem:[#allocation3 + $0x2e0] sm:$0xff]
        %v1717 = vld [vmem:[#allocation3 + $0x320] sm:$0xff]
        %v1718 = vld [vmem:[#allocation3 + $0x360] sm:$0xff]
        %v1719 = vld [vmem:[#allocation3 + $0x3a0] sm:$0xff]
        %v1720 = vld [vmem:[#allocation3 + $0x3e0] sm:$0xff]
        %v1721 = vld [vmem:[#allocation3 + $0x420] sm:$0xff]
        %v1722 = vld [vmem:[#allocation3 + $0x460] sm:$0xff]
        %v1723 = vld [vmem:[#allocation3 + $0x4a0] sm:$0xff]
        %v1724 = vld [vmem:[#allocation3 + $0x4e0] sm:$0xff]
        %v1725 = vld [vmem:[#allocation3 + $0x520] sm:$0xff]
        %v1726 = vld [vmem:[#allocation3 + $0x560] sm:$0xff]
        %v1727 = vld [vmem:[#allocation3 + $0x5a0] sm:$0xff]
        %v1728 = vld [vmem:[#allocation3 + $0x5e0] sm:$0xff]
        %v1729 = vld [vmem:[#allocation3 + $0x620] sm:$0xff]
        %v1730 = vld [vmem:[#allocation3 + $0x660] sm:$0xff]
        %v1731 = vld [vmem:[#allocation3 + $0x6a0] sm:$0xff]
        %v1732 = vld [vmem:[#allocation3 + $0x6e0] sm:$0xff]
        %v1733 = vld [vmem:[#allocation3 + $0x720] sm:$0xff]
        %v1734 = vld [vmem:[#allocation3 + $0x760] sm:$0xff]
        %v1735 = vld [vmem:[#allocation3 + $0x7a0] sm:$0xff]
        %v1736 = vld [vmem:[#allocation3 + $0x7e0] sm:$0xff]
        %v1769 = vunpack.c.l.b16 %v1705
        %v1770 = vunpack.c.h.b16 %v1705
        %v1771 = vunpack.c.l.b16 %v1706
        %v1772 = vunpack.c.h.b16 %v1706
        %v1773 = vunpack.c.l.b16 %v1707
        %v1774 = vunpack.c.h.b16 %v1707
        %v1775 = vunpack.c.l.b16 %v1708
        %v1776 = vunpack.c.h.b16 %v1708
        %v1777 = vunpack.c.l.b16 %v1709
        %v1778 = vunpack.c.h.b16 %v1709
        %v1779 = vunpack.c.l.b16 %v1710
        %v1780 = vunpack.c.h.b16 %v1710
        %v1781 = vunpack.c.l.b16 %v1711
        %v1782 = vunpack.c.h.b16 %v1711
        %v1783 = vunpack.c.l.b16 %v1712
        %v1784 = vunpack.c.h.b16 %v1712
        %v1785 = vunpack.c.l.b16 %v1713
        %v1786 = vunpack.c.h.b16 %v1713
        %v1787 = vunpack.c.l.b16 %v1714
        %v1788 = vunpack.c.h.b16 %v1714
        %v1789 = vunpack.c.l.b16 %v1715
        %v1790 = vunpack.c.h.b16 %v1715
        %v1791 = vunpack.c.l.b16 %v1716
        %v1792 = vunpack.c.h.b16 %v1716
        %v1793 = vunpack.c.l.b16 %v1717
        %v1794 = vunpack.c.h.b16 %v1717
        %v1795 = vunpack.c.l.b16 %v1718
        %v1796 = vunpack.c.h.b16 %v1718
        %v1797 = vunpack.c.l.b16 %v1719
        %v1798 = vunpack.c.h.b16 %v1719
        %v1799 = vunpack.c.l.b16 %v1720
        %v1800 = vunpack.c.h.b16 %v1720
        %v1801 = vunpack.c.l.b16 %v1721
        %v1802 = vunpack.c.h.b16 %v1721
        %v1803 = vunpack.c.l.b16 %v1722
        %v1804 = vunpack.c.h.b16 %v1722
        %v1805 = vunpack.c.l.b16 %v1723
        %v1806 = vunpack.c.h.b16 %v1723
        %v1807 = vunpack.c.l.b16 %v1724
        %v1808 = vunpack.c.h.b16 %v1724
        %v1809 = vunpack.c.l.b16 %v1725
        %v1810 = vunpack.c.h.b16 %v1725
        %v1811 = vunpack.c.l.b16 %v1726
        %v1812 = vunpack.c.h.b16 %v1726
        %v1813 = vunpack.c.l.b16 %v1727
        %v1814 = vunpack.c.h.b16 %v1727
        %v1815 = vunpack.c.l.b16 %v1728
        %v1816 = vunpack.c.h.b16 %v1728
        %v1817 = vunpack.c.l.b16 %v1729
        %v1818 = vunpack.c.h.b16 %v1729
        %v1819 = vunpack.c.l.b16 %v1730
        %v1820 = vunpack.c.h.b16 %v1730
        %v1821 = vunpack.c.l.b16 %v1731
        %v1822 = vunpack.c.h.b16 %v1731
        %v1823 = vunpack.c.l.b16 %v1732
        %v1824 = vunpack.c.h.b16 %v1732
        %v1825 = vunpack.c.l.b16 %v1733
        %v1826 = vunpack.c.h.b16 %v1733
        %v1827 = vunpack.c.l.b16 %v1734
        %v1828 = vunpack.c.h.b16 %v1734
        %v1829 = vunpack.c.l.b16 %v1735
        %v1830 = vunpack.c.h.b16 %v1735
        %v1831 = vunpack.c.l.b16 %v1736
        %v1832 = vunpack.c.h.b16 %v1736
        %v1833 = vpack.c.b16 %v1771, %v1769
        %v1834 = vpack.c.b16 %v1772, %v1770
        %v1835 = vpack.c.b16 %v1775, %v1773
        %v1836 = vpack.c.b16 %v1776, %v1774
        %v1837 = vpack.c.b16 %v1779, %v1777
        %v1838 = vpack.c.b16 %v1780, %v1778
        %v1839 = vpack.c.b16 %v1783, %v1781
        %v1840 = vpack.c.b16 %v1784, %v1782
        %v1841 = vpack.c.b16 %v1787, %v1785
        %v1842 = vpack.c.b16 %v1788, %v1786
        %v1843 = vpack.c.b16 %v1791, %v1789
        %v1844 = vpack.c.b16 %v1792, %v1790
        %v1845 = vpack.c.b16 %v1795, %v1793
        %v1846 = vpack.c.b16 %v1796, %v1794
        %v1847 = vpack.c.b16 %v1799, %v1797
        %v1848 = vpack.c.b16 %v1800, %v1798
        %v1849 = vpack.c.b16 %v1803, %v1801
        %v1850 = vpack.c.b16 %v1804, %v1802
        %v1851 = vpack.c.b16 %v1807, %v1805
        %v1852 = vpack.c.b16 %v1808, %v1806
        %v1853 = vpack.c.b16 %v1811, %v1809
        %v1854 = vpack.c.b16 %v1812, %v1810
        %v1855 = vpack.c.b16 %v1815, %v1813
        %v1856 = vpack.c.b16 %v1816, %v1814
        %v1857 = vpack.c.b16 %v1819, %v1817
        %v1858 = vpack.c.b16 %v1820, %v1818
        %v1859 = vpack.c.b16 %v1823, %v1821
        %v1860 = vpack.c.b16 %v1824, %v1822
        %v1861 = vpack.c.b16 %v1827, %v1825
        %v1862 = vpack.c.b16 %v1828, %v1826
        %v1863 = vpack.c.b16 %v1831, %v1829
        %v1864 = vpack.c.b16 %v1832, %v1830
        %1897 = vmatpush.bf16.msra.mxu0 %v1847
        %1898 = vmatpush.bf16.msra.mxu0 %v1845
        %1899 = vmatpush.bf16.msra.mxu0 %v1843
        %1900 = vmatpush.bf16.msra.mxu0 %v1841
        %1901 = vmatpush.bf16.msra.mxu0 %v1839
        %1902 = vmatpush.bf16.msra.mxu0 %v1837
        %1903 = vmatpush.bf16.msra.mxu0 %v1835
        %1904 = vmatpush.bf16.msra.mxu0 %v1833
        %1905 = vmatmul.bf16.gmra.mxu0 %v628
        %v1906 = vpop.f32.mrf.mxu0
        %v1907 = vadd.f32 0.0, %v1906
        %v1908 = vpop.f32.mrf.mxu0
        %1909 = vdwg.mxu0
        %1910 = vmatpush.bf16.msra.mxu0 %v1863
        %1911 = vmatpush.bf16.msra.mxu0 %v1861
        %1912 = vmatpush.bf16.msra.mxu0 %v1859
        %1913 = vmatpush.bf16.msra.mxu0 %v1857
        %1914 = vmatpush.bf16.msra.mxu0 %v1855
        %1915 = vmatpush.bf16.msra.mxu0 %v1853
        %1916 = vmatpush.bf16.msra.mxu0 %v1851
        %1917 = vmatpush.bf16.msra.mxu0 %v1849
        %1918 = vmatmul.bf16.gmra.mxu0 %v629
        %v1919 = vpop.f32.mrf.mxu0
        %v1920 = vadd.f32 %v1907, %v1919
        %v1921 = vpop.f32.mrf.mxu0
        %1922 = vdwg.mxu0
        %1923 = vmatpush.bf16.msra.mxu0 %v1848
        %1924 = vmatpush.bf16.msra.mxu0 %v1846
        %1925 = vmatpush.bf16.msra.mxu0 %v1844
        %1926 = vmatpush.bf16.msra.mxu0 %v1842
        %1927 = vmatpush.bf16.msra.mxu0 %v1840
        %1928 = vmatpush.bf16.msra.mxu0 %v1838
        %1929 = vmatpush.bf16.msra.mxu0 %v1836
        %1930 = vmatpush.bf16.msra.mxu0 %v1834
        %1931 = vmatmul.bf16.gmra.mxu0 %v628
        %v1932 = vpop.f32.mrf.mxu0
        %v1933 = vadd.f32 0.0, %v1932
        %v1934 = vpop.f32.mrf.mxu0
        %1935 = vdwg.mxu0
        %1936 = vmatpush.bf16.msra.mxu0 %v1864
        %1937 = vmatpush.bf16.msra.mxu0 %v1862
        %1938 = vmatpush.bf16.msra.mxu0 %v1860
        %1939 = vmatpush.bf16.msra.mxu0 %v1858
        %1940 = vmatpush.bf16.msra.mxu0 %v1856
        %1941 = vmatpush.bf16.msra.mxu0 %v1854
        %1942 = vmatpush.bf16.msra.mxu0 %v1852
        %1943 = vmatpush.bf16.msra.mxu0 %v1850
        %1944 = vmatmul.bf16.gmra.mxu0 %v629
        %v1945 = vpop.f32.mrf.mxu0
        %v1946 = vadd.f32 %v1933, %v1945
        %v1947 = vpop.f32.mrf.mxu0
        %1948 = vdwg.mxu0
        %v1951 = vrot.slane %v1946, 7
        %v1952 = vsel %vm595, %v1920, %v1951
        %s1954 = scalar_lea.vmem [#allocation2], 4
        %1955 = vst.msk [vmem:[%s1954] ss:$8 sm:$0x3] %vm882, %v1952
        %1956 = vst.msk [vmem:[%s1954] ss:$8 sm:$0x0] %vm882, %v1952
        %v1957 = vmul.f32 %v1920, %v1920
        %v1958 = vmul.f32 %v1946, %v1946
        %v1959 = vsel %vm595, %v1957, 0.0
        %v1960 = vsel %vm595, %v1958, 0.0
        %v1961 = vadd.f32 %v1959, %v1960
        %1962 = vadd.xlane.f32.xlu0 %v1961
        %v1963 = vpop.xlane.xlu0 %1962
        %v1964 = vadd.f32 %v1696, %v1963
        %v1965 = vand.u32 2147483647, %v1920
        %v1966 = vand.u32 2147483647, %v1946
        %v1967 = vsel %vm595, %v1965, 0.0
        %v1968 = vsel %vm595, %v1966, 0.0
        %v1969 = vadd.f32 %v1967, %v1968
        %1970 = vadd.xlane.f32.xlu0 %v1969
        %v1971 = vpop.xlane.xlu0 %1970
        %v1972 = vadd.f32 %v1704, %v1971
        %v1973 = vld [vmem:[#allocation3 + $0x28] sm:$0xff]
        %v1974 = vld [vmem:[#allocation3 + $0x68] sm:$0xff]
        %v1975 = vld [vmem:[#allocation3 + $0xa8] sm:$0xff]
        %v1976 = vld [vmem:[#allocation3 + $0xe8] sm:$0xff]
        %v1977 = vld [vmem:[#allocation3 + $0x128] sm:$0xff]
        %v1978 = vld [vmem:[#allocation3 + $0x168] sm:$0xff]
        %v1979 = vld [vmem:[#allocation3 + $0x1a8] sm:$0xff]
        %v1980 = vld [vmem:[#allocation3 + $0x1e8] sm:$0xff]
        %v1981 = vld [vmem:[#allocation3 + $0x228] sm:$0xff]
        %v1982 = vld [vmem:[#allocation3 + $0x268] sm:$0xff]
        %v1983 = vld [vmem:[#allocation3 + $0x2a8] sm:$0xff]
        %v1984 = vld [vmem:[#allocation3 + $0x2e8] sm:$0xff]
        %v1985 = vld [vmem:[#allocation3 + $0x328] sm:$0xff]
        %v1986 = vld [vmem:[#allocation3 + $0x368] sm:$0xff]
        %v1987 = vld [vmem:[#allocation3 + $0x3a8] sm:$0xff]
        %v1988 = vld [vmem:[#allocation3 + $0x3e8] sm:$0xff]
        %v1989 = vld [vmem:[#allocation3 + $0x428] sm:$0xff]
        %v1990 = vld [vmem:[#allocation3 + $0x468] sm:$0xff]
        %v1991 = vld [vmem:[#allocation3 + $0x4a8] sm:$0xff]
        %v1992 = vld [vmem:[#allocation3 + $0x4e8] sm:$0xff]
        %v1993 = vld [vmem:[#allocation3 + $0x528] sm:$0xff]
        %v1994 = vld [vmem:[#allocation3 + $0x568] sm:$0xff]
        %v1995 = vld [vmem:[#allocation3 + $0x5a8] sm:$0xff]
        %v1996 = vld [vmem:[#allocation3 + $0x5e8] sm:$0xff]
        %v1997 = vld [vmem:[#allocation3 + $0x628] sm:$0xff]
        %v1998 = vld [vmem:[#allocation3 + $0x668] sm:$0xff]
        %v1999 = vld [vmem:[#allocation3 + $0x6a8] sm:$0xff]
        %v2000 = vld [vmem:[#allocation3 + $0x6e8] sm:$0xff]
        %v2001 = vld [vmem:[#allocation3 + $0x728] sm:$0xff]
        %v2002 = vld [vmem:[#allocation3 + $0x768] sm:$0xff]
        %v2003 = vld [vmem:[#allocation3 + $0x7a8] sm:$0xff]
        %v2004 = vld [vmem:[#allocation3 + $0x7e8] sm:$0xff]
        %v2037 = vunpack.c.l.b16 %v1973
        %v2038 = vunpack.c.h.b16 %v1973
        %v2039 = vunpack.c.l.b16 %v1974
        %v2040 = vunpack.c.h.b16 %v1974
        %v2041 = vunpack.c.l.b16 %v1975
        %v2042 = vunpack.c.h.b16 %v1975
        %v2043 = vunpack.c.l.b16 %v1976
        %v2044 = vunpack.c.h.b16 %v1976
        %v2045 = vunpack.c.l.b16 %v1977
        %v2046 = vunpack.c.h.b16 %v1977
        %v2047 = vunpack.c.l.b16 %v1978
        %v2048 = vunpack.c.h.b16 %v1978
        %v2049 = vunpack.c.l.b16 %v1979
        %v2050 = vunpack.c.h.b16 %v1979
        %v2051 = vunpack.c.l.b16 %v1980
        %v2052 = vunpack.c.h.b16 %v1980
        %v2053 = vunpack.c.l.b16 %v1981
        %v2054 = vunpack.c.h.b16 %v1981
        %v2055 = vunpack.c.l.b16 %v1982
        %v2056 = vunpack.c.h.b16 %v1982
        %v2057 = vunpack.c.l.b16 %v1983
        %v2058 = vunpack.c.h.b16 %v1983
        %v2059 = vunpack.c.l.b16 %v1984
        %v2060 = vunpack.c.h.b16 %v1984
        %v2061 = vunpack.c.l.b16 %v1985
        %v2062 = vunpack.c.h.b16 %v1985
        %v2063 = vunpack.c.l.b16 %v1986
        %v2064 = vunpack.c.h.b16 %v1986
        %v2065 = vunpack.c.l.b16 %v1987
        %v2066 = vunpack.c.h.b16 %v1987
        %v2067 = vunpack.c.l.b16 %v1988
        %v2068 = vunpack.c.h.b16 %v1988
        %v2069 = vunpack.c.l.b16 %v1989
        %v2070 = vunpack.c.h.b16 %v1989
        %v2071 = vunpack.c.l.b16 %v1990
        %v2072 = vunpack.c.h.b16 %v1990
        %v2073 = vunpack.c.l.b16 %v1991
        %v2074 = vunpack.c.h.b16 %v1991
        %v2075 = vunpack.c.l.b16 %v1992
        %v2076 = vunpack.c.h.b16 %v1992
        %v2077 = vunpack.c.l.b16 %v1993
        %v2078 = vunpack.c.h.b16 %v1993
        %v2079 = vunpack.c.l.b16 %v1994
        %v2080 = vunpack.c.h.b16 %v1994
        %v2081 = vunpack.c.l.b16 %v1995
        %v2082 = vunpack.c.h.b16 %v1995
        %v2083 = vunpack.c.l.b16 %v1996
        %v2084 = vunpack.c.h.b16 %v1996
        %v2085 = vunpack.c.l.b16 %v1997
        %v2086 = vunpack.c.h.b16 %v1997
        %v2087 = vunpack.c.l.b16 %v1998
        %v2088 = vunpack.c.h.b16 %v1998
        %v2089 = vunpack.c.l.b16 %v1999
        %v2090 = vunpack.c.h.b16 %v1999
        %v2091 = vunpack.c.l.b16 %v2000
        %v2092 = vunpack.c.h.b16 %v2000
        %v2093 = vunpack.c.l.b16 %v2001
        %v2094 = vunpack.c.h.b16 %v2001
        %v2095 = vunpack.c.l.b16 %v2002
        %v2096 = vunpack.c.h.b16 %v2002
        %v2097 = vunpack.c.l.b16 %v2003
        %v2098 = vunpack.c.h.b16 %v2003
        %v2099 = vunpack.c.l.b16 %v2004
        %v2100 = vunpack.c.h.b16 %v2004
        %v2101 = vpack.c.b16 %v2039, %v2037
        %v2102 = vpack.c.b16 %v2040, %v2038
        %v2103 = vpack.c.b16 %v2043, %v2041
        %v2104 = vpack.c.b16 %v2044, %v2042
        %v2105 = vpack.c.b16 %v2047, %v2045
        %v2106 = vpack.c.b16 %v2048, %v2046
        %v2107 = vpack.c.b16 %v2051, %v2049
        %v2108 = vpack.c.b16 %v2052, %v2050
        %v2109 = vpack.c.b16 %v2055, %v2053
        %v2110 = vpack.c.b16 %v2056, %v2054
        %v2111 = vpack.c.b16 %v2059, %v2057
        %v2112 = vpack.c.b16 %v2060, %v2058
        %v2113 = vpack.c.b16 %v2063, %v2061
        %v2114 = vpack.c.b16 %v2064, %v2062
        %v2115 = vpack.c.b16 %v2067, %v2065
        %v2116 = vpack.c.b16 %v2068, %v2066
        %v2117 = vpack.c.b16 %v2071, %v2069
        %v2118 = vpack.c.b16 %v2072, %v2070
        %v2119 = vpack.c.b16 %v2075, %v2073
        %v2120 = vpack.c.b16 %v2076, %v2074
        %v2121 = vpack.c.b16 %v2079, %v2077
        %v2122 = vpack.c.b16 %v2080, %v2078
        %v2123 = vpack.c.b16 %v2083, %v2081
        %v2124 = vpack.c.b16 %v2084, %v2082
        %v2125 = vpack.c.b16 %v2087, %v2085
        %v2126 = vpack.c.b16 %v2088, %v2086
        %v2127 = vpack.c.b16 %v2091, %v2089
        %v2128 = vpack.c.b16 %v2092, %v2090
        %v2129 = vpack.c.b16 %v2095, %v2093
        %v2130 = vpack.c.b16 %v2096, %v2094
        %v2131 = vpack.c.b16 %v2099, %v2097
        %v2132 = vpack.c.b16 %v2100, %v2098
        %2165 = vmatpush.bf16.msra.mxu0 %v2115
        %2166 = vmatpush.bf16.msra.mxu0 %v2113
        %2167 = vmatpush.bf16.msra.mxu0 %v2111
        %2168 = vmatpush.bf16.msra.mxu0 %v2109
        %2169 = vmatpush.bf16.msra.mxu0 %v2107
        %2170 = vmatpush.bf16.msra.mxu0 %v2105
        %2171 = vmatpush.bf16.msra.mxu0 %v2103
        %2172 = vmatpush.bf16.msra.mxu0 %v2101
        %2173 = vmatmul.bf16.gmra.mxu0 %v628
        %v2174 = vpop.f32.mrf.mxu0
        %v2175 = vadd.f32 0.0, %v2174
        %v2176 = vpop.f32.mrf.mxu0
        %2177 = vdwg.mxu0
        %2178 = vmatpush.bf16.msra.mxu0 %v2131
        %2179 = vmatpush.bf16.msra.mxu0 %v2129
        %2180 = vmatpush.bf16.msra.mxu0 %v2127
        %2181 = vmatpush.bf16.msra.mxu0 %v2125
        %2182 = vmatpush.bf16.msra.mxu0 %v2123
        %2183 = vmatpush.bf16.msra.mxu0 %v2121
        %2184 = vmatpush.bf16.msra.mxu0 %v2119
        %2185 = vmatpush.bf16.msra.mxu0 %v2117
        %2186 = vmatmul.bf16.gmra.mxu0 %v629
        %v2187 = vpop.f32.mrf.mxu0
        %v2188 = vadd.f32 %v2175, %v2187
        %v2189 = vpop.f32.mrf.mxu0
        %2190 = vdwg.mxu0
        %2191 = vmatpush.bf16.msra.mxu0 %v2116
        %2192 = vmatpush.bf16.msra.mxu0 %v2114
        %2193 = vmatpush.bf16.msra.mxu0 %v2112
        %2194 = vmatpush.bf16.msra.mxu0 %v2110
        %2195 = vmatpush.bf16.msra.mxu0 %v2108
        %2196 = vmatpush.bf16.msra.mxu0 %v2106
        %2197 = vmatpush.bf16.msra.mxu0 %v2104
        %2198 = vmatpush.bf16.msra.mxu0 %v2102
        %2199 = vmatmul.bf16.gmra.mxu0 %v628
        %v2200 = vpop.f32.mrf.mxu0
        %v2201 = vadd.f32 0.0, %v2200
        %v2202 = vpop.f32.mrf.mxu0
        %2203 = vdwg.mxu0
        %2204 = vmatpush.bf16.msra.mxu0 %v2132
        %2205 = vmatpush.bf16.msra.mxu0 %v2130
        %2206 = vmatpush.bf16.msra.mxu0 %v2128
        %2207 = vmatpush.bf16.msra.mxu0 %v2126
        %2208 = vmatpush.bf16.msra.mxu0 %v2124
        %2209 = vmatpush.bf16.msra.mxu0 %v2122
        %2210 = vmatpush.bf16.msra.mxu0 %v2120
        %2211 = vmatpush.bf16.msra.mxu0 %v2118
        %2212 = vmatmul.bf16.gmra.mxu0 %v629
        %v2213 = vpop.f32.mrf.mxu0
        %v2214 = vadd.f32 %v2201, %v2213
        %v2215 = vpop.f32.mrf.mxu0
        %2216 = vdwg.mxu0
        %v2219 = vrot.slane %v2214, 7
        %v2220 = vsel %vm595, %v2188, %v2219
        %s2222 = scalar_lea.vmem [#allocation2], 5
        %2223 = vst.msk [vmem:[%s2222] ss:$8 sm:$0x3] %vm882, %v2220
        %2224 = vst.msk [vmem:[%s2222] ss:$8 sm:$0x0] %vm882, %v2220
        %v2225 = vmul.f32 %v2188, %v2188
        %v2226 = vmul.f32 %v2214, %v2214
        %v2227 = vsel %vm595, %v2225, 0.0
        %v2228 = vsel %vm595, %v2226, 0.0
        %v2229 = vadd.f32 %v2227, %v2228
        %2230 = vadd.xlane.f32.xlu0 %v2229
        %v2231 = vpop.xlane.xlu0 %2230
        %v2232 = vadd.f32 %v1964, %v2231
        %v2233 = vand.u32 2147483647, %v2188
        %v2234 = vand.u32 2147483647, %v2214
        %v2235 = vsel %vm595, %v2233, 0.0
        %v2236 = vsel %vm595, %v2234, 0.0
        %v2237 = vadd.f32 %v2235, %v2236
        %2238 = vadd.xlane.f32.xlu0 %v2237
        %v2239 = vpop.xlane.xlu0 %2238
        %v2240 = vadd.f32 %v1972, %v2239
        %v2241 = vld [vmem:[#allocation3 + $0x30] sm:$0xff]
        %v2242 = vld [vmem:[#allocation3 + $0x70] sm:$0xff]
        %v2243 = vld [vmem:[#allocation3 + $0xb0] sm:$0xff]
        %v2244 = vld [vmem:[#allocation3 + $0xf0] sm:$0xff]
        %v2245 = vld [vmem:[#allocation3 + $0x130] sm:$0xff]
        %v2246 = vld [vmem:[#allocation3 + $0x170] sm:$0xff]
        %v2247 = vld [vmem:[#allocation3 + $0x1b0] sm:$0xff]
        %v2248 = vld [vmem:[#allocation3 + $0x1f0] sm:$0xff]
        %v2249 = vld [vmem:[#allocation3 + $0x230] sm:$0xff]
        %v2250 = vld [vmem:[#allocation3 + $0x270] sm:$0xff]
        %v2251 = vld [vmem:[#allocation3 + $0x2b0] sm:$0xff]
        %v2252 = vld [vmem:[#allocation3 + $0x2f0] sm:$0xff]
        %v2253 = vld [vmem:[#allocation3 + $0x330] sm:$0xff]
        %v2254 = vld [vmem:[#allocation3 + $0x370] sm:$0xff]
        %v2255 = vld [vmem:[#allocation3 + $0x3b0] sm:$0xff]
        %v2256 = vld [vmem:[#allocation3 + $0x3f0] sm:$0xff]
        %v2257 = vld [vmem:[#allocation3 + $0x430] sm:$0xff]
        %v2258 = vld [vmem:[#allocation3 + $0x470] sm:$0xff]
        %v2259 = vld [vmem:[#allocation3 + $0x4b0] sm:$0xff]
        %v2260 = vld [vmem:[#allocation3 + $0x4f0] sm:$0xff]
        %v2261 = vld [vmem:[#allocation3 + $0x530] sm:$0xff]
        %v2262 = vld [vmem:[#allocation3 + $0x570] sm:$0xff]
        %v2263 = vld [vmem:[#allocation3 + $0x5b0] sm:$0xff]
        %v2264 = vld [vmem:[#allocation3 + $0x5f0] sm:$0xff]
        %v2265 = vld [vmem:[#allocation3 + $0x630] sm:$0xff]
        %v2266 = vld [vmem:[#allocation3 + $0x670] sm:$0xff]
        %v2267 = vld [vmem:[#allocation3 + $0x6b0] sm:$0xff]
        %v2268 = vld [vmem:[#allocation3 + $0x6f0] sm:$0xff]
        %v2269 = vld [vmem:[#allocation3 + $0x730] sm:$0xff]
        %v2270 = vld [vmem:[#allocation3 + $0x770] sm:$0xff]
        %v2271 = vld [vmem:[#allocation3 + $0x7b0] sm:$0xff]
        %v2272 = vld [vmem:[#allocation3 + $0x7f0] sm:$0xff]
        %v2305 = vunpack.c.l.b16 %v2241
        %v2306 = vunpack.c.h.b16 %v2241
        %v2307 = vunpack.c.l.b16 %v2242
        %v2308 = vunpack.c.h.b16 %v2242
        %v2309 = vunpack.c.l.b16 %v2243
        %v2310 = vunpack.c.h.b16 %v2243
        %v2311 = vunpack.c.l.b16 %v2244
        %v2312 = vunpack.c.h.b16 %v2244
        %v2313 = vunpack.c.l.b16 %v2245
        %v2314 = vunpack.c.h.b16 %v2245
        %v2315 = vunpack.c.l.b16 %v2246
        %v2316 = vunpack.c.h.b16 %v2246
        %v2317 = vunpack.c.l.b16 %v2247
        %v2318 = vunpack.c.h.b16 %v2247
        %v2319 = vunpack.c.l.b16 %v2248
        %v2320 = vunpack.c.h.b16 %v2248
        %v2321 = vunpack.c.l.b16 %v2249
        %v2322 = vunpack.c.h.b16 %v2249
        %v2323 = vunpack.c.l.b16 %v2250
        %v2324 = vunpack.c.h.b16 %v2250
        %v2325 = vunpack.c.l.b16 %v2251
        %v2326 = vunpack.c.h.b16 %v2251
        %v2327 = vunpack.c.l.b16 %v2252
        %v2328 = vunpack.c.h.b16 %v2252
        %v2329 = vunpack.c.l.b16 %v2253
        %v2330 = vunpack.c.h.b16 %v2253
        %v2331 = vunpack.c.l.b16 %v2254
        %v2332 = vunpack.c.h.b16 %v2254
        %v2333 = vunpack.c.l.b16 %v2255
        %v2334 = vunpack.c.h.b16 %v2255
        %v2335 = vunpack.c.l.b16 %v2256
        %v2336 = vunpack.c.h.b16 %v2256
        %v2337 = vunpack.c.l.b16 %v2257
        %v2338 = vunpack.c.h.b16 %v2257
        %v2339 = vunpack.c.l.b16 %v2258
        %v2340 = vunpack.c.h.b16 %v2258
        %v2341 = vunpack.c.l.b16 %v2259
        %v2342 = vunpack.c.h.b16 %v2259
        %v2343 = vunpack.c.l.b16 %v2260
        %v2344 = vunpack.c.h.b16 %v2260
        %v2345 = vunpack.c.l.b16 %v2261
        %v2346 = vunpack.c.h.b16 %v2261
        %v2347 = vunpack.c.l.b16 %v2262
        %v2348 = vunpack.c.h.b16 %v2262
        %v2349 = vunpack.c.l.b16 %v2263
        %v2350 = vunpack.c.h.b16 %v2263
        %v2351 = vunpack.c.l.b16 %v2264
        %v2352 = vunpack.c.h.b16 %v2264
        %v2353 = vunpack.c.l.b16 %v2265
        %v2354 = vunpack.c.h.b16 %v2265
        %v2355 = vunpack.c.l.b16 %v2266
        %v2356 = vunpack.c.h.b16 %v2266
        %v2357 = vunpack.c.l.b16 %v2267
        %v2358 = vunpack.c.h.b16 %v2267
        %v2359 = vunpack.c.l.b16 %v2268
        %v2360 = vunpack.c.h.b16 %v2268
        %v2361 = vunpack.c.l.b16 %v2269
        %v2362 = vunpack.c.h.b16 %v2269
        %v2363 = vunpack.c.l.b16 %v2270
        %v2364 = vunpack.c.h.b16 %v2270
        %v2365 = vunpack.c.l.b16 %v2271
        %v2366 = vunpack.c.h.b16 %v2271
        %v2367 = vunpack.c.l.b16 %v2272
        %v2368 = vunpack.c.h.b16 %v2272
        %v2369 = vpack.c.b16 %v2307, %v2305
        %v2370 = vpack.c.b16 %v2308, %v2306
        %v2371 = vpack.c.b16 %v2311, %v2309
        %v2372 = vpack.c.b16 %v2312, %v2310
        %v2373 = vpack.c.b16 %v2315, %v2313
        %v2374 = vpack.c.b16 %v2316, %v2314
        %v2375 = vpack.c.b16 %v2319, %v2317
        %v2376 = vpack.c.b16 %v2320, %v2318
        %v2377 = vpack.c.b16 %v2323, %v2321
        %v2378 = vpack.c.b16 %v2324, %v2322
        %v2379 = vpack.c.b16 %v2327, %v2325
        %v2380 = vpack.c.b16 %v2328, %v2326
        %v2381 = vpack.c.b16 %v2331, %v2329
        %v2382 = vpack.c.b16 %v2332, %v2330
        %v2383 = vpack.c.b16 %v2335, %v2333
        %v2384 = vpack.c.b16 %v2336, %v2334
        %v2385 = vpack.c.b16 %v2339, %v2337
        %v2386 = vpack.c.b16 %v2340, %v2338
        %v2387 = vpack.c.b16 %v2343, %v2341
        %v2388 = vpack.c.b16 %v2344, %v2342
        %v2389 = vpack.c.b16 %v2347, %v2345
        %v2390 = vpack.c.b16 %v2348, %v2346
        %v2391 = vpack.c.b16 %v2351, %v2349
        %v2392 = vpack.c.b16 %v2352, %v2350
        %v2393 = vpack.c.b16 %v2355, %v2353
        %v2394 = vpack.c.b16 %v2356, %v2354
        %v2395 = vpack.c.b16 %v2359, %v2357
        %v2396 = vpack.c.b16 %v2360, %v2358
        %v2397 = vpack.c.b16 %v2363, %v2361
        %v2398 = vpack.c.b16 %v2364, %v2362
        %v2399 = vpack.c.b16 %v2367, %v2365
        %v2400 = vpack.c.b16 %v2368, %v2366
        %2433 = vmatpush.bf16.msra.mxu0 %v2383
        %2434 = vmatpush.bf16.msra.mxu0 %v2381
        %2435 = vmatpush.bf16.msra.mxu0 %v2379
        %2436 = vmatpush.bf16.msra.mxu0 %v2377
        %2437 = vmatpush.bf16.msra.mxu0 %v2375
        %2438 = vmatpush.bf16.msra.mxu0 %v2373
        %2439 = vmatpush.bf16.msra.mxu0 %v2371
        %2440 = vmatpush.bf16.msra.mxu0 %v2369
        %2441 = vmatmul.bf16.gmra.mxu0 %v628
        %v2442 = vpop.f32.mrf.mxu0
        %v2443 = vadd.f32 0.0, %v2442
        %v2444 = vpop.f32.mrf.mxu0
        %2445 = vdwg.mxu0
        %2446 = vmatpush.bf16.msra.mxu0 %v2399
        %2447 = vmatpush.bf16.msra.mxu0 %v2397
        %2448 = vmatpush.bf16.msra.mxu0 %v2395
        %2449 = vmatpush.bf16.msra.mxu0 %v2393
        %2450 = vmatpush.bf16.msra.mxu0 %v2391
        %2451 = vmatpush.bf16.msra.mxu0 %v2389
        %2452 = vmatpush.bf16.msra.mxu0 %v2387
        %2453 = vmatpush.bf16.msra.mxu0 %v2385
        %2454 = vmatmul.bf16.gmra.mxu0 %v629
        %v2455 = vpop.f32.mrf.mxu0
        %v2456 = vadd.f32 %v2443, %v2455
        %v2457 = vpop.f32.mrf.mxu0
        %2458 = vdwg.mxu0
        %2459 = vmatpush.bf16.msra.mxu0 %v2384
        %2460 = vmatpush.bf16.msra.mxu0 %v2382
        %2461 = vmatpush.bf16.msra.mxu0 %v2380
        %2462 = vmatpush.bf16.msra.mxu0 %v2378
        %2463 = vmatpush.bf16.msra.mxu0 %v2376
        %2464 = vmatpush.bf16.msra.mxu0 %v2374
        %2465 = vmatpush.bf16.msra.mxu0 %v2372
        %2466 = vmatpush.bf16.msra.mxu0 %v2370
        %2467 = vmatmul.bf16.gmra.mxu0 %v628
        %v2468 = vpop.f32.mrf.mxu0
        %v2469 = vadd.f32 0.0, %v2468
        %v2470 = vpop.f32.mrf.mxu0
        %2471 = vdwg.mxu0
        %2472 = vmatpush.bf16.msra.mxu0 %v2400
        %2473 = vmatpush.bf16.msra.mxu0 %v2398
        %2474 = vmatpush.bf16.msra.mxu0 %v2396
        %2475 = vmatpush.bf16.msra.mxu0 %v2394
        %2476 = vmatpush.bf16.msra.mxu0 %v2392
        %2477 = vmatpush.bf16.msra.mxu0 %v2390
        %2478 = vmatpush.bf16.msra.mxu0 %v2388
        %2479 = vmatpush.bf16.msra.mxu0 %v2386
        %2480 = vmatmul.bf16.gmra.mxu0 %v629
        %v2481 = vpop.f32.mrf.mxu0
        %v2482 = vadd.f32 %v2469, %v2481
        %v2483 = vpop.f32.mrf.mxu0
        %2484 = vdwg.mxu0
        %v2487 = vrot.slane %v2482, 7
        %v2488 = vsel %vm595, %v2456, %v2487
        %s2490 = scalar_lea.vmem [#allocation2], 6
        %2491 = vst.msk [vmem:[%s2490] ss:$8 sm:$0x3] %vm882, %v2488
        %2492 = vst.msk [vmem:[%s2490] ss:$8 sm:$0x0] %vm882, %v2488
        %v2493 = vmul.f32 %v2456, %v2456
        %v2494 = vmul.f32 %v2482, %v2482
        %v2495 = vsel %vm595, %v2493, 0.0
        %v2496 = vsel %vm595, %v2494, 0.0
        %v2497 = vadd.f32 %v2495, %v2496
        %2498 = vadd.xlane.f32.xlu0 %v2497
        %v2499 = vpop.xlane.xlu0 %2498
        %v2500 = vadd.f32 %v2232, %v2499
        %v2501 = vand.u32 2147483647, %v2456
        %v2502 = vand.u32 2147483647, %v2482
        %v2503 = vsel %vm595, %v2501, 0.0
        %v2504 = vsel %vm595, %v2502, 0.0
        %v2505 = vadd.f32 %v2503, %v2504
        %2506 = vadd.xlane.f32.xlu0 %v2505
        %v2507 = vpop.xlane.xlu0 %2506
        %v2508 = vadd.f32 %v2240, %v2507
        %v2509 = vld [vmem:[#allocation3 + $0x38] sm:$0xff]
        %v2510 = vld [vmem:[#allocation3 + $0x78] sm:$0xff]
        %v2511 = vld [vmem:[#allocation3 + $0xb8] sm:$0xff]
        %v2512 = vld [vmem:[#allocation3 + $0xf8] sm:$0xff]
        %v2513 = vld [vmem:[#allocation3 + $0x138] sm:$0xff]
        %v2514 = vld [vmem:[#allocation3 + $0x178] sm:$0xff]
        %v2515 = vld [vmem:[#allocation3 + $0x1b8] sm:$0xff]
        %v2516 = vld [vmem:[#allocation3 + $0x1f8] sm:$0xff]
        %v2517 = vld [vmem:[#allocation3 + $0x238] sm:$0xff]
        %v2518 = vld [vmem:[#allocation3 + $0x278] sm:$0xff]
        %v2519 = vld [vmem:[#allocation3 + $0x2b8] sm:$0xff]
        %v2520 = vld [vmem:[#allocation3 + $0x2f8] sm:$0xff]
        %v2521 = vld [vmem:[#allocation3 + $0x338] sm:$0xff]
        %v2522 = vld [vmem:[#allocation3 + $0x378] sm:$0xff]
        %v2523 = vld [vmem:[#allocation3 + $0x3b8] sm:$0xff]
        %v2524 = vld [vmem:[#allocation3 + $0x3f8] sm:$0xff]
        %v2525 = vld [vmem:[#allocation3 + $0x438] sm:$0xff]
        %v2526 = vld [vmem:[#allocation3 + $0x478] sm:$0xff]
        %v2527 = vld [vmem:[#allocation3 + $0x4b8] sm:$0xff]
        %v2528 = vld [vmem:[#allocation3 + $0x4f8] sm:$0xff]
        %v2529 = vld [vmem:[#allocation3 + $0x538] sm:$0xff]
        %v2530 = vld [vmem:[#allocation3 + $0x578] sm:$0xff]
        %v2531 = vld [vmem:[#allocation3 + $0x5b8] sm:$0xff]
        %v2532 = vld [vmem:[#allocation3 + $0x5f8] sm:$0xff]
        %v2533 = vld [vmem:[#allocation3 + $0x638] sm:$0xff]
        %v2534 = vld [vmem:[#allocation3 + $0x678] sm:$0xff]
        %v2535 = vld [vmem:[#allocation3 + $0x6b8] sm:$0xff]
        %v2536 = vld [vmem:[#allocation3 + $0x6f8] sm:$0xff]
        %v2537 = vld [vmem:[#allocation3 + $0x738] sm:$0xff]
        %v2538 = vld [vmem:[#allocation3 + $0x778] sm:$0xff]
        %v2539 = vld [vmem:[#allocation3 + $0x7b8] sm:$0xff]
        %v2540 = vld [vmem:[#allocation3 + $0x7f8] sm:$0xff]
        %v2573 = vunpack.c.l.b16 %v2509
        %v2574 = vunpack.c.h.b16 %v2509
        %v2575 = vunpack.c.l.b16 %v2510
        %v2576 = vunpack.c.h.b16 %v2510
        %v2577 = vunpack.c.l.b16 %v2511
        %v2578 = vunpack.c.h.b16 %v2511
        %v2579 = vunpack.c.l.b16 %v2512
        %v2580 = vunpack.c.h.b16 %v2512
        %v2581 = vunpack.c.l.b16 %v2513
        %v2582 = vunpack.c.h.b16 %v2513
        %v2583 = vunpack.c.l.b16 %v2514
        %v2584 = vunpack.c.h.b16 %v2514
        %v2585 = vunpack.c.l.b16 %v2515
        %v2586 = vunpack.c.h.b16 %v2515
        %v2587 = vunpack.c.l.b16 %v2516
        %v2588 = vunpack.c.h.b16 %v2516
        %v2589 = vunpack.c.l.b16 %v2517
        %v2590 = vunpack.c.h.b16 %v2517
        %v2591 = vunpack.c.l.b16 %v2518
        %v2592 = vunpack.c.h.b16 %v2518
        %v2593 = vunpack.c.l.b16 %v2519
        %v2594 = vunpack.c.h.b16 %v2519
        %v2595 = vunpack.c.l.b16 %v2520
        %v2596 = vunpack.c.h.b16 %v2520
        %v2597 = vunpack.c.l.b16 %v2521
        %v2598 = vunpack.c.h.b16 %v2521
        %v2599 = vunpack.c.l.b16 %v2522
        %v2600 = vunpack.c.h.b16 %v2522
        %v2601 = vunpack.c.l.b16 %v2523
        %v2602 = vunpack.c.h.b16 %v2523
        %v2603 = vunpack.c.l.b16 %v2524
        %v2604 = vunpack.c.h.b16 %v2524
        %v2605 = vunpack.c.l.b16 %v2525
        %v2606 = vunpack.c.h.b16 %v2525
        %v2607 = vunpack.c.l.b16 %v2526
        %v2608 = vunpack.c.h.b16 %v2526
        %v2609 = vunpack.c.l.b16 %v2527
        %v2610 = vunpack.c.h.b16 %v2527
        %v2611 = vunpack.c.l.b16 %v2528
        %v2612 = vunpack.c.h.b16 %v2528
        %v2613 = vunpack.c.l.b16 %v2529
        %v2614 = vunpack.c.h.b16 %v2529
        %v2615 = vunpack.c.l.b16 %v2530
        %v2616 = vunpack.c.h.b16 %v2530
        %v2617 = vunpack.c.l.b16 %v2531
        %v2618 = vunpack.c.h.b16 %v2531
        %v2619 = vunpack.c.l.b16 %v2532
        %v2620 = vunpack.c.h.b16 %v2532
        %v2621 = vunpack.c.l.b16 %v2533
        %v2622 = vunpack.c.h.b16 %v2533
        %v2623 = vunpack.c.l.b16 %v2534
        %v2624 = vunpack.c.h.b16 %v2534
        %v2625 = vunpack.c.l.b16 %v2535
        %v2626 = vunpack.c.h.b16 %v2535
        %v2627 = vunpack.c.l.b16 %v2536
        %v2628 = vunpack.c.h.b16 %v2536
        %v2629 = vunpack.c.l.b16 %v2537
        %v2630 = vunpack.c.h.b16 %v2537
        %v2631 = vunpack.c.l.b16 %v2538
        %v2632 = vunpack.c.h.b16 %v2538
        %v2633 = vunpack.c.l.b16 %v2539
        %v2634 = vunpack.c.h.b16 %v2539
        %v2635 = vunpack.c.l.b16 %v2540
        %v2636 = vunpack.c.h.b16 %v2540
        %v2637 = vpack.c.b16 %v2575, %v2573
        %v2638 = vpack.c.b16 %v2576, %v2574
        %v2639 = vpack.c.b16 %v2579, %v2577
        %v2640 = vpack.c.b16 %v2580, %v2578
        %v2641 = vpack.c.b16 %v2583, %v2581
        %v2642 = vpack.c.b16 %v2584, %v2582
        %v2643 = vpack.c.b16 %v2587, %v2585
        %v2644 = vpack.c.b16 %v2588, %v2586
        %v2645 = vpack.c.b16 %v2591, %v2589
        %v2646 = vpack.c.b16 %v2592, %v2590
        %v2647 = vpack.c.b16 %v2595, %v2593
        %v2648 = vpack.c.b16 %v2596, %v2594
        %v2649 = vpack.c.b16 %v2599, %v2597
        %v2650 = vpack.c.b16 %v2600, %v2598
        %v2651 = vpack.c.b16 %v2603, %v2601
        %v2652 = vpack.c.b16 %v2604, %v2602
        %v2653 = vpack.c.b16 %v2607, %v2605
        %v2654 = vpack.c.b16 %v2608, %v2606
        %v2655 = vpack.c.b16 %v2611, %v2609
        %v2656 = vpack.c.b16 %v2612, %v2610
        %v2657 = vpack.c.b16 %v2615, %v2613
        %v2658 = vpack.c.b16 %v2616, %v2614
        %v2659 = vpack.c.b16 %v2619, %v2617
        %v2660 = vpack.c.b16 %v2620, %v2618
        %v2661 = vpack.c.b16 %v2623, %v2621
        %v2662 = vpack.c.b16 %v2624, %v2622
        %v2663 = vpack.c.b16 %v2627, %v2625
        %v2664 = vpack.c.b16 %v2628, %v2626
        %v2665 = vpack.c.b16 %v2631, %v2629
        %v2666 = vpack.c.b16 %v2632, %v2630
        %v2667 = vpack.c.b16 %v2635, %v2633
        %v2668 = vpack.c.b16 %v2636, %v2634
        %2701 = vmatpush.bf16.msra.mxu0 %v2651
        %2702 = vmatpush.bf16.msra.mxu0 %v2649
        %2703 = vmatpush.bf16.msra.mxu0 %v2647
        %2704 = vmatpush.bf16.msra.mxu0 %v2645
        %2705 = vmatpush.bf16.msra.mxu0 %v2643
        %2706 = vmatpush.bf16.msra.mxu0 %v2641
        %2707 = vmatpush.bf16.msra.mxu0 %v2639
        %2708 = vmatpush.bf16.msra.mxu0 %v2637
        %2709 = vmatmul.bf16.gmra.mxu0 %v628
        %v2710 = vpop.f32.mrf.mxu0
        %v2711 = vadd.f32 0.0, %v2710
        %v2712 = vpop.f32.mrf.mxu0
        %2713 = vdwg.mxu0
        %2714 = vmatpush.bf16.msra.mxu0 %v2667
        %2715 = vmatpush.bf16.msra.mxu0 %v2665
        %2716 = vmatpush.bf16.msra.mxu0 %v2663
        %2717 = vmatpush.bf16.msra.mxu0 %v2661
        %2718 = vmatpush.bf16.msra.mxu0 %v2659
        %2719 = vmatpush.bf16.msra.mxu0 %v2657
        %2720 = vmatpush.bf16.msra.mxu0 %v2655
        %2721 = vmatpush.bf16.msra.mxu0 %v2653
        %2722 = vmatmul.bf16.gmra.mxu0 %v629
        %v2723 = vpop.f32.mrf.mxu0
        %v2724 = vadd.f32 %v2711, %v2723
        %v2725 = vpop.f32.mrf.mxu0
        %2726 = vdwg.mxu0
        %2727 = vmatpush.bf16.msra.mxu0 %v2652
        %2728 = vmatpush.bf16.msra.mxu0 %v2650
        %2729 = vmatpush.bf16.msra.mxu0 %v2648
        %2730 = vmatpush.bf16.msra.mxu0 %v2646
        %2731 = vmatpush.bf16.msra.mxu0 %v2644
        %2732 = vmatpush.bf16.msra.mxu0 %v2642
        %2733 = vmatpush.bf16.msra.mxu0 %v2640
        %2734 = vmatpush.bf16.msra.mxu0 %v2638
        %2735 = vmatmul.bf16.gmra.mxu0 %v628
        %v2736 = vpop.f32.mrf.mxu0
        %v2737 = vadd.f32 0.0, %v2736
        %v2738 = vpop.f32.mrf.mxu0
        %2739 = vdwg.mxu0
        %2740 = vmatpush.bf16.msra.mxu0 %v2668
        %2741 = vmatpush.bf16.msra.mxu0 %v2666
        %2742 = vmatpush.bf16.msra.mxu0 %v2664
        %2743 = vmatpush.bf16.msra.mxu0 %v2662
        %2744 = vmatpush.bf16.msra.mxu0 %v2660
        %2745 = vmatpush.bf16.msra.mxu0 %v2658
        %2746 = vmatpush.bf16.msra.mxu0 %v2656
        %2747 = vmatpush.bf16.msra.mxu0 %v2654
        %2748 = vmatmul.bf16.gmra.mxu0 %v629
        %v2749 = vpop.f32.mrf.mxu0
        %v2750 = vadd.f32 %v2737, %v2749
        %v2751 = vpop.f32.mrf.mxu0
        %2752 = vdwg.mxu0
        %v2755 = vrot.slane %v2750, 7
        %v2756 = vsel %vm595, %v2724, %v2755
        %s2758 = scalar_lea.vmem [#allocation2], 7
        %2759 = vst.msk [vmem:[%s2758] ss:$8 sm:$0x3] %vm882, %v2756
        %2760 = vst.msk [vmem:[%s2758] ss:$8 sm:$0x0] %vm882, %v2756
        %v2761 = vmul.f32 %v2724, %v2724
        %v2762 = vmul.f32 %v2750, %v2750
        %v2763 = vsel %vm595, %v2761, 0.0
        %v2764 = vsel %vm595, %v2762, 0.0
        %v2765 = vadd.f32 %v2763, %v2764
        %2766 = vadd.xlane.f32.xlu0 %v2765
        %v2767 = vpop.xlane.xlu0 %2766
        %v2768 = vadd.f32 %v2500, %v2767
        %v2769 = vand.u32 2147483647, %v2724
        %v2770 = vand.u32 2147483647, %v2750
        %v2771 = vsel %vm595, %v2769, 0.0
        %v2772 = vsel %vm595, %v2770, 0.0
        %v2773 = vadd.f32 %v2771, %v2772
        %2774 = vadd.xlane.f32.xlu0 %v2773
        %v2775 = vpop.xlane.xlu0 %2774
        %v2776 = vadd.f32 %v2508, %v2775
        %v2777 = vrsqrt.pop %v2768
        %v2778 = vmul.f32 %v2777, %v2768
        %v2779 = vmul.f32 %v2778, %v2777
        %v2780 = vmul.f32 0.5, %v2779
        %v2781 = vsub.f32 1.5, %v2780
        %v2782 = vmul.f32 %v2777, %v2781
        %v2783 = vmul.f32 %v2768, %v2782
        %vm2784 = vcmp.eq.f32.partialorder %v2768, inf
        %v2785 = vsel %vm2784, %v2768, %v2783
        %vm2786 = vcmp.eq.f32.partialorder %v2768, 0.0
        %v2787 = vand.u32 %v2768, 2147483648
        %v2788 = vsel %vm2786, %v2787, %v2785
        %v2789 = vmax.f32 %v2788, 1e-15
        %v2790 = vrcp.pop %v622
        %v2791 = vmul.f32 %v622, %v2790
        %v2792 = vsub.f32 1.0, %v2791
        %v2793 = vmul.f32 %v2790, %v2792
        %v2794 = vadd.f32 %v2790, %v2793
        %vm2795 = vweird.f32 %v622
        %vm2796 = vweird.f32 %v2790
        %vm2797 = vmor %vm2795, %vm2796
        %v2798 = vsel %vm2797, %v2790, %v2794
        %v2799 = vand.u32 2147483647, %v622
        %vm2800 = vcmp.eq.f32.partialorder %v2799, 8.507059e+37
        %v2801 = vand.u32 %v622, 2147483648
        %v2802 = vor.u32 1.1754944e-38, %v2801
        %v2803 = vsel %vm2800, %v2802, %v2798
        %v2804 = vmul.f32 %v2789, %v2803
        %v2805 = vmax.f32 %v622, -0.9999999
        %v2806 = vmin.f32 %v2805, 0.9999999
        %v2807 = vadd.f32 %v2806, 1.0
        %v2808 = vlog2.pop %v2807
        %v2809 = vmul.f32 %v2808, 0.6931472
        %v2810 = vsub.f32 1.0, %v2806
        %v2811 = vlog2.pop %v2810
        %v2812 = vmul.f32 %v2811, 0.6931472
        %v2813 = vsub.f32 %v2809, %v2812
        %v2814 = vmul.f32 %v2813, 0.5
        %v2815 = vmul.f32 %v2804, %v2814
        %v2816 = vtanh.pop %v2815
        %v2817 = vrcp.pop %v2789
        %v2818 = vmul.f32 %v2789, %v2817
        %v2819 = vsub.f32 1.0, %v2818
        %v2820 = vmul.f32 %v2817, %v2819
        %v2821 = vadd.f32 %v2817, %v2820
        %vm2822 = vweird.f32 %v2789
        %vm2823 = vweird.f32 %v2817
        %vm2824 = vmor %vm2822, %vm2823
        %v2825 = vsel %vm2824, %v2817, %v2821
        %v2826 = vand.u32 2147483647, %v2789
        %vm2827 = vcmp.eq.f32.partialorder %v2826, 8.507059e+37
        %v2828 = vand.u32 %v2789, 2147483648
        %v2829 = vor.u32 1.1754944e-38, %v2828
        %v2830 = vsel %vm2827, %v2829, %v2825
        %v2831 = vmul.f32 %v2816, %v2830
        %vm2832 = vcmp.eq.f32.partialorder %v2776, 0.0
        %v2833 = vsel %vm2832, 0.0, %v2831
        %v2834 = vmul.f32 %v2833, %v2788
        %v2835 = vmax.f32 %v2834, 1e-15
        %vm2836 = vcmp.gt.f32.partialorder %v2835, 0.996
        %v2837 = vrcp.pop %v2835
        %v2838 = vmul.f32 %v2837, 0.996
        %v2839 = vsel %vm2836, %v2838, 1.0
        %v2840 = vmul.f32 %v2833, %v2839
        %v2841 = vmul.f32 %v516, %v590
        %v2842 = vmul.f32 %v556, %v591
        %v2843 = vmul.f32 %v2841, %v590
        %v2844 = vmul.f32 %v2842, %v591
        %v2845 = vsub.f32 1.0, %v2843
        %v2846 = vsub.f32 1.0, %v2844
        %v2847 = vmax.f32 %v2845, 1e-15
        %v2848 = vmax.f32 %v2846, 1e-15
        %v2849 = vrcp.pop %v2847
        %v2850 = vmul.f32 %v2847, %v2849
        %v2851 = vsub.f32 1.0, %v2850
        %v2852 = vmul.f32 %v2849, %v2851
        %v2853 = vadd.f32 %v2849, %v2852
        %vm2854 = vweird.f32 %v2847
        %vm2855 = vweird.f32 %v2849
        %vm2856 = vmor %vm2854, %vm2855
        %v2857 = vsel %vm2856, %v2849, %v2853
        %v2858 = vand.u32 2147483647, %v2847
        %vm2859 = vcmp.eq.f32.partialorder %v2858, 8.507059e+37
        %v2860 = vand.u32 %v2847, 2147483648
        %v2861 = vor.u32 1.1754944e-38, %v2860
        %v2862 = vsel %vm2859, %v2861, %v2857
        %v2863 = vmul.f32 2.0, %v2862
        %v2864 = vrcp.pop %v2848
        %v2865 = vmul.f32 %v2848, %v2864
        %v2866 = vsub.f32 1.0, %v2865
        %v2867 = vmul.f32 %v2864, %v2866
        %v2868 = vadd.f32 %v2864, %v2867
        %vm2869 = vweird.f32 %v2848
        %vm2870 = vweird.f32 %v2864
        %vm2871 = vmor %vm2869, %vm2870
        %v2872 = vsel %vm2871, %v2864, %v2868
        %v2873 = vand.u32 2147483647, %v2848
        %vm2874 = vcmp.eq.f32.partialorder %v2873, 8.507059e+37
        %v2875 = vand.u32 %v2848, 2147483648
        %v2876 = vor.u32 1.1754944e-38, %v2875
        %v2877 = vsel %vm2874, %v2876, %v2872
        %v2878 = vmul.f32 2.0, %v2877
        %v2879 = vmul.f32 %v2863, %v624
        %v2880 = vmul.f32 %v2878, %v625
        %v2881 = vld [vmem:[#allocation2] sm:$0xff]
        %v2882 = vld [vmem:[#allocation2 + $0x8] sm:$0xff]
        %v2883 = vld [vmem:[%s399] sm:$0xff]
        %v2884 = vld [vmem:[%s399 + $0x8] sm:$0xff]
        %v2885 = vmul.f32 %v2881, %v2883
        %v2886 = vmul.f32 %v2882, %v2884
        %v2887 = vperm.slane %v2879, 0
        %v2888 = vperm.slane %v2880, 0
        %v2889 = vmul.f32 %v2885, %v2887
        %v2890 = vmul.f32 %v2886, %v2888
        %v2891 = vld [vmem:[%s5] sm:$0xff]
        %v2892 = vld [vmem:[%s5 + $0x8] sm:$0xff]
        %v2893 = vld [vmem:[%s5 + $0x10] sm:$0xff]
        %v2894 = vld [vmem:[%s5 + $0x18] sm:$0xff]
        %v2895 = vld [vmem:[%s5 + $0x20] sm:$0xff]
        %v2896 = vld [vmem:[%s5 + $0x28] sm:$0xff]
        %v2897 = vld [vmem:[%s5 + $0x30] sm:$0xff]
        %v2898 = vld [vmem:[%s5 + $0x38] sm:$0xff]
        %v2899 = vld [vmem:[%s5 + $0x40] sm:$0xff]
        %v2900 = vld [vmem:[%s5 + $0x48] sm:$0xff]
        %v2901 = vld [vmem:[%s5 + $0x50] sm:$0xff]
        %v2902 = vld [vmem:[%s5 + $0x58] sm:$0xff]
        %v2903 = vld [vmem:[%s5 + $0x60] sm:$0xff]
        %v2904 = vld [vmem:[%s5 + $0x68] sm:$0xff]
        %v2905 = vld [vmem:[%s5 + $0x70] sm:$0xff]
        %v2906 = vld [vmem:[%s5 + $0x78] sm:$0xff]
        %v2907 = vld [vmem:[%s5 + $0x80] sm:$0xff]
        %v2908 = vld [vmem:[%s5 + $0x88] sm:$0xff]
        %v2909 = vld [vmem:[%s5 + $0x90] sm:$0xff]
        %v2910 = vld [vmem:[%s5 + $0x98] sm:$0xff]
        %v2911 = vld [vmem:[%s5 + $0xa0] sm:$0xff]
        %v2912 = vld [vmem:[%s5 + $0xa8] sm:$0xff]
        %v2913 = vld [vmem:[%s5 + $0xb0] sm:$0xff]
        %v2914 = vld [vmem:[%s5 + $0xb8] sm:$0xff]
        %v2915 = vld [vmem:[%s5 + $0xc0] sm:$0xff]
        %v2916 = vld [vmem:[%s5 + $0xc8] sm:$0xff]
        %v2917 = vld [vmem:[%s5 + $0xd0] sm:$0xff]
        %v2918 = vld [vmem:[%s5 + $0xd8] sm:$0xff]
        %v2919 = vld [vmem:[%s5 + $0xe0] sm:$0xff]
        %v2920 = vld [vmem:[%s5 + $0xe8] sm:$0xff]
        %v2921 = vld [vmem:[%s5 + $0xf0] sm:$0xff]
        %v2922 = vld [vmem:[%s5 + $0xf8] sm:$0xff]
        %2923 = vmatpush.msra.mxu0 %v2906
        %2924 = vmatpush.msra.mxu0 %v2905
        %2925 = vmatpush.msra.mxu0 %v2904
        %2926 = vmatpush.msra.mxu0 %v2903
        %2927 = vmatpush.msra.mxu0 %v2902
        %2928 = vmatpush.msra.mxu0 %v2901
        %2929 = vmatpush.msra.mxu0 %v2900
        %2930 = vmatpush.msra.mxu0 %v2899
        %2931 = vmatpush.msra.mxu0 %v2898
        %2932 = vmatpush.msra.mxu0 %v2897
        %2933 = vmatpush.msra.mxu0 %v2896
        %2934 = vmatpush.msra.mxu0 %v2895
        %2935 = vmatpush.msra.mxu0 %v2894
        %2936 = vmatpush.msra.mxu0 %v2893
        %2937 = vmatpush.msra.mxu0 %v2892
        %2938 = vmatpush.msra.mxu0 %v2891
        %2939 = vmatmul.f32.gmra.mxu0 %v2889
        %v2940 = vpop.f32.mrf.mxu0
        %v2941 = vadd.f32 0.0, %v2940
        %2942 = vdwg.mxu0
        %2943 = vmatpush.msra.mxu0 %v2922
        %2944 = vmatpush.msra.mxu0 %v2921
        %2945 = vmatpush.msra.mxu0 %v2920
        %2946 = vmatpush.msra.mxu0 %v2919
        %2947 = vmatpush.msra.mxu0 %v2918
        %2948 = vmatpush.msra.mxu0 %v2917
        %2949 = vmatpush.msra.mxu0 %v2916
        %2950 = vmatpush.msra.mxu0 %v2915
        %2951 = vmatpush.msra.mxu0 %v2914
        %2952 = vmatpush.msra.mxu0 %v2913
        %2953 = vmatpush.msra.mxu0 %v2912
        %2954 = vmatpush.msra.mxu0 %v2911
        %2955 = vmatpush.msra.mxu0 %v2910
        %2956 = vmatpush.msra.mxu0 %v2909
        %2957 = vmatpush.msra.mxu0 %v2908
        %2958 = vmatpush.msra.mxu0 %v2907
        %2959 = vmatmul.f32.gmra.mxu0 %v2890
        %v2960 = vpop.f32.mrf.mxu0
        %v2961 = vadd.f32 %v2941, %v2960
        %2962 = vdwg.mxu0
        %v2963 = vsub.f32 %v2863, 1.0
        %v2964 = vsub.f32 %v2878, 1.0
        %v2965 = vperm.slane %v2963, 0
        %v2966 = vperm.slane %v2964, 0
        %v2967 = vmul.f32 %v2885, %v2965
        %v2968 = vmul.f32 %v2886, %v2966
        %2969 = vmatpush.msra.mxu0 %v2906
        %2970 = vmatpush.msra.mxu0 %v2905
        %2971 = vmatpush.msra.mxu0 %v2904
        %2972 = vmatpush.msra.mxu0 %v2903
        %2973 = vmatpush.msra.mxu0 %v2902
        %2974 = vmatpush.msra.mxu0 %v2901
        %2975 = vmatpush.msra.mxu0 %v2900
        %2976 = vmatpush.msra.mxu0 %v2899
        %2977 = vmatpush.msra.mxu0 %v2898
        %2978 = vmatpush.msra.mxu0 %v2897
        %2979 = vmatpush.msra.mxu0 %v2896
        %2980 = vmatpush.msra.mxu0 %v2895
        %2981 = vmatpush.msra.mxu0 %v2894
        %2982 = vmatpush.msra.mxu0 %v2893
        %2983 = vmatpush.msra.mxu0 %v2892
        %2984 = vmatpush.msra.mxu0 %v2891
        %2985 = vmatmul.f32.gmra.mxu0 %v2967
        %v2986 = vpop.f32.mrf.mxu0
        %v2987 = vadd.f32 0.0, %v2986
        %2988 = vdwg.mxu0
        %2989 = vmatpush.msra.mxu0 %v2922
        %2990 = vmatpush.msra.mxu0 %v2921
        %2991 = vmatpush.msra.mxu0 %v2920
        %2992 = vmatpush.msra.mxu0 %v2919
        %2993 = vmatpush.msra.mxu0 %v2918
        %2994 = vmatpush.msra.mxu0 %v2917
        %2995 = vmatpush.msra.mxu0 %v2916
        %2996 = vmatpush.msra.mxu0 %v2915
        %2997 = vmatpush.msra.mxu0 %v2914
        %2998 = vmatpush.msra.mxu0 %v2913
        %2999 = vmatpush.msra.mxu0 %v2912
        %3000 = vmatpush.msra.mxu0 %v2911
        %3001 = vmatpush.msra.mxu0 %v2910
        %3002 = vmatpush.msra.mxu0 %v2909
        %3003 = vmatpush.msra.mxu0 %v2908
        %3004 = vmatpush.msra.mxu0 %v2907
        %3005 = vmatmul.f32.gmra.mxu0 %v2968
        %v3006 = vpop.f32.mrf.mxu0
        %v3007 = vadd.f32 %v2987, %v3006
        %3008 = vdwg.mxu0
        %v3009 = vperm.slane %v2840, 0
        %v3010 = vmul.f32 %v3009, %v2961
        %v3011 = vmul.f32 %v3009, %v3007
        %v3012 = vmax.f32 %v3011, 1e-15
        %v3013 = vrcp.pop %v3012
        %v3014 = vmul.f32 %v3012, %v3013
        %v3015 = vsub.f32 1.0, %v3014
        %v3016 = vmul.f32 %v3013, %v3015
        %v3017 = vadd.f32 %v3013, %v3016
        %vm3018 = vweird.f32 %v3012
        %vm3019 = vweird.f32 %v3013
        %vm3020 = vmor %vm3018, %vm3019
        %v3021 = vsel %vm3020, %v3013, %v3017
        %v3022 = vand.u32 2147483647, %v3012
        %vm3023 = vcmp.eq.f32.partialorder %v3022, 8.507059e+37
        %v3024 = vand.u32 %v3012, 2147483648
        %v3025 = vor.u32 1.1754944e-38, %v3024
        %v3026 = vsel %vm3023, %v3025, %v3021
        %v3027 = vmul.f32 %v3010, %v3026
        %v3028 = vmul.f32 %v3027, %v3027
        %vm3029 = vcmask 261120
        %v3030 = vsel %vm3029, %v3028, 0.0
        %3031 = vadd.xlane.f32.xlu0 %v3030
        %v3032 = vpop.xlane.xlu0 %3031
        %v3033 = vrsqrt.pop %v3032
        %v3034 = vmul.f32 %v3033, %v3032
        %v3035 = vmul.f32 %v3034, %v3033
        %v3036 = vmul.f32 0.5, %v3035
        %v3037 = vsub.f32 1.5, %v3036
        %v3038 = vmul.f32 %v3033, %v3037
        %v3039 = vmul.f32 %v3032, %v3038
        %vm3040 = vcmp.eq.f32.partialorder %v3032, inf
        %v3041 = vsel %vm3040, %v3032, %v3039
        %vm3042 = vcmp.eq.f32.partialorder %v3032, 0.0
        %v3043 = vand.u32 %v3032, 2147483648
        %v3044 = vsel %vm3042, %v3043, %v3041
        %v3045 = vmax.f32 %v3044, 1e-15
        %v3046 = vmax.f32 %v3045, -0.9999999
        %v3047 = vmin.f32 %v3046, 0.9999999
        %v3048 = vadd.f32 %v3047, 1.0
        %v3049 = vlog2.pop %v3048
        %v3050 = vmul.f32 %v3049, 0.6931472
        %v3051 = vsub.f32 1.0, %v3047
        %v3052 = vlog2.pop %v3051
        %v3053 = vmul.f32 %v3052, 0.6931472
        %v3054 = vsub.f32 %v3050, %v3053
        %v3055 = vmul.f32 %v3054, 0.5
        %v3056 = vmul.f32 %v3055, 0.5
        %v3057 = vtanh.pop %v3056
        %v3058 = vmul.f32 %v3057, %v3027
        %v3059 = vrcp.pop %v3045
        %v3060 = vmul.f32 %v3045, %v3059
        %v3061 = vsub.f32 1.0, %v3060
        %v3062 = vmul.f32 %v3059, %v3061
        %v3063 = vadd.f32 %v3059, %v3062
        %vm3064 = vweird.f32 %v3045
        %vm3065 = vweird.f32 %v3059
        %vm3066 = vmor %vm3064, %vm3065
        %v3067 = vsel %vm3066, %v3059, %v3063
        %v3068 = vand.u32 2147483647, %v3045
        %vm3069 = vcmp.eq.f32.partialorder %v3068, 8.507059e+37
        %v3070 = vand.u32 %v3045, 2147483648
        %v3071 = vor.u32 1.1754944e-38, %v3070
        %v3072 = vsel %vm3069, %v3071, %v3067
        %v3073 = vmul.f32 %v3058, %v3072
        %v3074 = vld [vmem:[%s6] sm:$0xff]
        %v3075 = vld [vmem:[%s6 + $0x8] sm:$0xff]
        %v3076 = vld [vmem:[%s6 + $0x10] sm:$0xff]
        %v3077 = vld [vmem:[%s6 + $0x18] sm:$0xff]
        %v3078 = vld [vmem:[%s6 + $0x20] sm:$0xff]
        %v3079 = vld [vmem:[%s6 + $0x28] sm:$0xff]
        %v3080 = vld [vmem:[%s6 + $0x30] sm:$0xff]
        %v3081 = vld [vmem:[%s6 + $0x38] sm:$0xff]
        %v3083 = vsel %vm3029, %v3073, 0
        %3085 = vmatpush.msra.mxu0 0.0
        %3086 = vmatpush.msra.mxu0 0.0
        %3087 = vmatpush.msra.mxu0 0.0
        %3088 = vmatpush.msra.mxu0 0.0
        %3089 = vmatpush.msra.mxu0 0.0
        %3090 = vmatpush.msra.mxu0 0.0
        %3091 = vmatpush.msra.mxu0 0.0
        %3092 = vmatpush.msra.mxu0 0.0
        %3093 = vmatpush.msra.mxu0 0.0
        %3094 = vmatpush.msra.mxu0 0.0
        %3095 = vmatpush.msra.mxu0 0.0
        %3096 = vmatpush.msra.mxu0 0.0
        %3097 = vmatpush.msra.mxu0 %v3080
        %3098 = vmatpush.msra.mxu0 %v3078
        %3099 = vmatpush.msra.mxu0 %v3076
        %3100 = vmatpush.msra.mxu0 %v3074
        %3101 = vmatmul.f32.gmra.mxu0 %v3083
        %v3102 = vpop.f32.mrf.mxu0
        %v3103 = vadd.f32 0.0, %v3102
        %3104 = vdwg.mxu0
        %3105 = vmatpush.msra.mxu0 0.0
        %3106 = vmatpush.msra.mxu0 0.0
        %3107 = vmatpush.msra.mxu0 0.0
        %3108 = vmatpush.msra.mxu0 0.0
        %3109 = vmatpush.msra.mxu0 0.0
        %3110 = vmatpush.msra.mxu0 0.0
        %3111 = vmatpush.msra.mxu0 0.0
        %3112 = vmatpush.msra.mxu0 0.0
        %3113 = vmatpush.msra.mxu0 0.0
        %3114 = vmatpush.msra.mxu0 0.0
        %3115 = vmatpush.msra.mxu0 0.0
        %3116 = vmatpush.msra.mxu0 0.0
        %3117 = vmatpush.msra.mxu0 %v3081
        %3118 = vmatpush.msra.mxu0 %v3079
        %3119 = vmatpush.msra.mxu0 %v3077
        %3120 = vmatpush.msra.mxu0 %v3075
        %3121 = vmatmul.f32.gmra.mxu0 %v3083
        %v3122 = vpop.f32.mrf.mxu0
        %v3123 = vadd.f32 0.0, %v3122
        %3124 = vdwg.mxu0
        %v3125 = vld [vmem:[%s7] sm:$0xff]
        %v3126 = vld [vmem:[%s7 + $0x8] sm:$0xff]
        %v3127 = vmul.f32 %v3125, %v3103
        %v3128 = vmul.f32 %v3126, %v3123
        %v3129 = vrot.slane %v3127, 4
        %v3130 = vadd.f32 %v3127, %v3129
        %v3131 = vrot.slane %v3130, 2
        %v3132 = vadd.f32 %v3130, %v3131
        %v3133 = vrot.slane %v3132, 1
        %v3134 = vadd.f32 %v3132, %v3133
        %v3135 = vrot.slane %v3128, 4
        %v3136 = vadd.f32 %v3128, %v3135
        %v3137 = vrot.slane %v3136, 2
        %v3138 = vadd.f32 %v3136, %v3137
        %v3139 = vrot.slane %v3138, 1
        %v3140 = vadd.f32 %v3138, %v3139
        %v3141 = vmul.f32 %v3134, %v3134
        %v3142 = vmul.f32 %v3140, %v3140
        %v3143 = vadd.f32 %v3141, %v3142
        %3144 = vadd.xlane.f32.xlu0 %v3143
        %v3145 = vpop.xlane.xlu0 %3144
        %v3146 = vrsqrt.pop %v3145
        %v3147 = vmul.f32 %v3146, %v3145
        %v3148 = vmul.f32 %v3147, %v3146
        %v3149 = vmul.f32 0.5, %v3148
        %v3150 = vsub.f32 1.5, %v3149
        %v3151 = vmul.f32 %v3146, %v3150
        %v3152 = vmul.f32 %v3145, %v3151
        %vm3153 = vcmp.eq.f32.partialorder %v3145, inf
        %v3154 = vsel %vm3153, %v3145, %v3152
        %vm3155 = vcmp.eq.f32.partialorder %v3145, 0.0
        %v3156 = vand.u32 %v3145, 2147483648
        %v3157 = vsel %vm3155, %v3156, %v3154
        %v3158 = vmax.f32 %v3157, 1e-15
        %v3159 = vld [vmem:[#allocation5] sm:$0xff]
        %v3160 = vld [vmem:[#allocation5 + $0x8] sm:$0xff]
        %v3161 = vld [vmem:[#allocation5 + $0x10] sm:$0xff]
        %v3162 = vld [vmem:[#allocation5 + $0x18] sm:$0xff]
        %v3163 = vld [vmem:[#allocation5 + $0x20] sm:$0xff]
        %v3164 = vld [vmem:[#allocation5 + $0x28] sm:$0xff]
        %v3165 = vld [vmem:[#allocation5 + $0x30] sm:$0xff]
        %v3166 = vld [vmem:[#allocation5 + $0x38] sm:$0xff]
        %v3167 = vld [vmem:[#allocation5 + $0x40] sm:$0xff]
        %v3168 = vld [vmem:[#allocation5 + $0x48] sm:$0xff]
        %v3169 = vld [vmem:[#allocation5 + $0x50] sm:$0xff]
        %v3170 = vld [vmem:[#allocation5 + $0x58] sm:$0xff]
        %v3171 = vld [vmem:[#allocation5 + $0x60] sm:$0xff]
        %v3172 = vld [vmem:[#allocation5 + $0x68] sm:$0xff]
        %v3173 = vld [vmem:[#allocation5 + $0x70] sm:$0xff]
        %v3174 = vld [vmem:[#allocation5 + $0x78] sm:$0xff]
        %v3175 = vld [vmem:[#allocation5 + $0x80] sm:$0xff]
        %v3176 = vld [vmem:[#allocation5 + $0x88] sm:$0xff]
        %v3177 = vld [vmem:[#allocation5 + $0x90] sm:$0xff]
        %v3178 = vld [vmem:[#allocation5 + $0x98] sm:$0xff]
        %v3179 = vld [vmem:[#allocation5 + $0xa0] sm:$0xff]
        %v3180 = vld [vmem:[#allocation5 + $0xa8] sm:$0xff]
        %v3181 = vld [vmem:[#allocation5 + $0xb0] sm:$0xff]
        %v3182 = vld [vmem:[#allocation5 + $0xb8] sm:$0xff]
        %v3183 = vld [vmem:[#allocation5 + $0xc0] sm:$0xff]
        %v3184 = vld [vmem:[#allocation5 + $0xc8] sm:$0xff]
        %v3185 = vld [vmem:[#allocation5 + $0xd0] sm:$0xff]
        %v3186 = vld [vmem:[#allocation5 + $0xd8] sm:$0xff]
        %v3187 = vld [vmem:[#allocation5 + $0xe0] sm:$0xff]
        %v3188 = vld [vmem:[#allocation5 + $0xe8] sm:$0xff]
        %v3189 = vld [vmem:[#allocation5 + $0xf0] sm:$0xff]
        %v3190 = vld [vmem:[#allocation5 + $0xf8] sm:$0xff]
        %v3191 = vld [vmem:[#allocation5 + $0x100] sm:$0xff]
        %v3192 = vld [vmem:[#allocation5 + $0x108] sm:$0xff]
        %v3193 = vld [vmem:[#allocation5 + $0x110] sm:$0xff]
        %v3194 = vld [vmem:[#allocation5 + $0x118] sm:$0xff]
        %v3195 = vld [vmem:[#allocation5 + $0x120] sm:$0xff]
        %v3196 = vld [vmem:[#allocation5 + $0x128] sm:$0xff]
        %v3197 = vld [vmem:[#allocation5 + $0x130] sm:$0xff]
        %v3198 = vld [vmem:[#allocation5 + $0x138] sm:$0xff]
        %v3199 = vld [vmem:[#allocation5 + $0x140] sm:$0xff]
        %v3200 = vld [vmem:[#allocation5 + $0x148] sm:$0xff]
        %v3201 = vld [vmem:[#allocation5 + $0x150] sm:$0xff]
        %v3202 = vld [vmem:[#allocation5 + $0x158] sm:$0xff]
        %v3203 = vld [vmem:[#allocation5 + $0x160] sm:$0xff]
        %v3204 = vld [vmem:[#allocation5 + $0x168] sm:$0xff]
        %v3205 = vld [vmem:[#allocation5 + $0x170] sm:$0xff]
        %v3206 = vld [vmem:[#allocation5 + $0x178] sm:$0xff]
        %v3207 = vld [vmem:[#allocation5 + $0x180] sm:$0xff]
        %v3208 = vld [vmem:[#allocation5 + $0x188] sm:$0xff]
        %v3209 = vld [vmem:[#allocation5 + $0x190] sm:$0xff]
        %v3210 = vld [vmem:[#allocation5 + $0x198] sm:$0xff]
        %v3211 = vld [vmem:[#allocation5 + $0x1a0] sm:$0xff]
        %v3212 = vld [vmem:[#allocation5 + $0x1a8] sm:$0xff]
        %v3213 = vld [vmem:[#allocation5 + $0x1b0] sm:$0xff]
        %v3214 = vld [vmem:[#allocation5 + $0x1b8] sm:$0xff]
        %v3215 = vld [vmem:[#allocation5 + $0x1c0] sm:$0xff]
        %v3216 = vld [vmem:[#allocation5 + $0x1c8] sm:$0xff]
        %v3217 = vld [vmem:[#allocation5 + $0x1d0] sm:$0xff]
        %v3218 = vld [vmem:[#allocation5 + $0x1d8] sm:$0xff]
        %v3219 = vld [vmem:[#allocation5 + $0x1e0] sm:$0xff]
        %v3220 = vld [vmem:[#allocation5 + $0x1e8] sm:$0xff]
        %v3221 = vld [vmem:[#allocation5 + $0x1f0] sm:$0xff]
        %v3222 = vld [vmem:[#allocation5 + $0x1f8] sm:$0xff]
        %3223 = vmatpush.msra.mxu0 %v3189
        %3224 = vmatpush.msra.mxu0 %v3187
        %3225 = vmatpush.msra.mxu0 %v3185
        %3226 = vmatpush.msra.mxu0 %v3183
        %3227 = vmatpush.msra.mxu0 %v3181
        %3228 = vmatpush.msra.mxu0 %v3179
        %3229 = vmatpush.msra.mxu0 %v3177
        %3230 = vmatpush.msra.mxu0 %v3175
        %3231 = vmatpush.msra.mxu0 %v3173
        %3232 = vmatpush.msra.mxu0 %v3171
        %3233 = vmatpush.msra.mxu0 %v3169
        %3234 = vmatpush.msra.mxu0 %v3167
        %3235 = vmatpush.msra.mxu0 %v3165
        %3236 = vmatpush.msra.mxu0 %v3163
        %3237 = vmatpush.msra.mxu0 %v3161
        %3238 = vmatpush.msra.mxu0 %v3159
        %3239 = vmatmul.f32.gmra.mxu0 %v3134
        %v3240 = vpop.f32.mrf.mxu0
        %v3241 = vadd.f32 0.0, %v3240
        %3242 = vdwg.mxu0
        %3243 = vmatpush.msra.mxu0 %v3221
        %3244 = vmatpush.msra.mxu0 %v3219
        %3245 = vmatpush.msra.mxu0 %v3217
        %3246 = vmatpush.msra.mxu0 %v3215
        %3247 = vmatpush.msra.mxu0 %v3213
        %3248 = vmatpush.msra.mxu0 %v3211
        %3249 = vmatpush.msra.mxu0 %v3209
        %3250 = vmatpush.msra.mxu0 %v3207
        %3251 = vmatpush.msra.mxu0 %v3205
        %3252 = vmatpush.msra.mxu0 %v3203
        %3253 = vmatpush.msra.mxu0 %v3201
        %3254 = vmatpush.msra.mxu0 %v3199
        %3255 = vmatpush.msra.mxu0 %v3197
        %3256 = vmatpush.msra.mxu0 %v3195
        %3257 = vmatpush.msra.mxu0 %v3193
        %3258 = vmatpush.msra.mxu0 %v3191
        %3259 = vmatmul.f32.gmra.mxu0 %v3140
        %v3260 = vpop.f32.mrf.mxu0
        %v3261 = vadd.f32 %v3241, %v3260
        %3262 = vdwg.mxu0
        %3263 = vmatpush.msra.mxu0 %v3190
        %3264 = vmatpush.msra.mxu0 %v3188
        %3265 = vmatpush.msra.mxu0 %v3186
        %3266 = vmatpush.msra.mxu0 %v3184
        %3267 = vmatpush.msra.mxu0 %v3182
        %3268 = vmatpush.msra.mxu0 %v3180
        %3269 = vmatpush.msra.mxu0 %v3178
        %3270 = vmatpush.msra.mxu0 %v3176
        %3271 = vmatpush.msra.mxu0 %v3174
        %3272 = vmatpush.msra.mxu0 %v3172
        %3273 = vmatpush.msra.mxu0 %v3170
        %3274 = vmatpush.msra.mxu0 %v3168
        %3275 = vmatpush.msra.mxu0 %v3166
        %3276 = vmatpush.msra.mxu0 %v3164
        %3277 = vmatpush.msra.mxu0 %v3162
        %3278 = vmatpush.msra.mxu0 %v3160
        %3279 = vmatmul.f32.gmra.mxu0 %v3134
        %v3280 = vpop.f32.mrf.mxu0
        %v3281 = vadd.f32 0.0, %v3280
        %3282 = vdwg.mxu0
        %3283 = vmatpush.msra.mxu0 %v3222
        %3284 = vmatpush.msra.mxu0 %v3220
        %3285 = vmatpush.msra.mxu0 %v3218
        %3286 = vmatpush.msra.mxu0 %v3216
        %3287 = vmatpush.msra.mxu0 %v3214
        %3288 = vmatpush.msra.mxu0 %v3212
        %3289 = vmatpush.msra.mxu0 %v3210
        %3290 = vmatpush.msra.mxu0 %v3208
        %3291 = vmatpush.msra.mxu0 %v3206
        %3292 = vmatpush.msra.mxu0 %v3204
        %3293 = vmatpush.msra.mxu0 %v3202
        %3294 = vmatpush.msra.mxu0 %v3200
        %3295 = vmatpush.msra.mxu0 %v3198
        %3296 = vmatpush.msra.mxu0 %v3196
        %3297 = vmatpush.msra.mxu0 %v3194
        %3298 = vmatpush.msra.mxu0 %v3192
        %3299 = vmatmul.f32.gmra.mxu0 %v3140
        %v3300 = vpop.f32.mrf.mxu0
        %v3301 = vadd.f32 %v3281, %v3300
        %3302 = vdwg.mxu0
        %v3303 = vmul.f32 %v3261, %v3261
        %v3304 = vmul.f32 %v3301, %v3301
        %v3305 = vsel %vm595, %v3303, 0.0
        %v3306 = vsel %vm595, %v3304, 0.0
        %v3307 = vadd.f32 %v3305, %v3306
        %3308 = vadd.xlane.f32.xlu0 %v3307
        %v3309 = vpop.xlane.xlu0 %3308
        %v3310 = vand.u32 2147483647, %v3261
        %v3311 = vand.u32 2147483647, %v3301
        %v3312 = vsel %vm595, %v3310, 0.0
        %v3313 = vsel %vm595, %v3311, 0.0
        %v3314 = vadd.f32 %v3312, %v3313
        %3315 = vadd.xlane.f32.xlu0 %v3314
        %v3316 = vpop.xlane.xlu0 %3315
        %v3317 = vrsqrt.pop %v3309
        %v3318 = vmul.f32 %v3317, %v3309
        %v3319 = vmul.f32 %v3318, %v3317
        %v3320 = vmul.f32 0.5, %v3319
        %v3321 = vsub.f32 1.5, %v3320
        %v3322 = vmul.f32 %v3317, %v3321
        %v3323 = vmul.f32 %v3309, %v3322
        %vm3324 = vcmp.eq.f32.partialorder %v3309, inf
        %v3325 = vsel %vm3324, %v3309, %v3323
        %vm3326 = vcmp.eq.f32.partialorder %v3309, 0.0
        %v3327 = vand.u32 %v3309, 2147483648
        %v3328 = vsel %vm3326, %v3327, %v3325
        %v3329 = vmax.f32 %v3328, 1e-15
        %v3330 = vrcp.pop %v3158
        %v3331 = vmul.f32 %v3158, %v3330
        %v3332 = vsub.f32 1.0, %v3331
        %v3333 = vmul.f32 %v3330, %v3332
        %v3334 = vadd.f32 %v3330, %v3333
        %vm3335 = vweird.f32 %v3158
        %vm3336 = vweird.f32 %v3330
        %vm3337 = vmor %vm3335, %vm3336
        %v3338 = vsel %vm3337, %v3330, %v3334
        %v3339 = vand.u32 2147483647, %v3158
        %vm3340 = vcmp.eq.f32.partialorder %v3339, 8.507059e+37
        %v3341 = vand.u32 %v3158, 2147483648
        %v3342 = vor.u32 1.1754944e-38, %v3341
        %v3343 = vsel %vm3340, %v3342, %v3338
        %v3344 = vmul.f32 %v3329, %v3343
        %v3345 = vmax.f32 %v3158, -0.9999999
        %v3346 = vmin.f32 %v3345, 0.9999999
        %v3347 = vadd.f32 %v3346, 1.0
        %v3348 = vlog2.pop %v3347
        %v3349 = vmul.f32 %v3348, 0.6931472
        %v3350 = vsub.f32 1.0, %v3346
        %v3351 = vlog2.pop %v3350
        %v3352 = vmul.f32 %v3351, 0.6931472
        %v3353 = vsub.f32 %v3349, %v3352
        %v3354 = vmul.f32 %v3353, 0.5
        %v3355 = vmul.f32 %v3344, %v3354
        %v3356 = vtanh.pop %v3355
        %v3357 = vrcp.pop %v3329
        %v3358 = vmul.f32 %v3329, %v3357
        %v3359 = vsub.f32 1.0, %v3358
        %v3360 = vmul.f32 %v3357, %v3359
        %v3361 = vadd.f32 %v3357, %v3360
        %vm3362 = vweird.f32 %v3329
        %vm3363 = vweird.f32 %v3357
        %vm3364 = vmor %vm3362, %vm3363
        %v3365 = vsel %vm3364, %v3357, %v3361
        %v3366 = vand.u32 2147483647, %v3329
        %vm3367 = vcmp.eq.f32.partialorder %v3366, 8.507059e+37
        %v3368 = vand.u32 %v3329, 2147483648
        %v3369 = vor.u32 1.1754944e-38, %v3368
        %v3370 = vsel %vm3367, %v3369, %v3365
        %v3371 = vmul.f32 %v3356, %v3370
        %vm3372 = vcmp.eq.f32.partialorder %v3316, 0.0
        %v3373 = vsel %vm3372, 0.0, %v3371
        %v3374 = vmul.f32 %v3373, %v3328
        %v3375 = vmax.f32 %v3374, 1e-15
        %vm3376 = vcmp.gt.f32.partialorder %v3375, 0.996
        %v3377 = vrcp.pop %v3375
        %v3378 = vmul.f32 %v3377, 0.996
        %v3379 = vsel %vm3376, %v3378, 1.0
        %v3380 = vmul.f32 %v3373, %v3379
        %v3381 = vmul.f32 %v3374, %v3374
        %v3382 = vsel %vm3376, 0.992016, %v3381
        %v3383 = vsub.f32 1.0, %v3382
        %v3384 = vrcp.pop %v3383
        %v3385 = vadd.f32 %v3382, 1.0
        %v3386 = vmul.f32 %v3385, %v3384
        %vm3387 = vcmask 0
        %3388 = vst.msk [vmem:[%s402] sm:$0x1] %vm3387, %v3386
        %v3389 = vmul.f32 %v3380, 2.0
        %v3390 = vmul.f32 %v3389, %v3384
        %v3391 = vmul.f32 %v3390, %v3261
        %v3392 = vmul.f32 %v3390, %v3301
        %v3395 = vrot.slane %v3392, 7
        %v3396 = vsel %vm595, %v3391, %v3395
        %3398 = vst.msk [vmem:[%s406] sm:$0x3] %vm882, %v3396
        %p3399 = scmp.lt.s32.totalorder %s23, 3
        %s3400 = scalar_select %p3399, %s23, 3
        %s3401 = scalar_lea.vmem %s8, %s3400
        %p3402 = scmp.lt.s32.totalorder %s23, 3
        %s3403 = scalar_select %p3402, %s23, 3
        %s3404 = smul.addr %s3403, 2
        %s3405 = scalar_lea.vmem %s9, %s3404
        // Predicated region
        $region65: #{fwd.1} parent=51 // pred_check
          %p3406 = pneg %p219
        $region66: #{fwd.1} parent=51 // pred_check_branch
          %3408 = sbr.rel (%p3406) target = $region68
        $region67: #{fwd.1} parent=51 // pred_region
          _
        $region68: #{fwd.1} parent=51 // pred_fallthru
          _
        // Predicated region
        $region69: #{fwd.1} parent=51 // pred_check
          %p3409 = pneg %p245
        $region70: #{fwd.1} parent=51 // pred_check_branch
          %3411 = sbr.rel (%p3409) target = $region72
        $region71: #{fwd.1} parent=51 // pred_region
          _
        $region72: #{fwd.1} parent=51 // pred_fallthru
          _
      $region52: #{fwd.1} parent=5 // pred_fallthru
        _
      %p3412 = scmp.le.s32.totalorder 2, %s18
      // Predicated region
      $region73: #{fwd.1} parent=5 // pred_check
        %p3413 = pneg %p3412
      $region74: #{fwd.1} parent=5 // pred_check_branch
        %3415 = sbr.rel (%p3413) target = $region76
      $region75: #{fwd.1} parent=5 // pred_region
        %s3416 = ssub.s32 %s18, 2
        // Predicated region
        $region77: #{fwd.1} parent=75 // pred_check
          %p3417 = pneg %p225
        $region78: #{fwd.1} parent=75 // pred_check_branch
          %3419 = sbr.rel (%p3417) target = $region80
        $region79: #{fwd.1} parent=75 // pred_region
          %p3420 = scmp.lt.s32.totalorder %s24, 3
          %s3421 = scalar_select %p3420, %s24, 3
          %s3422 = scalar_lea.vmem %s8, %s3421
        $region80: #{fwd.1} parent=75 // pred_fallthru
          _
        // Predicated region
        $region81: #{fwd.1} parent=75 // pred_check
          %p3423 = pneg %p251
        $region82: #{fwd.1} parent=75 // pred_check_branch
          %3425 = sbr.rel (%p3423) target = $region84
        $region83: #{fwd.1} parent=75 // pred_region
          %p3426 = scmp.lt.s32.totalorder %s24, 3
          %s3427 = scalar_select %p3426, %s24, 3
          %s3428 = smul.addr %s3427, 2
          %s3429 = scalar_lea.vmem %s9, %s3428
        $region84: #{fwd.1} parent=75 // pred_fallthru
          _
      $region76: #{fwd.1} parent=5 // pred_fallthru
        _
    $region6: #{fwd.1} parent=1 // loop_footer
      %s22 = sadd.s32 1, %s18
    $region7: #{fwd.1} parent=1 // loop_footer_branch
      %17 = sbr.rel target = $region3
    $region8: #{fwd.1} parent=1 // loop_exit
      _
    %3430 = vsyncpa [#allocation4], 1
    %s3431 = scalar_lea.sflag [#allocation4], 1
    %3432 = vsyncpa %s3431, 1
    %3433 = vsyncpa [#allocation6], 1

</llo_original>
